<compile_context>
chip_gen: v6e
topology: v6e:2x2x1
jax: 0.10.0
libtpu: 0.0.40
codegen_flags: <defaults>
</compile_context>

<pallas_src>
import functools

import jax
import jax.numpy as jnp
from jax.experimental import pallas as pl
from jax.experimental.pallas import tpu as pltpu

GROUPS = 2       # GroupNorm(2, C) as in SimVP's BasicConv2d
NEG_SLOPE = 0.2  # LeakyReLU slope
EPS = 1e-5       # GroupNorm eps (PyTorch default)

# 3x3 conv taps (kh, kw), row-major.
K3_TAPS = tuple((kh, kw) for kh in range(3) for kw in range(3))

# ConvTranspose2d(k=3, s=2, p=1, output_padding=1) 4-phase decomposition.
# Entry = (phase, dh, dw, kh, kw): phase = 2*(out row parity) + (out col parity),
# (dh, dw) is the input-pixel offset, (kh, kw) indexes the ConvTranspose2d weight.
TCONV_TAPS = (
    (0, 0, 0, 1, 1),
    (1, 0, 1, 1, 0), (1, 0, 0, 1, 2),
    (2, 1, 0, 0, 1), (2, 0, 0, 2, 1),
    (3, 1, 1, 0, 0), (3, 1, 0, 0, 2), (3, 0, 1, 2, 0), (3, 0, 0, 2, 2),
)
# Slab order for the stacked tconv operand: column block q = 2*dh + dw.
TCONV_SLABS = ((0, 0), (0, 1), (1, 0), (1, 1))

_COMPILER_PARAMS = pltpu.CompilerParams(
    dimension_semantics=("parallel",),
    # Safe on v5e/v6e/v7x at these sizes; raise toward 64-100 MiB on v5e/v6e
    # (keep <=48 MiB on v7x) once HW tiling lands.
    vmem_limit_bytes=32 * 1024 * 1024,
)


def _ru(x, m):
    return ((x + m - 1) // m) * m


# --------------------------------------------------------------------------
# In-kernel GroupNorm(2) + LeakyReLU epilogue (f32)
# --------------------------------------------------------------------------
def _gn_lrelu(y, mask, gamma, beta, cnt, chans):
    """GroupNorm(2) over the masked lanes of the (R, Lv) slab `y`, then LeakyReLU.

    Rows are (phase-major) channels; the channel of row r is r % chans and the
    group split is chans // 2.  One cached masked pass, per-row lane reductions
    combined into per-group scalars (no full-width per-group selects), centered
    two-pass variance.
    """
    R = y.shape[0]
    row = jax.lax.broadcasted_iota(jnp.int32, (R, 1), 0)
    g1 = (row % chans) >= (chans // GROUPS)          # (R,1) bool: row in group 1
    inv_cnt = 1.0 / cnt

    ym = y * mask                                    # cached masked slab
    row_s = jnp.sum(ym, axis=-1, keepdims=True)      # (R,1) lane reduction (XLU)
    s0 = jnp.sum(jnp.where(g1, 0.0, row_s))
    s1 = jnp.sum(jnp.where(g1, row_s, 0.0))
    mean = jnp.where(g1, s1, s0) * inv_cnt           # (R,1)

    t = y - mean
    d = t * mask
    row_ss = jnp.sum(d * d, axis=-1, keepdims=True)  # (R,1)
    v0 = jnp.sum(jnp.where(g1, 0.0, row_ss))
    v1 = jnp.sum(jnp.where(g1, row_ss, 0.0))
    var = jnp.where(g1, v1, v0) * inv_cnt

    scale = jax.lax.rsqrt(var + EPS) * gamma         # (R,1)
    yn = t * scale + beta
    return jnp.where(yn > 0, yn, NEG_SLOPE * yn)


def _make_mask(lv, wp, vw, vrend):
    """(1, lv) f32 validity mask for the flat layout: (l % wp) < vw and l < vrend."""
    l = jax.lax.broadcasted_iota(jnp.int32, (1, lv), 1)
    return (((l % wp) < vw) & (l < vrend)).astype(jnp.float32)


# --------------------------------------------------------------------------
# Pallas kernels (one image per grid step; all tensors (rows, flattened-HW))
# --------------------------------------------------------------------------
def _conv3x3_kernel(x_ref, w_ref, b_ref, g_ref, bt_ref, o_ref, xs_ref,
                    *, wp, lv, vw, vrend, cnt, cin, chans):
    """Conv2d(3x3, pad=1) + GroupNorm(2) + LeakyReLU, fused.

    Stacks the 9 shifted (C_in, lv) slabs into one (9*C_in, lv) operand so the
    MXU sees a single K = 9*C_in matmul.  Output is zero-masked so a following
    transposed-conv layer can consume the flat slab directly.
    """
    for t, (kh, kw) in enumerate(K3_TAPS):
        sh = kh * wp + kw
        xs_ref[t * cin:(t + 1) * cin, :] = x_ref[0, :, sh:sh + lv].astype(jnp.float32)
    y = jnp.dot(w_ref[...], xs_ref[...].astype(jnp.bfloat16),
                preferred_element_type=jnp.float32) + b_ref[...]
    mask = _make_mask(lv, wp, vw, vrend)
    out = _gn_lrelu(y, mask, g_ref[...], bt_ref[...], cnt, chans)
    o_ref[0] = (out * mask).astype(o_ref.dtype)      # zero-filled padding lanes


def _conv3x3_readout_kernel(x_ref, w_ref, b_ref, g_ref, bt_ref, rw_ref, rb_ref,
                            o_ref, xs_ref, *, wp, lv, vw, vrend, cnt, cin, chans):
    """Last ConvSC (stride 1) with the 1x1 readout fused into the epilogue (f32)."""
    for t, (kh, kw) in enumerate(K3_TAPS):
        sh = kh * wp + kw
        xs_ref[t * cin:(t + 1) * cin, :] = x_ref[0, :, sh:sh + lv].astype(jnp.float32)
    y = jnp.dot(w_ref[...], xs_ref[...].astype(jnp.bfloat16),
                preferred_element_type=jnp.float32) + b_ref[...]
    mask = _make_mask(lv, wp, vw, vrend)
    act = _gn_lrelu(y, mask, g_ref[...], bt_ref[...], cnt, chans)
    # 1x1 readout kept in f32 for accuracy (feedback correctness note).
    o_ref[0] = jnp.dot(rw_ref[...], act, preferred_element_type=jnp.float32) + rb_ref[...]


def _tconv3x3_s2_kernel(x_ref, w_ref, b_ref, g_ref, bt_ref, o_ref, xs_ref,
                        *, rs, lv, vw, vrend, cnt, cin, chans):
    """ConvTranspose2d(3x3, s=2, p=1, out_pad=1) + GroupNorm(2) + LeakyReLU.

    All 4 parity phases come from ONE stacked matmul
    (4*C_out, 4*C_in) x (4*C_in, lv) and ONE contiguous (4*C_out, lv) store.
    GroupNorm statistics span all 4 phases (i.e. the full upsampled image).
    """
    for q, (dh, dw) in enumerate(TCONV_SLABS):
        sh = dh * rs + dw
        xs_ref[q * cin:(q + 1) * cin, :] = x_ref[0, :, sh:sh + lv].astype(jnp.float32)
    y = jnp.dot(w_ref[...], xs_ref[...].astype(jnp.bfloat16),
                preferred_element_type=jnp.float32) + b_ref[...]   # (4*C_out, lv)
    mask = _make_mask(lv, rs, vw, vrend)
    out = _gn_lrelu(y, mask, g_ref[...], bt_ref[...], cnt, chans)
    o_ref[0] = out.astype(o_ref.dtype)


# --------------------------------------------------------------------------
# Layer wrappers (cheap XLA glue only: pad / reshape / phase interleave)
# --------------------------------------------------------------------------
def _flat_to_nchw(y, H, W, rs):
    N, C, lv = y.shape
    if lv < H * rs:
        y = jnp.pad(y, ((0, 0), (0, 0), (0, H * rs - lv)))
    else:
        y = y[:, :, :H * rs]
    return y.reshape(N, C, H, rs)[:, :, :, :W]


def conv3x3_gn_lrelu(x, w, b, gamma, beta, *, flat_out_for_tconv=False):
    """ConvSC stride=1: Conv2d(3x3, pad=1) + GN(2) + LeakyReLU.  x: (N,C,H,W) bf16.

    With flat_out_for_tconv=True it returns (flat_slab, (H, W, RS)): a zero-masked
    (N, C_out, Lv) slab with row stride RS = W + 2 that the following transposed
    ConvSC consumes directly (no inter-layer relayout).
    """
    N, Cin, H, W = x.shape
    Cout = w.shape[0]
    Wp = W + 2
    if flat_out_for_tconv:
        lv_next = _ru((H - 1) * Wp + W, 128)        # the consumer's slab width
        lv = _ru(Wp + 1 + lv_next, 128)
    else:
        lv = _ru((H - 1) * Wp + W, 128)
    lin = _ru(2 * Wp + 2 + lv, 128)

    xflat = jnp.pad(x, ((0, 0), (0, 0), (1, 1), (1, 1))).reshape(N, Cin, (H + 2) * Wp)
    xflat = jnp.pad(xflat, ((0, 0), (0, 0), (0, lin - (H + 2) * Wp)))
    wmat = jnp.concatenate([w[:, :, kh, kw] for kh, kw in K3_TAPS],
                           axis=1).astype(jnp.bfloat16)             # (C_out, 9*C_in)
    cnt = float(H * W * (Cout // GROUPS))

    # TODO(synk): batch several images per grid step / add a spatial tile axis for
    # realistic sizes (megacore on v7x, amortized per-step overhead).
    y = pl.pallas_call(
        functools.partial(_conv3x3_kernel, wp=Wp, lv=lv, vw=W, vrend=H * Wp,
                          cnt=cnt, cin=Cin, chans=Cout),
        out_shape=jax.ShapeDtypeStruct((N, Cout, lv), jnp.bfloat16),
        grid=(N,),
        in_specs=[
            pl.BlockSpec((1, Cin, lin), lambda n: (n, 0, 0)),
            pl.BlockSpec((Cout, 9 * Cin), lambda n: (0, 0)),
            pl.BlockSpec((Cout, 1), lambda n: (0, 0)),
            pl.BlockSpec((Cout, 1), lambda n: (0, 0)),
            pl.BlockSpec((Cout, 1), lambda n: (0, 0)),
        ],
        out_specs=pl.BlockSpec((1, Cout, lv), lambda n: (n, 0, 0)),
        scratch_shapes=[pltpu.VMEM((9 * Cin, lv), jnp.float32)],
        compiler_params=_COMPILER_PARAMS,
    )(xflat.astype(jnp.bfloat16), wmat,
      b.reshape(Cout, 1), gamma.reshape(Cout, 1), beta.reshape(Cout, 1))

    if flat_out_for_tconv:
        return y, (H, W, Wp)
    return _flat_to_nchw(y, H, W, Wp)


def conv3x3_gn_lrelu_readout(x, w, b, gamma, beta, w_r, b_r):
    """Last ConvSC (stride 1) + fused 1x1 readout. Returns f32 (N, C_out, H, W)."""
    N, Cin, H, W = x.shape
    Chid = w.shape[0]
    CoutF = w_r.shape[0]
    CoutP = _ru(CoutF, 8)                      # pad readout rows to f32 sublane tile
    Wp = W + 2
    lv = _ru((H - 1) * Wp + W, 128)
    lin = _ru(2 * Wp + 2 + lv, 128)

    xflat = jnp.pad(x, ((0, 0), (0, 0), (1, 1), (1, 1))).reshape(N, Cin, (H + 2) * Wp)
    xflat = jnp.pad(xflat, ((0, 0), (0, 0), (0, lin - (H + 2) * Wp)))
    wmat = jnp.concatenate([w[:, :, kh, kw] for kh, kw in K3_TAPS],
                           axis=1).astype(jnp.bfloat16)
    rw = jnp.zeros((CoutP, Chid), jnp.float32).at[:CoutF].set(w_r[:, :, 0, 0])
    rb = jnp.zeros((CoutP, 1), jnp.float32).at[:CoutF, 0].set(b_r)
    cnt = float(H * W * (Chid // GROUPS))

    y = pl.pallas_call(
        functools.partial(_conv3x3_readout_kernel, wp=Wp, lv=lv, vw=W,
                          vrend=H * Wp, cnt=cnt, cin=Cin, chans=Chid),
        out_shape=jax.ShapeDtypeStruct((N, CoutP, lv), jnp.float32),
        grid=(N,),
        in_specs=[
            pl.BlockSpec((1, Cin, lin), lambda n: (n, 0, 0)),
            pl.BlockSpec((Chid, 9 * Cin), lambda n: (0, 0)),
            pl.BlockSpec((Chid, 1), lambda n: (0, 0)),
            pl.BlockSpec((Chid, 1), lambda n: (0, 0)),
            pl.BlockSpec((Chid, 1), lambda n: (0, 0)),
            pl.BlockSpec((CoutP, Chid), lambda n: (0, 0)),
            pl.BlockSpec((CoutP, 1), lambda n: (0, 0)),
        ],
        out_specs=pl.BlockSpec((1, CoutP, lv), lambda n: (n, 0, 0)),
        scratch_shapes=[pltpu.VMEM((9 * Cin, lv), jnp.float32)],
        compiler_params=_COMPILER_PARAMS,
    )(xflat.astype(jnp.bfloat16), wmat,
      b.reshape(Chid, 1), gamma.reshape(Chid, 1), beta.reshape(Chid, 1), rw, rb)

    return _flat_to_nchw(y[:, :CoutF], H, W, Wp)


def tconv3x3_s2_gn_lrelu(x, w_t, b, gamma, beta, *, flat_meta=None):
    """ConvSC stride=2 transpose via a single stacked 4-phase matmul.

    x: NCHW bf16, or -- with flat_meta=(H, W, RS) -- the zero-masked flat slab a
    previous stride-1 ConvSC produced (consumed directly, no relayout).
    Returns NCHW bf16 (N, C_out, 2H, 2W).
    """
    Cin, Cout = w_t.shape[0], w_t.shape[1]
    if flat_meta is None:
        N, _, H, W = x.shape
        rs = W + 1
        xflat = jnp.pad(x, ((0, 0), (0, 0), (0, 1), (0, 1))).reshape(N, Cin, (H + 1) * rs)
    else:
        H, W, rs = flat_meta
        N = x.shape[0]
        xflat = x
    lv = _ru((H - 1) * rs + W, 128)
    lin = _ru(rs + 1 + lv, 128)
    cur = xflat.shape[-1]
    if cur < lin:
        xflat = jnp.pad(xflat, ((0, 0), (0, 0), (0, lin - cur)))
    elif cur > lin:
        xflat = xflat[:, :, :lin]

    # Stacked 4-phase weight: block (ph, 2*dh+dw) = W_t[:, :, kh, kw]^T, zeros elsewhere.
    blocks = [[jnp.zeros((Cout, Cin), jnp.float32) for _ in range(4)] for _ in range(4)]
    for ph, dh, dw, kh, kw in TCONV_TAPS:
        blocks[ph][2 * dh + dw] = w_t[:, :, kh, kw].T
    wbig = jnp.block(blocks).astype(jnp.bfloat16)                    # (4*C_out, 4*C_in)
    b4 = jnp.tile(b, 4).reshape(4 * Cout, 1)
    g4 = jnp.tile(gamma, 4).reshape(4 * Cout, 1)
    bt4 = jnp.tile(beta, 4).reshape(4 * Cout, 1)
    cnt = float(4 * H * W * (Cout // GROUPS))   # GN stats span all 4 phases

    y = pl.pallas_call(
        functools.partial(_tconv3x3_s2_kernel, rs=rs, lv=lv, vw=W, vrend=H * rs,
                          cnt=cnt, cin=Cin, chans=Cout),
        out_shape=jax.ShapeDtypeStruct((N, 4 * Cout, lv), jnp.bfloat16),
        grid=(N,),
        in_specs=[
            pl.BlockSpec((1, Cin, lin), lambda n: (n, 0, 0)),
            pl.BlockSpec((4 * Cout, 4 * Cin), lambda n: (0, 0)),
            pl.BlockSpec((4 * Cout, 1), lambda n: (0, 0)),
            pl.BlockSpec((4 * Cout, 1), lambda n: (0, 0)),
            pl.BlockSpec((4 * Cout, 1), lambda n: (0, 0)),
        ],
        out_specs=pl.BlockSpec((1, 4 * Cout, lv), lambda n: (n, 0, 0)),
        scratch_shapes=[pltpu.VMEM((4 * Cin, lv), jnp.float32)],
        compiler_params=_COMPILER_PARAMS,
    )(xflat.astype(jnp.bfloat16), wbig, b4, g4, bt4)

    # Interleave the 4 parity phases into NCHW (N, C, 2H, 2W).
    # TODO(synk): let the following stride-1 ConvSC consume this phase-major layout
    # directly (polyphase taps) so this relayout disappears as well.
    if lv < H * rs:
        y = jnp.pad(y, ((0, 0), (0, 0), (0, H * rs - lv)))
    else:
        y = y[:, :, :H * rs]
    y = y.reshape(N, 2, 2, Cout, H, rs)[:, :, :, :, :, :W]
    y = jnp.transpose(y, (0, 3, 4, 1, 5, 2)).reshape(N, Cout, 2 * H, 2 * W)
    return y


# --------------------------------------------------------------------------
# Decoder forward (public API keeps PyTorch NCHW)
# --------------------------------------------------------------------------
def decoder_forward(params, hid_nchw, enc1_nchw):
    layers = params["dec"]
    n = len(layers)
    x = hid_nchw.astype(jnp.bfloat16)
    flat_meta = None
    for i, layer in enumerate(layers[:-1]):
        if layer["transpose"]:
            x = tconv3x3_s2_gn_lrelu(x, layer["w"], layer["b"], layer["gamma"],
                                     layer["beta"], flat_meta=flat_meta)
            flat_meta = None
        else:
            hand_flat = (i + 1 < n - 1) and layers[i + 1]["transpose"]
            out = conv3x3_gn_lrelu(x, layer["w"], layer["b"], layer["gamma"],
                                   layer["beta"], flat_out_for_tconv=hand_flat)
            if hand_flat:
                x, flat_meta = out
            else:
                x, flat_meta = out, None
    assert flat_meta is None
    last = layers[-1]
    # stride_generator always yields stride 1 for the last (reversed) decoder layer,
    # so it is a plain 3x3 conv; the 1x1 readout is fused into its epilogue.
    assert not last["transpose"]
    x = jnp.concatenate([x, enc1_nchw.astype(jnp.bfloat16)], axis=1)
    w_r, b_r = params["readout"]
    return conv3x3_gn_lrelu_readout(x, last["w"], last["b"], last["gamma"],
                                    last["beta"], w_r, b_r)   # f32 NCHW


# --------------------------------------------------------------------------
# Deterministic parameter init mirroring the PyTorch module shapes
# --------------------------------------------------------------------------
def stride_generator(N, reverse=False):
    strides = [1, 2] * 10
    return list(reversed(strides[:N])) if reverse else strides[:N]


def init_decoder_params(key, C_hid, C_out, N_S):
    strides = stride_generator(N_S, reverse=True)
    keys = jax.random.split(key, 4 * N_S + 2)
    dec = []
    ki = 0
    for li, s in enumerate(strides):
        C_in = C_hid if li < N_S - 1 else 2 * C_hid
        transpose = (s != 1)  # ConvSC forces transpose=False when stride == 1
        if transpose:
            w = 0.1 * jax.random.normal(keys[ki], (C_in, C_hid, 3, 3), jnp.float32)
        else:
            w = 0.1 * jax.random.normal(keys[ki], (C_hid, C_in, 3, 3), jnp.float32)
        b = 0.05 * jax.random.normal(keys[ki + 1], (C_hid,), jnp.float32)
        gamma = 1.0 + 0.1 * jax.random.normal(keys[ki + 2], (C_hid,), jnp.float32)
        beta = 0.05 * jax.random.normal(keys[ki + 3], (C_hid,), jnp.float32)
        ki += 4
        dec.append({"w": w, "b": b, "gamma": gamma, "beta": beta,
                    "transpose": transpose, "stride": s})
    w_r = 0.1 * jax.random.normal(keys[ki], (C_out, C_hid, 1, 1), jnp.float32)
    b_r = 0.05 * jax.random.normal(keys[ki + 1], (C_out,), jnp.float32)
    return {"dec": dec, "readout": (w_r, b_r)}


# --------------------------------------------------------------------------
# Pure-JAX (XLA conv, f32) reference for numerical sanity check
# --------------------------------------------------------------------------
def convtrans_w_to_conv_w(wt_iohw):
    # ConvTranspose2d weight (C_in, C_out, 3, 3) -> equivalent Conv2d OIHW weight.
    return jnp.transpose(jnp.flip(wt_iohw, (2, 3)), (1, 0, 2, 3))


def _ref_groupnorm(x, gamma, beta):
    N, C, H, W = x.shape
    xg = x.reshape(N, GROUPS, C // GROUPS, H, W)
    m = xg.mean(axis=(2, 3, 4), keepdims=True)
    v = xg.var(axis=(2, 3, 4), keepdims=True)
    xn = ((xg - m) / jnp.sqrt(v + EPS)).reshape(N, C, H, W)
    return xn * gamma[None, :, None, None] + beta[None, :, None, None]


def _ref_convsc(layer, x_nchw):
    if layer["transpose"]:
        w = convtrans_w_to_conv_w(layer["w"])
        y = jax.lax.conv_general_dilated(
            x_nchw, w, (1, 1), ((1, 2), (1, 2)), lhs_dilation=(2, 2),
            dimension_numbers=("NCHW", "OIHW", "NCHW"))
    else:
        y = jax.lax.conv_general_dilated(
            x_nchw, layer["w"], (1, 1), ((1, 1), (1, 1)),
            dimension_numbers=("NCHW", "OIHW", "NCHW"))
    y = y + layer["b"][None, :, None, None]
    y = _ref_groupnorm(y, layer["gamma"], layer["beta"])
    return jnp.where(y > 0, y, NEG_SLOPE * y)


def decoder_reference(params, hid, enc1):
    x = hid
    for layer in params["dec"][:-1]:
        x = _ref_convsc(layer, x)
    x = _ref_convsc(params["dec"][-1], jnp.concatenate([x, enc1], axis=1))
    w, b = params["readout"]
    y = jnp.einsum("nchw,oc->nohw", x, w[:, :, 0, 0]) + b[None, :, None, None]
    return y


# --------------------------------------------------------------------------
if __name__ == "__main__":
    C_hid, C_out, N_S = 8, 4, 4          # strides (reversed) = [2, 1, 2, 1]
    N, H_in, W_in = 2, 4, 4              # hid comes in at 4x downsampled spatial
    H_full, W_full = 16, 16              # enc1 spatial size (after 2 upsamples)

    key = jax.random.PRNGKey(0)
    k_p, k_h, k_e = jax.random.split(key, 3)
    params = init_decoder_params(k_p, C_hid, C_out, N_S)
    hid = jax.random.normal(k_h, (N, C_hid, H_in, W_in), jnp.float32)
    enc1 = jax.random.normal(k_e, (N, C_hid, H_full, W_full), jnp.float32)

    fwd = jax.jit(lambda h, e: decoder_forward(params, h, e))
    out = jax.block_until_ready(fwd(hid, enc1))

    ref = jax.block_until_ready(decoder_reference(params, hid, enc1))
    assert out.shape == (N, C_out, H_full, W_full), out.shape
    err = float(jnp.max(jnp.abs(out - ref)))
    # bf16 activation/weight path vs f32 reference.
    assert err < 6e-2, f"mismatch vs reference: {err}"

    print("KERNEL_OK")
</pallas_src>

<mosaic_0001>
module attributes {stable_mosaic.version = 11 : i64} {
  func.func @_tconv3x3_s2_kernel(%arg0: i32, %arg1: memref<1x8x256xbf16, #tpu.memory_space<vmem>>, %arg2: memref<32x32xbf16, #tpu.memory_space<vmem>>, %arg3: memref<32x1xf32, #tpu.memory_space<vmem>>, %arg4: memref<32x1xf32, #tpu.memory_space<vmem>>, %arg5: memref<32x1xf32, #tpu.memory_space<vmem>>, %arg6: memref<1x32x128xbf16, #tpu.memory_space<vmem>>, %arg7: memref<32x128xf32, #tpu.memory_space<vmem>>) attributes {dimension_semantics = [#tpu.dimension_semantics<parallel>], iteration_bounds = array<i64: 2>, scalar_prefetch = 0 : i64, scratch_operands = 1 : i64, tpu.core_type = #tpu.core_type<tc>, window_params = [{transform_indices = @transform_0, window_bounds = array<i64: 1, 8, 256>}, {pipeline_mode = #tpu.pipeline_mode<synchronous>, transform_indices = @transform_1, window_bounds = array<i64: 32, 32>}, {pipeline_mode = #tpu.pipeline_mode<synchronous>, transform_indices = @transform_2, window_bounds = array<i64: 32, 1>}, {pipeline_mode = #tpu.pipeline_mode<synchronous>, transform_indices = @transform_3, window_bounds = array<i64: 32, 1>}, {pipeline_mode = #tpu.pipeline_mode<synchronous>, transform_indices = @transform_4, window_bounds = array<i64: 32, 1>}, {transform_indices = @transform_5, window_bounds = array<i64: 1, 32, 128>}]} {
    %c0 = arith.constant 0 : index
    %c0_0 = arith.constant 0 : index
    %c0_1 = arith.constant 0 : index
    %0 = vector.load %arg1[%c0, %c0_0, %c0_1] : memref<1x8x256xbf16, #tpu.memory_space<vmem>>, vector<1x8x128xbf16>
    %1 = vector.shape_cast %0 : vector<1x8x128xbf16> to vector<8x128xbf16>
    %2 = arith.extf %1 : vector<8x128xbf16> to vector<8x128xf32>
    %c0_2 = arith.constant 0 : index
    %c0_3 = arith.constant 0 : index
    %3 = vector.load %arg7[%c0_2, %c0_3] : memref<32x128xf32, #tpu.memory_space<vmem>>, vector<8x128xf32>
    tpu.vector_store %arg7[%c0_2, %c0_3], %2 {strides = array<i32>} : memref<32x128xf32, #tpu.memory_space<vmem>>, vector<8x128xf32>,
    %c0_4 = arith.constant 0 : index
    %c0_5 = arith.constant 0 : index
    %c1 = arith.constant 1 : index
    %4 = vector.load %arg1[%c0_4, %c0_5, %c1] : memref<1x8x256xbf16, #tpu.memory_space<vmem>>, vector<1x8x128xbf16>
    %5 = vector.shape_cast %4 : vector<1x8x128xbf16> to vector<8x128xbf16>
    %6 = arith.extf %5 : vector<8x128xbf16> to vector<8x128xf32>
    %c8 = arith.constant 8 : index
    %c0_6 = arith.constant 0 : index
    %7 = vector.load %arg7[%c8, %c0_6] : memref<32x128xf32, #tpu.memory_space<vmem>>, vector<8x128xf32>
    tpu.vector_store %arg7[%c8, %c0_6], %6 {strides = array<i32>} : memref<32x128xf32, #tpu.memory_space<vmem>>, vector<8x128xf32>,
    %c0_7 = arith.constant 0 : index
    %c0_8 = arith.constant 0 : index
    %c5 = arith.constant 5 : index
    %8 = vector.load %arg1[%c0_7, %c0_8, %c5] : memref<1x8x256xbf16, #tpu.memory_space<vmem>>, vector<1x8x128xbf16>
    %9 = vector.shape_cast %8 : vector<1x8x128xbf16> to vector<8x128xbf16>
    %10 = arith.extf %9 : vector<8x128xbf16> to vector<8x128xf32>
    %c16 = arith.constant 16 : index
    %c0_9 = arith.constant 0 : index
    %11 = vector.load %arg7[%c16, %c0_9] : memref<32x128xf32, #tpu.memory_space<vmem>>, vector<8x128xf32>
    tpu.vector_store %arg7[%c16, %c0_9], %10 {strides = array<i32>} : memref<32x128xf32, #tpu.memory_space<vmem>>, vector<8x128xf32>,
    %c0_10 = arith.constant 0 : index
    %c0_11 = arith.constant 0 : index
    %c6 = arith.constant 6 : index
    %12 = vector.load %arg1[%c0_10, %c0_11, %c6] : memref<1x8x256xbf16, #tpu.memory_space<vmem>>, vector<1x8x128xbf16>
    %13 = vector.shape_cast %12 : vector<1x8x128xbf16> to vector<8x128xbf16>
    %14 = arith.extf %13 : vector<8x128xbf16> to vector<8x128xf32>
    %c24 = arith.constant 24 : index
    %c0_12 = arith.constant 0 : index
    %15 = vector.load %arg7[%c24, %c0_12] : memref<32x128xf32, #tpu.memory_space<vmem>>, vector<8x128xf32>
    tpu.vector_store %arg7[%c24, %c0_12], %14 {strides = array<i32>} : memref<32x128xf32, #tpu.memory_space<vmem>>, vector<8x128xf32>,
    %c0_13 = arith.constant 0 : index
    %c0_14 = arith.constant 0 : index
    %16 = vector.load %arg2[%c0_13, %c0_14] : memref<32x32xbf16, #tpu.memory_space<vmem>>, vector<32x32xbf16>
    %c0_15 = arith.constant 0 : index
    %c0_16 = arith.constant 0 : index
    %17 = vector.load %arg7[%c0_15, %c0_16] : memref<32x128xf32, #tpu.memory_space<vmem>>, vector<32x128xf32>
    %18 = arith.truncf %17 : vector<32x128xf32> to vector<32x128xbf16>
    %cst = arith.constant dense<0.000000e+00> : vector<32x128xf32>
    %19 = tpu.matmul %16, %18, %cst {dimension_numbers = #tpu.dot_dimension_numbers<[1], [0], [0], [1], [0, 0, 1, 1], [], []>} : vector<32x32xbf16>, vector<32x128xbf16>, vector<32x128xf32> -> vector<32x128xf32>
    %c0_17 = arith.constant 0 : index
    %c0_18 = arith.constant 0 : index
    %20 = vector.load %arg3[%c0_17, %c0_18] : memref<32x1xf32, #tpu.memory_space<vmem>>, vector<32x1xf32>
    %21 = vector.broadcast %20 : vector<32x1xf32> to vector<32x128xf32>
    %22 = arith.addf %19, %21 : vector<32x128xf32>
    %23 = tpu.iota {dimensions = array<i32: 1>} : vector<1x128xi32>
    %c5_i32 = arith.constant 5 : i32
    %c0_i32 = arith.constant 0 : i32
    %24 = arith.cmpi eq, %c5_i32, %c0_i32 : i32
    %c1_i32 = arith.constant 1 : i32
    %25 = arith.select %24, %c1_i32, %c5_i32 : i32
    %26 = vector.broadcast %25 : i32 to vector<1x128xi32>
    %27 = arith.remsi %23, %26 : vector<1x128xi32>
    %c0_i32_19 = arith.constant 0 : i32
    %28 = vector.broadcast %c0_i32_19 : i32 to vector<1x128xi32>
    %29 = arith.cmpi ne, %27, %28 : vector<1x128xi32>
    %c0_i32_20 = arith.constant 0 : i32
    %30 = vector.broadcast %c0_i32_20 : i32 to vector<1x128xi32>
    %31 = arith.cmpi slt, %27, %30 : vector<1x128xi32>
    %c0_i32_21 = arith.constant 0 : i32
    %32 = arith.cmpi slt, %25, %c0_i32_21 : i32
    %33 = vector.broadcast %32 : i1 to vector<1x128xi1>
    %34 = vector.broadcast %33 : vector<1x128xi1> to vector<1x128xi1>
    %35 = arith.xori %31, %34 : vector<1x128xi1>
    %36 = arith.andi %35, %29 : vector<1x128xi1>
    %37 = vector.broadcast %25 : i32 to vector<1x128xi32>
    %38 = arith.addi %27, %37 : vector<1x128xi32>
    %39 = arith.select %36, %38, %27 : vector<1x128xi1>, vector<1x128xi32>
    %c4_i32 = arith.constant 4 : i32
    %40 = vector.broadcast %c4_i32 : i32 to vector<1x128xi32>
    %41 = arith.cmpi slt, %39, %40 : vector<1x128xi32>
    %c20_i32 = arith.constant 20 : i32
    %42 = vector.broadcast %c20_i32 : i32 to vector<1x128xi32>
    %43 = arith.cmpi slt, %23, %42 : vector<1x128xi32>
    %44 = arith.andi %41, %43 : vector<1x128xi1>
    %45 = arith.extui %44 : vector<1x128xi1> to vector<1x128xi32>
    %46 = arith.sitofp %45 : vector<1x128xi32> to vector<1x128xf32>
    %c0_22 = arith.constant 0 : index
    %c0_23 = arith.constant 0 : index
    %47 = vector.load %arg4[%c0_22, %c0_23] : memref<32x1xf32, #tpu.memory_space<vmem>>, vector<32x1xf32>
    %c0_24 = arith.constant 0 : index
    %c0_25 = arith.constant 0 : index
    %48 = vector.load %arg5[%c0_24, %c0_25] : memref<32x1xf32, #tpu.memory_space<vmem>>, vector<32x1xf32>
    %49 = tpu.iota {dimensions = array<i32: 0>} : vector<32x1xi32>
    %c8_i32 = arith.constant 8 : i32
    %c0_i32_26 = arith.constant 0 : i32
    %50 = arith.cmpi eq, %c8_i32, %c0_i32_26 : i32
    %c1_i32_27 = arith.constant 1 : i32
    %51 = arith.select %50, %c1_i32_27, %c8_i32 : i32
    %52 = vector.broadcast %51 : i32 to vector<32x1xi32>
    %53 = arith.remsi %49, %52 : vector<32x1xi32>
    %c0_i32_28 = arith.constant 0 : i32
    %54 = vector.broadcast %c0_i32_28 : i32 to vector<32x1xi32>
    %55 = arith.cmpi ne, %53, %54 : vector<32x1xi32>
    %c0_i32_29 = arith.constant 0 : i32
    %56 = vector.broadcast %c0_i32_29 : i32 to vector<32x1xi32>
    %57 = arith.cmpi slt, %53, %56 : vector<32x1xi32>
    %c0_i32_30 = arith.constant 0 : i32
    %58 = arith.cmpi slt, %51, %c0_i32_30 : i32
    %59 = vector.broadcast %58 : i1 to vector<32x1xi1>
    %60 = vector.broadcast %59 : vector<32x1xi1> to vector<32x1xi1>
    %61 = arith.xori %57, %60 : vector<32x1xi1>
    %62 = arith.andi %61, %55 : vector<32x1xi1>
    %63 = vector.broadcast %51 : i32 to vector<32x1xi32>
    %64 = arith.addi %53, %63 : vector<32x1xi32>
    %65 = arith.select %62, %64, %53 : vector<32x1xi1>, vector<32x1xi32>
    %c4_i32_31 = arith.constant 4 : i32
    %66 = vector.broadcast %c4_i32_31 : i32 to vector<32x1xi32>
    %67 = arith.cmpi sge, %65, %66 : vector<32x1xi32>
    %68 = vector.broadcast %46 : vector<1x128xf32> to vector<32x128xf32>
    %69 = arith.mulf %22, %68 : vector<32x128xf32>
    %cst_32 = arith.constant dense<0.000000e+00> : vector<32xf32>
    %70 = vector.multi_reduction <add>, %69, %cst_32 [1] : vector<32x128xf32> to vector<32xf32>
    %71 = vector.shape_cast %70 : vector<32xf32> to vector<32x1xf32>
    %cst_33 = arith.constant 0.000000e+00 : f32
    %72 = vector.broadcast %cst_33 : f32 to vector<32x1xf32>
    %73 = arith.select %67, %72, %71 : vector<32x1xi1>, vector<32x1xf32>
    %74 = vector.shape_cast %73 : vector<32x1xf32> to vector<1x32x1xf32>
    %cst_34 = arith.constant dense<0.000000e+00> : vector<1xf32>
    %75 = vector.multi_reduction <add>, %74, %cst_34 [1, 2] : vector<1x32x1xf32> to vector<1xf32>
    %76 = vector.shape_cast %75 : vector<1xf32> to vector<1x1x1xf32>
    %77 = vector.extract %76[0, 0, 0] : f32 from vector<1x1x1xf32>
    %cst_35 = arith.constant 0.000000e+00 : f32
    %78 = vector.broadcast %cst_35 : f32 to vector<32x1xf32>
    %79 = arith.select %67, %71, %78 : vector<32x1xi1>, vector<32x1xf32>
    %80 = vector.shape_cast %79 : vector<32x1xf32> to vector<1x32x1xf32>
    %cst_36 = arith.constant dense<0.000000e+00> : vector<1xf32>
    %81 = vector.multi_reduction <add>, %80, %cst_36 [1, 2] : vector<1x32x1xf32> to vector<1xf32>
    %82 = vector.shape_cast %81 : vector<1xf32> to vector<1x1x1xf32>
    %83 = vector.extract %82[0, 0, 0] : f32 from vector<1x1x1xf32>
    %84 = vector.broadcast %83 : f32 to vector<32x1xf32>
    %85 = vector.broadcast %77 : f32 to vector<32x1xf32>
    %86 = arith.select %67, %84, %85 : vector<32x1xi1>, vector<32x1xf32>
    %cst_37 = arith.constant 3.906250e-03 : f32
    %87 = vector.broadcast %cst_37 : f32 to vector<32x1xf32>
    %88 = arith.mulf %86, %87 : vector<32x1xf32>
    %89 = vector.broadcast %88 : vector<32x1xf32> to vector<32x128xf32>
    %90 = arith.subf %22, %89 : vector<32x128xf32>
    %91 = vector.broadcast %46 : vector<1x128xf32> to vector<32x128xf32>
    %92 = arith.mulf %90, %91 : vector<32x128xf32>
    %93 = arith.mulf %92, %92 : vector<32x128xf32>
    %cst_38 = arith.constant dense<0.000000e+00> : vector<32xf32>
    %94 = vector.multi_reduction <add>, %93, %cst_38 [1] : vector<32x128xf32> to vector<32xf32>
    %95 = vector.shape_cast %94 : vector<32xf32> to vector<32x1xf32>
    %cst_39 = arith.constant 0.000000e+00 : f32
    %96 = vector.broadcast %cst_39 : f32 to vector<32x1xf32>
    %97 = arith.select %67, %96, %95 : vector<32x1xi1>, vector<32x1xf32>
    %98 = vector.shape_cast %97 : vector<32x1xf32> to vector<1x32x1xf32>
    %cst_40 = arith.constant dense<0.000000e+00> : vector<1xf32>
    %99 = vector.multi_reduction <add>, %98, %cst_40 [1, 2] : vector<1x32x1xf32> to vector<1xf32>
    %100 = vector.shape_cast %99 : vector<1xf32> to vector<1x1x1xf32>
    %101 = vector.extract %100[0, 0, 0] : f32 from vector<1x1x1xf32>
    %cst_41 = arith.constant 0.000000e+00 : f32
    %102 = vector.broadcast %cst_41 : f32 to vector<32x1xf32>
    %103 = arith.select %67, %95, %102 : vector<32x1xi1>, vector<32x1xf32>
    %104 = vector.shape_cast %103 : vector<32x1xf32> to vector<1x32x1xf32>
    %cst_42 = arith.constant dense<0.000000e+00> : vector<1xf32>
    %105 = vector.multi_reduction <add>, %104, %cst_42 [1, 2] : vector<1x32x1xf32> to vector<1xf32>
    %106 = vector.shape_cast %105 : vector<1xf32> to vector<1x1x1xf32>
    %107 = vector.extract %106[0, 0, 0] : f32 from vector<1x1x1xf32>
    %108 = vector.broadcast %107 : f32 to vector<32x1xf32>
    %109 = vector.broadcast %101 : f32 to vector<32x1xf32>
    %110 = arith.select %67, %108, %109 : vector<32x1xi1>, vector<32x1xf32>
    %cst_43 = arith.constant 3.906250e-03 : f32
    %111 = vector.broadcast %cst_43 : f32 to vector<32x1xf32>
    %112 = arith.mulf %110, %111 : vector<32x1xf32>
    %cst_44 = arith.constant 9.99999974E-6 : f32
    %113 = vector.broadcast %cst_44 : f32 to vector<32x1xf32>
    %114 = arith.addf %112, %113 : vector<32x1xf32>
    %115 = math.rsqrt %114 : vector<32x1xf32>
    %116 = arith.mulf %115, %47 : vector<32x1xf32>
    %117 = vector.broadcast %116 : vector<32x1xf32> to vector<32x128xf32>
    %118 = arith.mulf %90, %117 : vector<32x128xf32>
    %119 = vector.broadcast %48 : vector<32x1xf32> to vector<32x128xf32>
    %120 = arith.addf %118, %119 : vector<32x128xf32>
    %cst_45 = arith.constant 0.000000e+00 : f32
    %121 = vector.broadcast %cst_45 : f32 to vector<32x128xf32>
    %122 = arith.cmpf ogt, %120, %121 : vector<32x128xf32>
    %cst_46 = arith.constant 2.000000e-01 : f32
    %123 = vector.broadcast %cst_46 : f32 to vector<32x128xf32>
    %124 = arith.mulf %123, %120 : vector<32x128xf32>
    %125 = arith.select %122, %120, %124 : vector<32x128xi1>, vector<32x128xf32>
    %126 = arith.truncf %125 : vector<32x128xf32> to vector<32x128xbf16>
    %c0_47 = arith.constant 0 : index
    %c0_48 = arith.constant 0 : index
    %c0_49 = arith.constant 0 : index
    %127 = vector.load %arg6[%c0_47, %c0_48, %c0_49] : memref<1x32x128xbf16, #tpu.memory_space<vmem>>, vector<1x32x128xbf16>
    %128 = vector.shape_cast %127 : vector<1x32x128xbf16> to vector<32x128xbf16>
    %129 = vector.shape_cast %126 : vector<32x128xbf16> to vector<1x32x128xbf16>
    tpu.vector_store %arg6[%c0_47, %c0_48, %c0_49], %129 {strides = array<i32>} : memref<1x32x128xbf16, #tpu.memory_space<vmem>>, vector<1x32x128xbf16>,
    return
  }
  func.func @transform_0(%arg0: i32) -> (i32, i32, i32) {
    %c0_i32 = arith.constant 0 : i32
    %c0_i32_0 = arith.constant 0 : i32
    %c0_i32_1 = arith.constant 0 : i32
    return %arg0, %c0_i32, %c0_i32_0 : i32, i32, i32
  }
  func.func @transform_1(%arg0: i32) -> (i32, i32) {
    %c0_i32 = arith.constant 0 : i32
    %c0_i32_0 = arith.constant 0 : i32
    %c0_i32_1 = arith.constant 0 : i32
    return %c0_i32, %c0_i32_0 : i32, i32
  }
  func.func @transform_2(%arg0: i32) -> (i32, i32) {
    %c0_i32 = arith.constant 0 : i32
    %c0_i32_0 = arith.constant 0 : i32
    %c0_i32_1 = arith.constant 0 : i32
    return %c0_i32, %c0_i32_0 : i32, i32
  }
  func.func @transform_3(%arg0: i32) -> (i32, i32) {
    %c0_i32 = arith.constant 0 : i32
    %c0_i32_0 = arith.constant 0 : i32
    %c0_i32_1 = arith.constant 0 : i32
    return %c0_i32, %c0_i32_0 : i32, i32
  }
  func.func @transform_4(%arg0: i32) -> (i32, i32) {
    %c0_i32 = arith.constant 0 : i32
    %c0_i32_0 = arith.constant 0 : i32
    %c0_i32_1 = arith.constant 0 : i32
    return %c0_i32, %c0_i32_0 : i32, i32
  }
  func.func @transform_5(%arg0: i32) -> (i32, i32, i32) {
    %c0_i32 = arith.constant 0 : i32
    %c0_i32_0 = arith.constant 0 : i32
    %c0_i32_1 = arith.constant 0 : i32
    return %arg0, %c0_i32, %c0_i32_0 : i32, i32, i32
  }
}

module attributes {stable_mosaic.version = 11 : i64} {
  func.func @_conv3x3_kernel(%arg0: i32, %arg1: memref<1x8x384xbf16, #tpu.memory_space<vmem>>, %arg2: memref<8x72xbf16, #tpu.memory_space<vmem>>, %arg3: memref<8x1xf32, #tpu.memory_space<vmem>>, %arg4: memref<8x1xf32, #tpu.memory_space<vmem>>, %arg5: memref<8x1xf32, #tpu.memory_space<vmem>>, %arg6: memref<1x8x256xbf16, #tpu.memory_space<vmem>>, %arg7: memref<72x256xf32, #tpu.memory_space<vmem>>) attributes {dimension_semantics = [#tpu.dimension_semantics<parallel>], iteration_bounds = array<i64: 2>, scalar_prefetch = 0 : i64, scratch_operands = 1 : i64, tpu.core_type = #tpu.core_type<tc>, window_params = [{transform_indices = @transform_0, window_bounds = array<i64: 1, 8, 384>}, {pipeline_mode = #tpu.pipeline_mode<synchronous>, transform_indices = @transform_1, window_bounds = array<i64: 8, 72>}, {pipeline_mode = #tpu.pipeline_mode<synchronous>, transform_indices = @transform_2, window_bounds = array<i64: 8, 1>}, {pipeline_mode = #tpu.pipeline_mode<synchronous>, transform_indices = @transform_3, window_bounds = array<i64: 8, 1>}, {pipeline_mode = #tpu.pipeline_mode<synchronous>, transform_indices = @transform_4, window_bounds = array<i64: 8, 1>}, {transform_indices = @transform_5, window_bounds = array<i64: 1, 8, 256>}]} {
    %c0 = arith.constant 0 : index
    %c0_0 = arith.constant 0 : index
    %c0_1 = arith.constant 0 : index
    %0 = vector.load %arg1[%c0, %c0_0, %c0_1] : memref<1x8x384xbf16, #tpu.memory_space<vmem>>, vector<1x8x256xbf16>
    %1 = vector.shape_cast %0 : vector<1x8x256xbf16> to vector<8x256xbf16>
    %2 = arith.extf %1 : vector<8x256xbf16> to vector<8x256xf32>
    %c0_2 = arith.constant 0 : index
    %c0_3 = arith.constant 0 : index
    %3 = vector.load %arg7[%c0_2, %c0_3] : memref<72x256xf32, #tpu.memory_space<vmem>>, vector<8x256xf32>
    tpu.vector_store %arg7[%c0_2, %c0_3], %2 {strides = array<i32>} : memref<72x256xf32, #tpu.memory_space<vmem>>, vector<8x256xf32>,
    %c0_4 = arith.constant 0 : index
    %c0_5 = arith.constant 0 : index
    %c1 = arith.constant 1 : index
    %4 = vector.load %arg1[%c0_4, %c0_5, %c1] : memref<1x8x384xbf16, #tpu.memory_space<vmem>>, vector<1x8x256xbf16>
    %5 = vector.shape_cast %4 : vector<1x8x256xbf16> to vector<8x256xbf16>
    %6 = arith.extf %5 : vector<8x256xbf16> to vector<8x256xf32>
    %c8 = arith.constant 8 : index
    %c0_6 = arith.constant 0 : index
    %7 = vector.load %arg7[%c8, %c0_6] : memref<72x256xf32, #tpu.memory_space<vmem>>, vector<8x256xf32>
    tpu.vector_store %arg7[%c8, %c0_6], %6 {strides = array<i32>} : memref<72x256xf32, #tpu.memory_space<vmem>>, vector<8x256xf32>,
    %c0_7 = arith.constant 0 : index
    %c0_8 = arith.constant 0 : index
    %c2 = arith.constant 2 : index
    %8 = vector.load %arg1[%c0_7, %c0_8, %c2] : memref<1x8x384xbf16, #tpu.memory_space<vmem>>, vector<1x8x256xbf16>
    %9 = vector.shape_cast %8 : vector<1x8x256xbf16> to vector<8x256xbf16>
    %10 = arith.extf %9 : vector<8x256xbf16> to vector<8x256xf32>
    %c16 = arith.constant 16 : index
    %c0_9 = arith.constant 0 : index
    %11 = vector.load %arg7[%c16, %c0_9] : memref<72x256xf32, #tpu.memory_space<vmem>>, vector<8x256xf32>
    tpu.vector_store %arg7[%c16, %c0_9], %10 {strides = array<i32>} : memref<72x256xf32, #tpu.memory_space<vmem>>, vector<8x256xf32>,
    %c0_10 = arith.constant 0 : index
    %c0_11 = arith.constant 0 : index
    %c10 = arith.constant 10 : index
    %12 = vector.load %arg1[%c0_10, %c0_11, %c10] : memref<1x8x384xbf16, #tpu.memory_space<vmem>>, vector<1x8x256xbf16>
    %13 = vector.shape_cast %12 : vector<1x8x256xbf16> to vector<8x256xbf16>
    %14 = arith.extf %13 : vector<8x256xbf16> to vector<8x256xf32>
    %c24 = arith.constant 24 : index
    %c0_12 = arith.constant 0 : index
    %15 = vector.load %arg7[%c24, %c0_12] : memref<72x256xf32, #tpu.memory_space<vmem>>, vector<8x256xf32>
    tpu.vector_store %arg7[%c24, %c0_12], %14 {strides = array<i32>} : memref<72x256xf32, #tpu.memory_space<vmem>>, vector<8x256xf32>,
    %c0_13 = arith.constant 0 : index
    %c0_14 = arith.constant 0 : index
    %c11 = arith.constant 11 : index
    %16 = vector.load %arg1[%c0_13, %c0_14, %c11] : memref<1x8x384xbf16, #tpu.memory_space<vmem>>, vector<1x8x256xbf16>
    %17 = vector.shape_cast %16 : vector<1x8x256xbf16> to vector<8x256xbf16>
    %18 = arith.extf %17 : vector<8x256xbf16> to vector<8x256xf32>
    %c32 = arith.constant 32 : index
    %c0_15 = arith.constant 0 : index
    %19 = vector.load %arg7[%c32, %c0_15] : memref<72x256xf32, #tpu.memory_space<vmem>>, vector<8x256xf32>
    tpu.vector_store %arg7[%c32, %c0_15], %18 {strides = array<i32>} : memref<72x256xf32, #tpu.memory_space<vmem>>, vector<8x256xf32>,
    %c0_16 = arith.constant 0 : index
    %c0_17 = arith.constant 0 : index
    %c12 = arith.constant 12 : index
    %20 = vector.load %arg1[%c0_16, %c0_17, %c12] : memref<1x8x384xbf16, #tpu.memory_space<vmem>>, vector<1x8x256xbf16>
    %21 = vector.shape_cast %20 : vector<1x8x256xbf16> to vector<8x256xbf16>
    %22 = arith.extf %21 : vector<8x256xbf16> to vector<8x256xf32>
    %c40 = arith.constant 40 : index
    %c0_18 = arith.constant 0 : index
    %23 = vector.load %arg7[%c40, %c0_18] : memref<72x256xf32, #tpu.memory_space<vmem>>, vector<8x256xf32>
    tpu.vector_store %arg7[%c40, %c0_18], %22 {strides = array<i32>} : memref<72x256xf32, #tpu.memory_space<vmem>>, vector<8x256xf32>,
    %c0_19 = arith.constant 0 : index
    %c0_20 = arith.constant 0 : index
    %c20 = arith.constant 20 : index
    %24 = vector.load %arg1[%c0_19, %c0_20, %c20] : memref<1x8x384xbf16, #tpu.memory_space<vmem>>, vector<1x8x256xbf16>
    %25 = vector.shape_cast %24 : vector<1x8x256xbf16> to vector<8x256xbf16>
    %26 = arith.extf %25 : vector<8x256xbf16> to vector<8x256xf32>
    %c48 = arith.constant 48 : index
    %c0_21 = arith.constant 0 : index
    %27 = vector.load %arg7[%c48, %c0_21] : memref<72x256xf32, #tpu.memory_space<vmem>>, vector<8x256xf32>
    tpu.vector_store %arg7[%c48, %c0_21], %26 {strides = array<i32>} : memref<72x256xf32, #tpu.memory_space<vmem>>, vector<8x256xf32>,
    %c0_22 = arith.constant 0 : index
    %c0_23 = arith.constant 0 : index
    %c21 = arith.constant 21 : index
    %28 = vector.load %arg1[%c0_22, %c0_23, %c21] : memref<1x8x384xbf16, #tpu.memory_space<vmem>>, vector<1x8x256xbf16>
    %29 = vector.shape_cast %28 : vector<1x8x256xbf16> to vector<8x256xbf16>
    %30 = arith.extf %29 : vector<8x256xbf16> to vector<8x256xf32>
    %c56 = arith.constant 56 : index
    %c0_24 = arith.constant 0 : index
    %31 = vector.load %arg7[%c56, %c0_24] : memref<72x256xf32, #tpu.memory_space<vmem>>, vector<8x256xf32>
    tpu.vector_store %arg7[%c56, %c0_24], %30 {strides = array<i32>} : memref<72x256xf32, #tpu.memory_space<vmem>>, vector<8x256xf32>,
    %c0_25 = arith.constant 0 : index
    %c0_26 = arith.constant 0 : index
    %c22 = arith.constant 22 : index
    %32 = vector.load %arg1[%c0_25, %c0_26, %c22] : memref<1x8x384xbf16, #tpu.memory_space<vmem>>, vector<1x8x256xbf16>
    %33 = vector.shape_cast %32 : vector<1x8x256xbf16> to vector<8x256xbf16>
    %34 = arith.extf %33 : vector<8x256xbf16> to vector<8x256xf32>
    %c64 = arith.constant 64 : index
    %c0_27 = arith.constant 0 : index
    %35 = vector.load %arg7[%c64, %c0_27] : memref<72x256xf32, #tpu.memory_space<vmem>>, vector<8x256xf32>
    tpu.vector_store %arg7[%c64, %c0_27], %34 {strides = array<i32>} : memref<72x256xf32, #tpu.memory_space<vmem>>, vector<8x256xf32>,
    %c0_28 = arith.constant 0 : index
    %c0_29 = arith.constant 0 : index
    %36 = vector.load %arg2[%c0_28, %c0_29] : memref<8x72xbf16, #tpu.memory_space<vmem>>, vector<8x72xbf16>
    %c0_30 = arith.constant 0 : index
    %c0_31 = arith.constant 0 : index
    %37 = vector.load %arg7[%c0_30, %c0_31] : memref<72x256xf32, #tpu.memory_space<vmem>>, vector<72x256xf32>
    %38 = arith.truncf %37 : vector<72x256xf32> to vector<72x256xbf16>
    %cst = arith.constant dense<0.000000e+00> : vector<8x256xf32>
    %39 = tpu.matmul %36, %38, %cst {dimension_numbers = #tpu.dot_dimension_numbers<[1], [0], [0], [1], [0, 0, 1, 1], [], []>} : vector<8x72xbf16>, vector<72x256xbf16>, vector<8x256xf32> -> vector<8x256xf32>
    %c0_32 = arith.constant 0 : index
    %c0_33 = arith.constant 0 : index
    %40 = vector.load %arg3[%c0_32, %c0_33] : memref<8x1xf32, #tpu.memory_space<vmem>>, vector<8x1xf32>
    %41 = vector.broadcast %40 : vector<8x1xf32> to vector<8x256xf32>
    %42 = arith.addf %39, %41 : vector<8x256xf32>
    %43 = tpu.iota {dimensions = array<i32: 1>} : vector<1x256xi32>
    %c10_i32 = arith.constant 10 : i32
    %c0_i32 = arith.constant 0 : i32
    %44 = arith.cmpi eq, %c10_i32, %c0_i32 : i32
    %c1_i32 = arith.constant 1 : i32
    %45 = arith.select %44, %c1_i32, %c10_i32 : i32
    %46 = vector.broadcast %45 : i32 to vector<1x256xi32>
    %47 = arith.remsi %43, %46 : vector<1x256xi32>
    %c0_i32_34 = arith.constant 0 : i32
    %48 = vector.broadcast %c0_i32_34 : i32 to vector<1x256xi32>
    %49 = arith.cmpi ne, %47, %48 : vector<1x256xi32>
    %c0_i32_35 = arith.constant 0 : i32
    %50 = vector.broadcast %c0_i32_35 : i32 to vector<1x256xi32>
    %51 = arith.cmpi slt, %47, %50 : vector<1x256xi32>
    %c0_i32_36 = arith.constant 0 : i32
    %52 = arith.cmpi slt, %45, %c0_i32_36 : i32
    %53 = vector.broadcast %52 : i1 to vector<1x256xi1>
    %54 = vector.broadcast %53 : vector<1x256xi1> to vector<1x256xi1>
    %55 = arith.xori %51, %54 : vector<1x256xi1>
    %56 = arith.andi %55, %49 : vector<1x256xi1>
    %57 = vector.broadcast %45 : i32 to vector<1x256xi32>
    %58 = arith.addi %47, %57 : vector<1x256xi32>
    %59 = arith.select %56, %58, %47 : vector<1x256xi1>, vector<1x256xi32>
    %c8_i32 = arith.constant 8 : i32
    %60 = vector.broadcast %c8_i32 : i32 to vector<1x256xi32>
    %61 = arith.cmpi slt, %59, %60 : vector<1x256xi32>
    %c80_i32 = arith.constant 80 : i32
    %62 = vector.broadcast %c80_i32 : i32 to vector<1x256xi32>
    %63 = arith.cmpi slt, %43, %62 : vector<1x256xi32>
    %64 = arith.andi %61, %63 : vector<1x256xi1>
    %65 = arith.extui %64 : vector<1x256xi1> to vector<1x256xi32>
    %66 = arith.sitofp %65 : vector<1x256xi32> to vector<1x256xf32>
    %c0_37 = arith.constant 0 : index
    %c0_38 = arith.constant 0 : index
    %67 = vector.load %arg4[%c0_37, %c0_38] : memref<8x1xf32, #tpu.memory_space<vmem>>, vector<8x1xf32>
    %c0_39 = arith.constant 0 : index
    %c0_40 = arith.constant 0 : index
    %68 = vector.load %arg5[%c0_39, %c0_40] : memref<8x1xf32, #tpu.memory_space<vmem>>, vector<8x1xf32>
    %69 = tpu.iota {dimensions = array<i32: 0>} : vector<8x1xi32>
    %c8_i32_41 = arith.constant 8 : i32
    %c0_i32_42 = arith.constant 0 : i32
    %70 = arith.cmpi eq, %c8_i32_41, %c0_i32_42 : i32
    %c1_i32_43 = arith.constant 1 : i32
    %71 = arith.select %70, %c1_i32_43, %c8_i32_41 : i32
    %72 = vector.broadcast %71 : i32 to vector<8x1xi32>
    %73 = arith.remsi %69, %72 : vector<8x1xi32>
    %c0_i32_44 = arith.constant 0 : i32
    %74 = vector.broadcast %c0_i32_44 : i32 to vector<8x1xi32>
    %75 = arith.cmpi ne, %73, %74 : vector<8x1xi32>
    %c0_i32_45 = arith.constant 0 : i32
    %76 = vector.broadcast %c0_i32_45 : i32 to vector<8x1xi32>
    %77 = arith.cmpi slt, %73, %76 : vector<8x1xi32>
    %c0_i32_46 = arith.constant 0 : i32
    %78 = arith.cmpi slt, %71, %c0_i32_46 : i32
    %79 = vector.broadcast %78 : i1 to vector<8x1xi1>
    %80 = vector.broadcast %79 : vector<8x1xi1> to vector<8x1xi1>
    %81 = arith.xori %77, %80 : vector<8x1xi1>
    %82 = arith.andi %81, %75 : vector<8x1xi1>
    %83 = vector.broadcast %71 : i32 to vector<8x1xi32>
    %84 = arith.addi %73, %83 : vector<8x1xi32>
    %85 = arith.select %82, %84, %73 : vector<8x1xi1>, vector<8x1xi32>
    %c4_i32 = arith.constant 4 : i32
    %86 = vector.broadcast %c4_i32 : i32 to vector<8x1xi32>
    %87 = arith.cmpi sge, %85, %86 : vector<8x1xi32>
    %88 = vector.broadcast %66 : vector<1x256xf32> to vector<8x256xf32>
    %89 = arith.mulf %42, %88 : vector<8x256xf32>
    %cst_47 = arith.constant dense<0.000000e+00> : vector<8xf32>
    %90 = vector.multi_reduction <add>, %89, %cst_47 [1] : vector<8x256xf32> to vector<8xf32>
    %91 = vector.shape_cast %90 : vector<8xf32> to vector<8x1xf32>
    %cst_48 = arith.constant 0.000000e+00 : f32
    %92 = vector.broadcast %cst_48 : f32 to vector<8x1xf32>
    %93 = arith.select %87, %92, %91 : vector<8x1xi1>, vector<8x1xf32>
    %94 = vector.shape_cast %93 : vector<8x1xf32> to vector<1x8x1xf32>
    %cst_49 = arith.constant dense<0.000000e+00> : vector<1xf32>
    %95 = vector.multi_reduction <add>, %94, %cst_49 [1, 2] : vector<1x8x1xf32> to vector<1xf32>
    %96 = vector.shape_cast %95 : vector<1xf32> to vector<1x1x1xf32>
    %97 = vector.extract %96[0, 0, 0] : f32 from vector<1x1x1xf32>
    %cst_50 = arith.constant 0.000000e+00 : f32
    %98 = vector.broadcast %cst_50 : f32 to vector<8x1xf32>
    %99 = arith.select %87, %91, %98 : vector<8x1xi1>, vector<8x1xf32>
    %100 = vector.shape_cast %99 : vector<8x1xf32> to vector<1x8x1xf32>
    %cst_51 = arith.constant dense<0.000000e+00> : vector<1xf32>
    %101 = vector.multi_reduction <add>, %100, %cst_51 [1, 2] : vector<1x8x1xf32> to vector<1xf32>
    %102 = vector.shape_cast %101 : vector<1xf32> to vector<1x1x1xf32>
    %103 = vector.extract %102[0, 0, 0] : f32 from vector<1x1x1xf32>
    %104 = vector.broadcast %103 : f32 to vector<8x1xf32>
    %105 = vector.broadcast %97 : f32 to vector<8x1xf32>
    %106 = arith.select %87, %104, %105 : vector<8x1xi1>, vector<8x1xf32>
    %cst_52 = arith.constant 3.906250e-03 : f32
    %107 = vector.broadcast %cst_52 : f32 to vector<8x1xf32>
    %108 = arith.mulf %106, %107 : vector<8x1xf32>
    %109 = vector.broadcast %108 : vector<8x1xf32> to vector<8x256xf32>
    %110 = arith.subf %42, %109 : vector<8x256xf32>
    %111 = vector.broadcast %66 : vector<1x256xf32> to vector<8x256xf32>
    %112 = arith.mulf %110, %111 : vector<8x256xf32>
    %113 = arith.mulf %112, %112 : vector<8x256xf32>
    %cst_53 = arith.constant dense<0.000000e+00> : vector<8xf32>
    %114 = vector.multi_reduction <add>, %113, %cst_53 [1] : vector<8x256xf32> to vector<8xf32>
    %115 = vector.shape_cast %114 : vector<8xf32> to vector<8x1xf32>
    %cst_54 = arith.constant 0.000000e+00 : f32
    %116 = vector.broadcast %cst_54 : f32 to vector<8x1xf32>
    %117 = arith.select %87, %116, %115 : vector<8x1xi1>, vector<8x1xf32>
    %118 = vector.shape_cast %117 : vector<8x1xf32> to vector<1x8x1xf32>
    %cst_55 = arith.constant dense<0.000000e+00> : vector<1xf32>
    %119 = vector.multi_reduction <add>, %118, %cst_55 [1, 2] : vector<1x8x1xf32> to vector<1xf32>
    %120 = vector.shape_cast %119 : vector<1xf32> to vector<1x1x1xf32>
    %121 = vector.extract %120[0, 0, 0] : f32 from vector<1x1x1xf32>
    %cst_56 = arith.constant 0.000000e+00 : f32
    %122 = vector.broadcast %cst_56 : f32 to vector<8x1xf32>
    %123 = arith.select %87, %115, %122 : vector<8x1xi1>, vector<8x1xf32>
    %124 = vector.shape_cast %123 : vector<8x1xf32> to vector<1x8x1xf32>
    %cst_57 = arith.constant dense<0.000000e+00> : vector<1xf32>
    %125 = vector.multi_reduction <add>, %124, %cst_57 [1, 2] : vector<1x8x1xf32> to vector<1xf32>
    %126 = vector.shape_cast %125 : vector<1xf32> to vector<1x1x1xf32>
    %127 = vector.extract %126[0, 0, 0] : f32 from vector<1x1x1xf32>
    %128 = vector.broadcast %127 : f32 to vector<8x1xf32>
    %129 = vector.broadcast %121 : f32 to vector<8x1xf32>
    %130 = arith.select %87, %128, %129 : vector<8x1xi1>, vector<8x1xf32>
    %cst_58 = arith.constant 3.906250e-03 : f32
    %131 = vector.broadcast %cst_58 : f32 to vector<8x1xf32>
    %132 = arith.mulf %130, %131 : vector<8x1xf32>
    %cst_59 = arith.constant 9.99999974E-6 : f32
    %133 = vector.broadcast %cst_59 : f32 to vector<8x1xf32>
    %134 = arith.addf %132, %133 : vector<8x1xf32>
    %135 = math.rsqrt %134 : vector<8x1xf32>
    %136 = arith.mulf %135, %67 : vector<8x1xf32>
    %137 = vector.broadcast %136 : vector<8x1xf32> to vector<8x256xf32>
    %138 = arith.mulf %110, %137 : vector<8x256xf32>
    %139 = vector.broadcast %68 : vector<8x1xf32> to vector<8x256xf32>
    %140 = arith.addf %138, %139 : vector<8x256xf32>
    %cst_60 = arith.constant 0.000000e+00 : f32
    %141 = vector.broadcast %cst_60 : f32 to vector<8x256xf32>
    %142 = arith.cmpf ogt, %140, %141 : vector<8x256xf32>
    %cst_61 = arith.constant 2.000000e-01 : f32
    %143 = vector.broadcast %cst_61 : f32 to vector<8x256xf32>
    %144 = arith.mulf %143, %140 : vector<8x256xf32>
    %145 = arith.select %142, %140, %144 : vector<8x256xi1>, vector<8x256xf32>
    %146 = vector.broadcast %66 : vector<1x256xf32> to vector<8x256xf32>
    %147 = arith.mulf %145, %146 : vector<8x256xf32>
    %148 = arith.truncf %147 : vector<8x256xf32> to vector<8x256xbf16>
    %c0_62 = arith.constant 0 : index
    %c0_63 = arith.constant 0 : index
    %c0_64 = arith.constant 0 : index
    %149 = vector.load %arg6[%c0_62, %c0_63, %c0_64] : memref<1x8x256xbf16, #tpu.memory_space<vmem>>, vector<1x8x256xbf16>
    %150 = vector.shape_cast %149 : vector<1x8x256xbf16> to vector<8x256xbf16>
    %151 = vector.shape_cast %148 : vector<8x256xbf16> to vector<1x8x256xbf16>
    tpu.vector_store %arg6[%c0_62, %c0_63, %c0_64], %151 {strides = array<i32>} : memref<1x8x256xbf16, #tpu.memory_space<vmem>>, vector<1x8x256xbf16>,
    return
  }
  func.func @transform_0(%arg0: i32) -> (i32, i32, i32) {
    %c0_i32 = arith.constant 0 : i32
    %c0_i32_0 = arith.constant 0 : i32
    %c0_i32_1 = arith.constant 0 : i32
    return %arg0, %c0_i32, %c0_i32_0 : i32, i32, i32
  }
  func.func @transform_1(%arg0: i32) -> (i32, i32) {
    %c0_i32 = arith.constant 0 : i32
    %c0_i32_0 = arith.constant 0 : i32
    %c0_i32_1 = arith.constant 0 : i32
    return %c0_i32, %c0_i32_0 : i32, i32
  }
  func.func @transform_2(%arg0: i32) -> (i32, i32) {
    %c0_i32 = arith.constant 0 : i32
    %c0_i32_0 = arith.constant 0 : i32
    %c0_i32_1 = arith.constant 0 : i32
    return %c0_i32, %c0_i32_0 : i32, i32
  }
  func.func @transform_3(%arg0: i32) -> (i32, i32) {
    %c0_i32 = arith.constant 0 : i32
    %c0_i32_0 = arith.constant 0 : i32
    %c0_i32_1 = arith.constant 0 : i32
    return %c0_i32, %c0_i32_0 : i32, i32
  }
  func.func @transform_4(%arg0: i32) -> (i32, i32) {
    %c0_i32 = arith.constant 0 : i32
    %c0_i32_0 = arith.constant 0 : i32
    %c0_i32_1 = arith.constant 0 : i32
    return %c0_i32, %c0_i32_0 : i32, i32
  }
  func.func @transform_5(%arg0: i32) -> (i32, i32, i32) {
    %c0_i32 = arith.constant 0 : i32
    %c0_i32_0 = arith.constant 0 : i32
    %c0_i32_1 = arith.constant 0 : i32
    return %arg0, %c0_i32, %c0_i32_0 : i32, i32, i32
  }
}

module attributes {stable_mosaic.version = 11 : i64} {
  func.func @_tconv3x3_s2_kernel(%arg0: i32, %arg1: memref<1x8x256xbf16, #tpu.memory_space<vmem>>, %arg2: memref<32x32xbf16, #tpu.memory_space<vmem>>, %arg3: memref<32x1xf32, #tpu.memory_space<vmem>>, %arg4: memref<32x1xf32, #tpu.memory_space<vmem>>, %arg5: memref<32x1xf32, #tpu.memory_space<vmem>>, %arg6: memref<1x32x128xbf16, #tpu.memory_space<vmem>>, %arg7: memref<32x128xf32, #tpu.memory_space<vmem>>) attributes {dimension_semantics = [#tpu.dimension_semantics<parallel>], iteration_bounds = array<i64: 2>, scalar_prefetch = 0 : i64, scratch_operands = 1 : i64, tpu.core_type = #tpu.core_type<tc>, window_params = [{transform_indices = @transform_0, window_bounds = array<i64: 1, 8, 256>}, {pipeline_mode = #tpu.pipeline_mode<synchronous>, transform_indices = @transform_1, window_bounds = array<i64: 32, 32>}, {pipeline_mode = #tpu.pipeline_mode<synchronous>, transform_indices = @transform_2, window_bounds = array<i64: 32, 1>}, {pipeline_mode = #tpu.pipeline_mode<synchronous>, transform_indices = @transform_3, window_bounds = array<i64: 32, 1>}, {pipeline_mode = #tpu.pipeline_mode<synchronous>, transform_indices = @transform_4, window_bounds = array<i64: 32, 1>}, {transform_indices = @transform_5, window_bounds = array<i64: 1, 32, 128>}]} {
    %c0 = arith.constant 0 : index
    %c0_0 = arith.constant 0 : index
    %c0_1 = arith.constant 0 : index
    %0 = vector.load %arg1[%c0, %c0_0, %c0_1] : memref<1x8x256xbf16, #tpu.memory_space<vmem>>, vector<1x8x128xbf16>
    %1 = vector.shape_cast %0 : vector<1x8x128xbf16> to vector<8x128xbf16>
    %2 = arith.extf %1 : vector<8x128xbf16> to vector<8x128xf32>
    %c0_2 = arith.constant 0 : index
    %c0_3 = arith.constant 0 : index
    %3 = vector.load %arg7[%c0_2, %c0_3] : memref<32x128xf32, #tpu.memory_space<vmem>>, vector<8x128xf32>
    tpu.vector_store %arg7[%c0_2, %c0_3], %2 {strides = array<i32>} : memref<32x128xf32, #tpu.memory_space<vmem>>, vector<8x128xf32>,
    %c0_4 = arith.constant 0 : index
    %c0_5 = arith.constant 0 : index
    %c1 = arith.constant 1 : index
    %4 = vector.load %arg1[%c0_4, %c0_5, %c1] : memref<1x8x256xbf16, #tpu.memory_space<vmem>>, vector<1x8x128xbf16>
    %5 = vector.shape_cast %4 : vector<1x8x128xbf16> to vector<8x128xbf16>
    %6 = arith.extf %5 : vector<8x128xbf16> to vector<8x128xf32>
    %c8 = arith.constant 8 : index
    %c0_6 = arith.constant 0 : index
    %7 = vector.load %arg7[%c8, %c0_6] : memref<32x128xf32, #tpu.memory_space<vmem>>, vector<8x128xf32>
    tpu.vector_store %arg7[%c8, %c0_6], %6 {strides = array<i32>} : memref<32x128xf32, #tpu.memory_space<vmem>>, vector<8x128xf32>,
    %c0_7 = arith.constant 0 : index
    %c0_8 = arith.constant 0 : index
    %c10 = arith.constant 10 : index
    %8 = vector.load %arg1[%c0_7, %c0_8, %c10] : memref<1x8x256xbf16, #tpu.memory_space<vmem>>, vector<1x8x128xbf16>
    %9 = vector.shape_cast %8 : vector<1x8x128xbf16> to vector<8x128xbf16>
    %10 = arith.extf %9 : vector<8x128xbf16> to vector<8x128xf32>
    %c16 = arith.constant 16 : index
    %c0_9 = arith.constant 0 : index
    %11 = vector.load %arg7[%c16, %c0_9] : memref<32x128xf32, #tpu.memory_space<vmem>>, vector<8x128xf32>
    tpu.vector_store %arg7[%c16, %c0_9], %10 {strides = array<i32>} : memref<32x128xf32, #tpu.memory_space<vmem>>, vector<8x128xf32>,
    %c0_10 = arith.constant 0 : index
    %c0_11 = arith.constant 0 : index
    %c11 = arith.constant 11 : index
    %12 = vector.load %arg1[%c0_10, %c0_11, %c11] : memref<1x8x256xbf16, #tpu.memory_space<vmem>>, vector<1x8x128xbf16>
    %13 = vector.shape_cast %12 : vector<1x8x128xbf16> to vector<8x128xbf16>
    %14 = arith.extf %13 : vector<8x128xbf16> to vector<8x128xf32>
    %c24 = arith.constant 24 : index
    %c0_12 = arith.constant 0 : index
    %15 = vector.load %arg7[%c24, %c0_12] : memref<32x128xf32, #tpu.memory_space<vmem>>, vector<8x128xf32>
    tpu.vector_store %arg7[%c24, %c0_12], %14 {strides = array<i32>} : memref<32x128xf32, #tpu.memory_space<vmem>>, vector<8x128xf32>,
    %c0_13 = arith.constant 0 : index
    %c0_14 = arith.constant 0 : index
    %16 = vector.load %arg2[%c0_13, %c0_14] : memref<32x32xbf16, #tpu.memory_space<vmem>>, vector<32x32xbf16>
    %c0_15 = arith.constant 0 : index
    %c0_16 = arith.constant 0 : index
    %17 = vector.load %arg7[%c0_15, %c0_16] : memref<32x128xf32, #tpu.memory_space<vmem>>, vector<32x128xf32>
    %18 = arith.truncf %17 : vector<32x128xf32> to vector<32x128xbf16>
    %cst = arith.constant dense<0.000000e+00> : vector<32x128xf32>
    %19 = tpu.matmul %16, %18, %cst {dimension_numbers = #tpu.dot_dimension_numbers<[1], [0], [0], [1], [0, 0, 1, 1], [], []>} : vector<32x32xbf16>, vector<32x128xbf16>, vector<32x128xf32> -> vector<32x128xf32>
    %c0_17 = arith.constant 0 : index
    %c0_18 = arith.constant 0 : index
    %20 = vector.load %arg3[%c0_17, %c0_18] : memref<32x1xf32, #tpu.memory_space<vmem>>, vector<32x1xf32>
    %21 = vector.broadcast %20 : vector<32x1xf32> to vector<32x128xf32>
    %22 = arith.addf %19, %21 : vector<32x128xf32>
    %23 = tpu.iota {dimensions = array<i32: 1>} : vector<1x128xi32>
    %c10_i32 = arith.constant 10 : i32
    %c0_i32 = arith.constant 0 : i32
    %24 = arith.cmpi eq, %c10_i32, %c0_i32 : i32
    %c1_i32 = arith.constant 1 : i32
    %25 = arith.select %24, %c1_i32, %c10_i32 : i32
    %26 = vector.broadcast %25 : i32 to vector<1x128xi32>
    %27 = arith.remsi %23, %26 : vector<1x128xi32>
    %c0_i32_19 = arith.constant 0 : i32
    %28 = vector.broadcast %c0_i32_19 : i32 to vector<1x128xi32>
    %29 = arith.cmpi ne, %27, %28 : vector<1x128xi32>
    %c0_i32_20 = arith.constant 0 : i32
    %30 = vector.broadcast %c0_i32_20 : i32 to vector<1x128xi32>
    %31 = arith.cmpi slt, %27, %30 : vector<1x128xi32>
    %c0_i32_21 = arith.constant 0 : i32
    %32 = arith.cmpi slt, %25, %c0_i32_21 : i32
    %33 = vector.broadcast %32 : i1 to vector<1x128xi1>
    %34 = vector.broadcast %33 : vector<1x128xi1> to vector<1x128xi1>
    %35 = arith.xori %31, %34 : vector<1x128xi1>
    %36 = arith.andi %35, %29 : vector<1x128xi1>
    %37 = vector.broadcast %25 : i32 to vector<1x128xi32>
    %38 = arith.addi %27, %37 : vector<1x128xi32>
    %39 = arith.select %36, %38, %27 : vector<1x128xi1>, vector<1x128xi32>
    %c8_i32 = arith.constant 8 : i32
    %40 = vector.broadcast %c8_i32 : i32 to vector<1x128xi32>
    %41 = arith.cmpi slt, %39, %40 : vector<1x128xi32>
    %c80_i32 = arith.constant 80 : i32
    %42 = vector.broadcast %c80_i32 : i32 to vector<1x128xi32>
    %43 = arith.cmpi slt, %23, %42 : vector<1x128xi32>
    %44 = arith.andi %41, %43 : vector<1x128xi1>
    %45 = arith.extui %44 : vector<1x128xi1> to vector<1x128xi32>
    %46 = arith.sitofp %45 : vector<1x128xi32> to vector<1x128xf32>
    %c0_22 = arith.constant 0 : index
    %c0_23 = arith.constant 0 : index
    %47 = vector.load %arg4[%c0_22, %c0_23] : memref<32x1xf32, #tpu.memory_space<vmem>>, vector<32x1xf32>
    %c0_24 = arith.constant 0 : index
    %c0_25 = arith.constant 0 : index
    %48 = vector.load %arg5[%c0_24, %c0_25] : memref<32x1xf32, #tpu.memory_space<vmem>>, vector<32x1xf32>
    %49 = tpu.iota {dimensions = array<i32: 0>} : vector<32x1xi32>
    %c8_i32_26 = arith.constant 8 : i32
    %c0_i32_27 = arith.constant 0 : i32
    %50 = arith.cmpi eq, %c8_i32_26, %c0_i32_27 : i32
    %c1_i32_28 = arith.constant 1 : i32
    %51 = arith.select %50, %c1_i32_28, %c8_i32_26 : i32
    %52 = vector.broadcast %51 : i32 to vector<32x1xi32>
    %53 = arith.remsi %49, %52 : vector<32x1xi32>
    %c0_i32_29 = arith.constant 0 : i32
    %54 = vector.broadcast %c0_i32_29 : i32 to vector<32x1xi32>
    %55 = arith.cmpi ne, %53, %54 : vector<32x1xi32>
    %c0_i32_30 = arith.constant 0 : i32
    %56 = vector.broadcast %c0_i32_30 : i32 to vector<32x1xi32>
    %57 = arith.cmpi slt, %53, %56 : vector<32x1xi32>
    %c0_i32_31 = arith.constant 0 : i32
    %58 = arith.cmpi slt, %51, %c0_i32_31 : i32
    %59 = vector.broadcast %58 : i1 to vector<32x1xi1>
    %60 = vector.broadcast %59 : vector<32x1xi1> to vector<32x1xi1>
    %61 = arith.xori %57, %60 : vector<32x1xi1>
    %62 = arith.andi %61, %55 : vector<32x1xi1>
    %63 = vector.broadcast %51 : i32 to vector<32x1xi32>
    %64 = arith.addi %53, %63 : vector<32x1xi32>
    %65 = arith.select %62, %64, %53 : vector<32x1xi1>, vector<32x1xi32>
    %c4_i32 = arith.constant 4 : i32
    %66 = vector.broadcast %c4_i32 : i32 to vector<32x1xi32>
    %67 = arith.cmpi sge, %65, %66 : vector<32x1xi32>
    %68 = vector.broadcast %46 : vector<1x128xf32> to vector<32x128xf32>
    %69 = arith.mulf %22, %68 : vector<32x128xf32>
    %cst_32 = arith.constant dense<0.000000e+00> : vector<32xf32>
    %70 = vector.multi_reduction <add>, %69, %cst_32 [1] : vector<32x128xf32> to vector<32xf32>
    %71 = vector.shape_cast %70 : vector<32xf32> to vector<32x1xf32>
    %cst_33 = arith.constant 0.000000e+00 : f32
    %72 = vector.broadcast %cst_33 : f32 to vector<32x1xf32>
    %73 = arith.select %67, %72, %71 : vector<32x1xi1>, vector<32x1xf32>
    %74 = vector.shape_cast %73 : vector<32x1xf32> to vector<1x32x1xf32>
    %cst_34 = arith.constant dense<0.000000e+00> : vector<1xf32>
    %75 = vector.multi_reduction <add>, %74, %cst_34 [1, 2] : vector<1x32x1xf32> to vector<1xf32>
    %76 = vector.shape_cast %75 : vector<1xf32> to vector<1x1x1xf32>
    %77 = vector.extract %76[0, 0, 0] : f32 from vector<1x1x1xf32>
    %cst_35 = arith.constant 0.000000e+00 : f32
    %78 = vector.broadcast %cst_35 : f32 to vector<32x1xf32>
    %79 = arith.select %67, %71, %78 : vector<32x1xi1>, vector<32x1xf32>
    %80 = vector.shape_cast %79 : vector<32x1xf32> to vector<1x32x1xf32>
    %cst_36 = arith.constant dense<0.000000e+00> : vector<1xf32>
    %81 = vector.multi_reduction <add>, %80, %cst_36 [1, 2] : vector<1x32x1xf32> to vector<1xf32>
    %82 = vector.shape_cast %81 : vector<1xf32> to vector<1x1x1xf32>
    %83 = vector.extract %82[0, 0, 0] : f32 from vector<1x1x1xf32>
    %84 = vector.broadcast %83 : f32 to vector<32x1xf32>
    %85 = vector.broadcast %77 : f32 to vector<32x1xf32>
    %86 = arith.select %67, %84, %85 : vector<32x1xi1>, vector<32x1xf32>
    %cst_37 = arith.constant 9.765625E-4 : f32
    %87 = vector.broadcast %cst_37 : f32 to vector<32x1xf32>
    %88 = arith.mulf %86, %87 : vector<32x1xf32>
    %89 = vector.broadcast %88 : vector<32x1xf32> to vector<32x128xf32>
    %90 = arith.subf %22, %89 : vector<32x128xf32>
    %91 = vector.broadcast %46 : vector<1x128xf32> to vector<32x128xf32>
    %92 = arith.mulf %90, %91 : vector<32x128xf32>
    %93 = arith.mulf %92, %92 : vector<32x128xf32>
    %cst_38 = arith.constant dense<0.000000e+00> : vector<32xf32>
    %94 = vector.multi_reduction <add>, %93, %cst_38 [1] : vector<32x128xf32> to vector<32xf32>
    %95 = vector.shape_cast %94 : vector<32xf32> to vector<32x1xf32>
    %cst_39 = arith.constant 0.000000e+00 : f32
    %96 = vector.broadcast %cst_39 : f32 to vector<32x1xf32>
    %97 = arith.select %67, %96, %95 : vector<32x1xi1>, vector<32x1xf32>
    %98 = vector.shape_cast %97 : vector<32x1xf32> to vector<1x32x1xf32>
    %cst_40 = arith.constant dense<0.000000e+00> : vector<1xf32>
    %99 = vector.multi_reduction <add>, %98, %cst_40 [1, 2] : vector<1x32x1xf32> to vector<1xf32>
    %100 = vector.shape_cast %99 : vector<1xf32> to vector<1x1x1xf32>
    %101 = vector.extract %100[0, 0, 0] : f32 from vector<1x1x1xf32>
    %cst_41 = arith.constant 0.000000e+00 : f32
    %102 = vector.broadcast %cst_41 : f32 to vector<32x1xf32>
    %103 = arith.select %67, %95, %102 : vector<32x1xi1>, vector<32x1xf32>
    %104 = vector.shape_cast %103 : vector<32x1xf32> to vector<1x32x1xf32>
    %cst_42 = arith.constant dense<0.000000e+00> : vector<1xf32>
    %105 = vector.multi_reduction <add>, %104, %cst_42 [1, 2] : vector<1x32x1xf32> to vector<1xf32>
    %106 = vector.shape_cast %105 : vector<1xf32> to vector<1x1x1xf32>
    %107 = vector.extract %106[0, 0, 0] : f32 from vector<1x1x1xf32>
    %108 = vector.broadcast %107 : f32 to vector<32x1xf32>
    %109 = vector.broadcast %101 : f32 to vector<32x1xf32>
    %110 = arith.select %67, %108, %109 : vector<32x1xi1>, vector<32x1xf32>
    %cst_43 = arith.constant 9.765625E-4 : f32
    %111 = vector.broadcast %cst_43 : f32 to vector<32x1xf32>
    %112 = arith.mulf %110, %111 : vector<32x1xf32>
    %cst_44 = arith.constant 9.99999974E-6 : f32
    %113 = vector.broadcast %cst_44 : f32 to vector<32x1xf32>
    %114 = arith.addf %112, %113 : vector<32x1xf32>
    %115 = math.rsqrt %114 : vector<32x1xf32>
    %116 = arith.mulf %115, %47 : vector<32x1xf32>
    %117 = vector.broadcast %116 : vector<32x1xf32> to vector<32x128xf32>
    %118 = arith.mulf %90, %117 : vector<32x128xf32>
    %119 = vector.broadcast %48 : vector<32x1xf32> to vector<32x128xf32>
    %120 = arith.addf %118, %119 : vector<32x128xf32>
    %cst_45 = arith.constant 0.000000e+00 : f32
    %121 = vector.broadcast %cst_45 : f32 to vector<32x128xf32>
    %122 = arith.cmpf ogt, %120, %121 : vector<32x128xf32>
    %cst_46 = arith.constant 2.000000e-01 : f32
    %123 = vector.broadcast %cst_46 : f32 to vector<32x128xf32>
    %124 = arith.mulf %123, %120 : vector<32x128xf32>
    %125 = arith.select %122, %120, %124 : vector<32x128xi1>, vector<32x128xf32>
    %126 = arith.truncf %125 : vector<32x128xf32> to vector<32x128xbf16>
    %c0_47 = arith.constant 0 : index
    %c0_48 = arith.constant 0 : index
    %c0_49 = arith.constant 0 : index
    %127 = vector.load %arg6[%c0_47, %c0_48, %c0_49] : memref<1x32x128xbf16, #tpu.memory_space<vmem>>, vector<1x32x128xbf16>
    %128 = vector.shape_cast %127 : vector<1x32x128xbf16> to vector<32x128xbf16>
    %129 = vector.shape_cast %126 : vector<32x128xbf16> to vector<1x32x128xbf16>
    tpu.vector_store %arg6[%c0_47, %c0_48, %c0_49], %129 {strides = array<i32>} : memref<1x32x128xbf16, #tpu.memory_space<vmem>>, vector<1x32x128xbf16>,
    return
  }
  func.func @transform_0(%arg0: i32) -> (i32, i32, i32) {
    %c0_i32 = arith.constant 0 : i32
    %c0_i32_0 = arith.constant 0 : i32
    %c0_i32_1 = arith.constant 0 : i32
    return %arg0, %c0_i32, %c0_i32_0 : i32, i32, i32
  }
  func.func @transform_1(%arg0: i32) -> (i32, i32) {
    %c0_i32 = arith.constant 0 : i32
    %c0_i32_0 = arith.constant 0 : i32
    %c0_i32_1 = arith.constant 0 : i32
    return %c0_i32, %c0_i32_0 : i32, i32
  }
  func.func @transform_2(%arg0: i32) -> (i32, i32) {
    %c0_i32 = arith.constant 0 : i32
    %c0_i32_0 = arith.constant 0 : i32
    %c0_i32_1 = arith.constant 0 : i32
    return %c0_i32, %c0_i32_0 : i32, i32
  }
  func.func @transform_3(%arg0: i32) -> (i32, i32) {
    %c0_i32 = arith.constant 0 : i32
    %c0_i32_0 = arith.constant 0 : i32
    %c0_i32_1 = arith.constant 0 : i32
    return %c0_i32, %c0_i32_0 : i32, i32
  }
  func.func @transform_4(%arg0: i32) -> (i32, i32) {
    %c0_i32 = arith.constant 0 : i32
    %c0_i32_0 = arith.constant 0 : i32
    %c0_i32_1 = arith.constant 0 : i32
    return %c0_i32, %c0_i32_0 : i32, i32
  }
  func.func @transform_5(%arg0: i32) -> (i32, i32, i32) {
    %c0_i32 = arith.constant 0 : i32
    %c0_i32_0 = arith.constant 0 : i32
    %c0_i32_1 = arith.constant 0 : i32
    return %arg0, %c0_i32, %c0_i32_0 : i32, i32, i32
  }
}

module attributes {stable_mosaic.version = 11 : i64} {
  func.func @_conv3x3_readout_kernel(%arg0: i32, %arg1: memref<1x16x512xbf16, #tpu.memory_space<vmem>>, %arg2: memref<8x144xbf16, #tpu.memory_space<vmem>>, %arg3: memref<8x1xf32, #tpu.memory_space<vmem>>, %arg4: memref<8x1xf32, #tpu.memory_space<vmem>>, %arg5: memref<8x1xf32, #tpu.memory_space<vmem>>, %arg6: memref<8x8xf32, #tpu.memory_space<vmem>>, %arg7: memref<8x1xf32, #tpu.memory_space<vmem>>, %arg8: memref<1x8x384xf32, #tpu.memory_space<vmem>>, %arg9: memref<144x384xf32, #tpu.memory_space<vmem>>) attributes {dimension_semantics = [#tpu.dimension_semantics<parallel>], iteration_bounds = array<i64: 2>, scalar_prefetch = 0 : i64, scratch_operands = 1 : i64, tpu.core_type = #tpu.core_type<tc>, window_params = [{transform_indices = @transform_0, window_bounds = array<i64: 1, 16, 512>}, {pipeline_mode = #tpu.pipeline_mode<synchronous>, transform_indices = @transform_1, window_bounds = array<i64: 8, 144>}, {pipeline_mode = #tpu.pipeline_mode<synchronous>, transform_indices = @transform_2, window_bounds = array<i64: 8, 1>}, {pipeline_mode = #tpu.pipeline_mode<synchronous>, transform_indices = @transform_3, window_bounds = array<i64: 8, 1>}, {pipeline_mode = #tpu.pipeline_mode<synchronous>, transform_indices = @transform_4, window_bounds = array<i64: 8, 1>}, {pipeline_mode = #tpu.pipeline_mode<synchronous>, transform_indices = @transform_5, window_bounds = array<i64: 8, 8>}, {pipeline_mode = #tpu.pipeline_mode<synchronous>, transform_indices = @transform_6, window_bounds = array<i64: 8, 1>}, {transform_indices = @transform_7, window_bounds = array<i64: 1, 8, 384>}]} {
    %c0 = arith.constant 0 : index
    %c0_0 = arith.constant 0 : index
    %c0_1 = arith.constant 0 : index
    %0 = vector.load %arg1[%c0, %c0_0, %c0_1] : memref<1x16x512xbf16, #tpu.memory_space<vmem>>, vector<1x16x384xbf16>
    %1 = vector.shape_cast %0 : vector<1x16x384xbf16> to vector<16x384xbf16>
    %2 = arith.extf %1 : vector<16x384xbf16> to vector<16x384xf32>
    %c0_2 = arith.constant 0 : index
    %c0_3 = arith.constant 0 : index
    %3 = vector.load %arg9[%c0_2, %c0_3] : memref<144x384xf32, #tpu.memory_space<vmem>>, vector<16x384xf32>
    tpu.vector_store %arg9[%c0_2, %c0_3], %2 {strides = array<i32>} : memref<144x384xf32, #tpu.memory_space<vmem>>, vector<16x384xf32>,
    %c0_4 = arith.constant 0 : index
    %c0_5 = arith.constant 0 : index
    %c1 = arith.constant 1 : index
    %4 = vector.load %arg1[%c0_4, %c0_5, %c1] : memref<1x16x512xbf16, #tpu.memory_space<vmem>>, vector<1x16x384xbf16>
    %5 = vector.shape_cast %4 : vector<1x16x384xbf16> to vector<16x384xbf16>
    %6 = arith.extf %5 : vector<16x384xbf16> to vector<16x384xf32>
    %c16 = arith.constant 16 : index
    %c0_6 = arith.constant 0 : index
    %7 = vector.load %arg9[%c16, %c0_6] : memref<144x384xf32, #tpu.memory_space<vmem>>, vector<16x384xf32>
    tpu.vector_store %arg9[%c16, %c0_6], %6 {strides = array<i32>} : memref<144x384xf32, #tpu.memory_space<vmem>>, vector<16x384xf32>,
    %c0_7 = arith.constant 0 : index
    %c0_8 = arith.constant 0 : index
    %c2 = arith.constant 2 : index
    %8 = vector.load %arg1[%c0_7, %c0_8, %c2] : memref<1x16x512xbf16, #tpu.memory_space<vmem>>, vector<1x16x384xbf16>
    %9 = vector.shape_cast %8 : vector<1x16x384xbf16> to vector<16x384xbf16>
    %10 = arith.extf %9 : vector<16x384xbf16> to vector<16x384xf32>
    %c32 = arith.constant 32 : index
    %c0_9 = arith.constant 0 : index
    %11 = vector.load %arg9[%c32, %c0_9] : memref<144x384xf32, #tpu.memory_space<vmem>>, vector<16x384xf32>
    tpu.vector_store %arg9[%c32, %c0_9], %10 {strides = array<i32>} : memref<144x384xf32, #tpu.memory_space<vmem>>, vector<16x384xf32>,
    %c0_10 = arith.constant 0 : index
    %c0_11 = arith.constant 0 : index
    %c18 = arith.constant 18 : index
    %12 = vector.load %arg1[%c0_10, %c0_11, %c18] : memref<1x16x512xbf16, #tpu.memory_space<vmem>>, vector<1x16x384xbf16>
    %13 = vector.shape_cast %12 : vector<1x16x384xbf16> to vector<16x384xbf16>
    %14 = arith.extf %13 : vector<16x384xbf16> to vector<16x384xf32>
    %c48 = arith.constant 48 : index
    %c0_12 = arith.constant 0 : index
    %15 = vector.load %arg9[%c48, %c0_12] : memref<144x384xf32, #tpu.memory_space<vmem>>, vector<16x384xf32>
    tpu.vector_store %arg9[%c48, %c0_12], %14 {strides = array<i32>} : memref<144x384xf32, #tpu.memory_space<vmem>>, vector<16x384xf32>,
    %c0_13 = arith.constant 0 : index
    %c0_14 = arith.constant 0 : index
    %c19 = arith.constant 19 : index
    %16 = vector.load %arg1[%c0_13, %c0_14, %c19] : memref<1x16x512xbf16, #tpu.memory_space<vmem>>, vector<1x16x384xbf16>
    %17 = vector.shape_cast %16 : vector<1x16x384xbf16> to vector<16x384xbf16>
    %18 = arith.extf %17 : vector<16x384xbf16> to vector<16x384xf32>
    %c64 = arith.constant 64 : index
    %c0_15 = arith.constant 0 : index
    %19 = vector.load %arg9[%c64, %c0_15] : memref<144x384xf32, #tpu.memory_space<vmem>>, vector<16x384xf32>
    tpu.vector_store %arg9[%c64, %c0_15], %18 {strides = array<i32>} : memref<144x384xf32, #tpu.memory_space<vmem>>, vector<16x384xf32>,
    %c0_16 = arith.constant 0 : index
    %c0_17 = arith.constant 0 : index
    %c20 = arith.constant 20 : index
    %20 = vector.load %arg1[%c0_16, %c0_17, %c20] : memref<1x16x512xbf16, #tpu.memory_space<vmem>>, vector<1x16x384xbf16>
    %21 = vector.shape_cast %20 : vector<1x16x384xbf16> to vector<16x384xbf16>
    %22 = arith.extf %21 : vector<16x384xbf16> to vector<16x384xf32>
    %c80 = arith.constant 80 : index
    %c0_18 = arith.constant 0 : index
    %23 = vector.load %arg9[%c80, %c0_18] : memref<144x384xf32, #tpu.memory_space<vmem>>, vector<16x384xf32>
    tpu.vector_store %arg9[%c80, %c0_18], %22 {strides = array<i32>} : memref<144x384xf32, #tpu.memory_space<vmem>>, vector<16x384xf32>,
    %c0_19 = arith.constant 0 : index
    %c0_20 = arith.constant 0 : index
    %c36 = arith.constant 36 : index
    %24 = vector.load %arg1[%c0_19, %c0_20, %c36] : memref<1x16x512xbf16, #tpu.memory_space<vmem>>, vector<1x16x384xbf16>
    %25 = vector.shape_cast %24 : vector<1x16x384xbf16> to vector<16x384xbf16>
    %26 = arith.extf %25 : vector<16x384xbf16> to vector<16x384xf32>
    %c96 = arith.constant 96 : index
    %c0_21 = arith.constant 0 : index
    %27 = vector.load %arg9[%c96, %c0_21] : memref<144x384xf32, #tpu.memory_space<vmem>>, vector<16x384xf32>
    tpu.vector_store %arg9[%c96, %c0_21], %26 {strides = array<i32>} : memref<144x384xf32, #tpu.memory_space<vmem>>, vector<16x384xf32>,
    %c0_22 = arith.constant 0 : index
    %c0_23 = arith.constant 0 : index
    %c37 = arith.constant 37 : index
    %28 = vector.load %arg1[%c0_22, %c0_23, %c37] : memref<1x16x512xbf16, #tpu.memory_space<vmem>>, vector<1x16x384xbf16>
    %29 = vector.shape_cast %28 : vector<1x16x384xbf16> to vector<16x384xbf16>
    %30 = arith.extf %29 : vector<16x384xbf16> to vector<16x384xf32>
    %c112 = arith.constant 112 : index
    %c0_24 = arith.constant 0 : index
    %31 = vector.load %arg9[%c112, %c0_24] : memref<144x384xf32, #tpu.memory_space<vmem>>, vector<16x384xf32>
    tpu.vector_store %arg9[%c112, %c0_24], %30 {strides = array<i32>} : memref<144x384xf32, #tpu.memory_space<vmem>>, vector<16x384xf32>,
    %c0_25 = arith.constant 0 : index
    %c0_26 = arith.constant 0 : index
    %c38 = arith.constant 38 : index
    %32 = vector.load %arg1[%c0_25, %c0_26, %c38] : memref<1x16x512xbf16, #tpu.memory_space<vmem>>, vector<1x16x384xbf16>
    %33 = vector.shape_cast %32 : vector<1x16x384xbf16> to vector<16x384xbf16>
    %34 = arith.extf %33 : vector<16x384xbf16> to vector<16x384xf32>
    %c128 = arith.constant 128 : index
    %c0_27 = arith.constant 0 : index
    %35 = vector.load %arg9[%c128, %c0_27] : memref<144x384xf32, #tpu.memory_space<vmem>>, vector<16x384xf32>
    tpu.vector_store %arg9[%c128, %c0_27], %34 {strides = array<i32>} : memref<144x384xf32, #tpu.memory_space<vmem>>, vector<16x384xf32>,
    %c0_28 = arith.constant 0 : index
    %c0_29 = arith.constant 0 : index
    %36 = vector.load %arg2[%c0_28, %c0_29] : memref<8x144xbf16, #tpu.memory_space<vmem>>, vector<8x144xbf16>
    %c0_30 = arith.constant 0 : index
    %c0_31 = arith.constant 0 : index
    %37 = vector.load %arg9[%c0_30, %c0_31] : memref<144x384xf32, #tpu.memory_space<vmem>>, vector<144x384xf32>
    %38 = arith.truncf %37 : vector<144x384xf32> to vector<144x384xbf16>
    %cst = arith.constant dense<0.000000e+00> : vector<8x384xf32>
    %39 = tpu.matmul %36, %38, %cst {dimension_numbers = #tpu.dot_dimension_numbers<[1], [0], [0], [1], [0, 0, 1, 1], [], []>} : vector<8x144xbf16>, vector<144x384xbf16>, vector<8x384xf32> -> vector<8x384xf32>
    %c0_32 = arith.constant 0 : index
    %c0_33 = arith.constant 0 : index
    %40 = vector.load %arg3[%c0_32, %c0_33] : memref<8x1xf32, #tpu.memory_space<vmem>>, vector<8x1xf32>
    %41 = vector.broadcast %40 : vector<8x1xf32> to vector<8x384xf32>
    %42 = arith.addf %39, %41 : vector<8x384xf32>
    %43 = tpu.iota {dimensions = array<i32: 1>} : vector<1x384xi32>
    %c18_i32 = arith.constant 18 : i32
    %c0_i32 = arith.constant 0 : i32
    %44 = arith.cmpi eq, %c18_i32, %c0_i32 : i32
    %c1_i32 = arith.constant 1 : i32
    %45 = arith.select %44, %c1_i32, %c18_i32 : i32
    %46 = vector.broadcast %45 : i32 to vector<1x384xi32>
    %47 = arith.remsi %43, %46 : vector<1x384xi32>
    %c0_i32_34 = arith.constant 0 : i32
    %48 = vector.broadcast %c0_i32_34 : i32 to vector<1x384xi32>
    %49 = arith.cmpi ne, %47, %48 : vector<1x384xi32>
    %c0_i32_35 = arith.constant 0 : i32
    %50 = vector.broadcast %c0_i32_35 : i32 to vector<1x384xi32>
    %51 = arith.cmpi slt, %47, %50 : vector<1x384xi32>
    %c0_i32_36 = arith.constant 0 : i32
    %52 = arith.cmpi slt, %45, %c0_i32_36 : i32
    %53 = vector.broadcast %52 : i1 to vector<1x384xi1>
    %54 = vector.broadcast %53 : vector<1x384xi1> to vector<1x384xi1>
    %55 = arith.xori %51, %54 : vector<1x384xi1>
    %56 = arith.andi %55, %49 : vector<1x384xi1>
    %57 = vector.broadcast %45 : i32 to vector<1x384xi32>
    %58 = arith.addi %47, %57 : vector<1x384xi32>
    %59 = arith.select %56, %58, %47 : vector<1x384xi1>, vector<1x384xi32>
    %c16_i32 = arith.constant 16 : i32
    %60 = vector.broadcast %c16_i32 : i32 to vector<1x384xi32>
    %61 = arith.cmpi slt, %59, %60 : vector<1x384xi32>
    %c288_i32 = arith.constant 288 : i32
    %62 = vector.broadcast %c288_i32 : i32 to vector<1x384xi32>
    %63 = arith.cmpi slt, %43, %62 : vector<1x384xi32>
    %64 = arith.andi %61, %63 : vector<1x384xi1>
    %65 = arith.extui %64 : vector<1x384xi1> to vector<1x384xi32>
    %66 = arith.sitofp %65 : vector<1x384xi32> to vector<1x384xf32>
    %c0_37 = arith.constant 0 : index
    %c0_38 = arith.constant 0 : index
    %67 = vector.load %arg4[%c0_37, %c0_38] : memref<8x1xf32, #tpu.memory_space<vmem>>, vector<8x1xf32>
    %c0_39 = arith.constant 0 : index
    %c0_40 = arith.constant 0 : index
    %68 = vector.load %arg5[%c0_39, %c0_40] : memref<8x1xf32, #tpu.memory_space<vmem>>, vector<8x1xf32>
    %69 = tpu.iota {dimensions = array<i32: 0>} : vector<8x1xi32>
    %c8_i32 = arith.constant 8 : i32
    %c0_i32_41 = arith.constant 0 : i32
    %70 = arith.cmpi eq, %c8_i32, %c0_i32_41 : i32
    %c1_i32_42 = arith.constant 1 : i32
    %71 = arith.select %70, %c1_i32_42, %c8_i32 : i32
    %72 = vector.broadcast %71 : i32 to vector<8x1xi32>
    %73 = arith.remsi %69, %72 : vector<8x1xi32>
    %c0_i32_43 = arith.constant 0 : i32
    %74 = vector.broadcast %c0_i32_43 : i32 to vector<8x1xi32>
    %75 = arith.cmpi ne, %73, %74 : vector<8x1xi32>
    %c0_i32_44 = arith.constant 0 : i32
    %76 = vector.broadcast %c0_i32_44 : i32 to vector<8x1xi32>
    %77 = arith.cmpi slt, %73, %76 : vector<8x1xi32>
    %c0_i32_45 = arith.constant 0 : i32
    %78 = arith.cmpi slt, %71, %c0_i32_45 : i32
    %79 = vector.broadcast %78 : i1 to vector<8x1xi1>
    %80 = vector.broadcast %79 : vector<8x1xi1> to vector<8x1xi1>
    %81 = arith.xori %77, %80 : vector<8x1xi1>
    %82 = arith.andi %81, %75 : vector<8x1xi1>
    %83 = vector.broadcast %71 : i32 to vector<8x1xi32>
    %84 = arith.addi %73, %83 : vector<8x1xi32>
    %85 = arith.select %82, %84, %73 : vector<8x1xi1>, vector<8x1xi32>
    %c4_i32 = arith.constant 4 : i32
    %86 = vector.broadcast %c4_i32 : i32 to vector<8x1xi32>
    %87 = arith.cmpi sge, %85, %86 : vector<8x1xi32>
    %88 = vector.broadcast %66 : vector<1x384xf32> to vector<8x384xf32>
    %89 = arith.mulf %42, %88 : vector<8x384xf32>
    %cst_46 = arith.constant dense<0.000000e+00> : vector<8xf32>
    %90 = vector.multi_reduction <add>, %89, %cst_46 [1] : vector<8x384xf32> to vector<8xf32>
    %91 = vector.shape_cast %90 : vector<8xf32> to vector<8x1xf32>
    %cst_47 = arith.constant 0.000000e+00 : f32
    %92 = vector.broadcast %cst_47 : f32 to vector<8x1xf32>
    %93 = arith.select %87, %92, %91 : vector<8x1xi1>, vector<8x1xf32>
    %94 = vector.shape_cast %93 : vector<8x1xf32> to vector<1x8x1xf32>
    %cst_48 = arith.constant dense<0.000000e+00> : vector<1xf32>
    %95 = vector.multi_reduction <add>, %94, %cst_48 [1, 2] : vector<1x8x1xf32> to vector<1xf32>
    %96 = vector.shape_cast %95 : vector<1xf32> to vector<1x1x1xf32>
    %97 = vector.extract %96[0, 0, 0] : f32 from vector<1x1x1xf32>
    %cst_49 = arith.constant 0.000000e+00 : f32
    %98 = vector.broadcast %cst_49 : f32 to vector<8x1xf32>
    %99 = arith.select %87, %91, %98 : vector<8x1xi1>, vector<8x1xf32>
    %100 = vector.shape_cast %99 : vector<8x1xf32> to vector<1x8x1xf32>
    %cst_50 = arith.constant dense<0.000000e+00> : vector<1xf32>
    %101 = vector.multi_reduction <add>, %100, %cst_50 [1, 2] : vector<1x8x1xf32> to vector<1xf32>
    %102 = vector.shape_cast %101 : vector<1xf32> to vector<1x1x1xf32>
    %103 = vector.extract %102[0, 0, 0] : f32 from vector<1x1x1xf32>
    %104 = vector.broadcast %103 : f32 to vector<8x1xf32>
    %105 = vector.broadcast %97 : f32 to vector<8x1xf32>
    %106 = arith.select %87, %104, %105 : vector<8x1xi1>, vector<8x1xf32>
    %cst_51 = arith.constant 9.765625E-4 : f32
    %107 = vector.broadcast %cst_51 : f32 to vector<8x1xf32>
    %108 = arith.mulf %106, %107 : vector<8x1xf32>
    %109 = vector.broadcast %108 : vector<8x1xf32> to vector<8x384xf32>
    %110 = arith.subf %42, %109 : vector<8x384xf32>
    %111 = vector.broadcast %66 : vector<1x384xf32> to vector<8x384xf32>
    %112 = arith.mulf %110, %111 : vector<8x384xf32>
    %113 = arith.mulf %112, %112 : vector<8x384xf32>
    %cst_52 = arith.constant dense<0.000000e+00> : vector<8xf32>
    %114 = vector.multi_reduction <add>, %113, %cst_52 [1] : vector<8x384xf32> to vector<8xf32>
    %115 = vector.shape_cast %114 : vector<8xf32> to vector<8x1xf32>
    %cst_53 = arith.constant 0.000000e+00 : f32
    %116 = vector.broadcast %cst_53 : f32 to vector<8x1xf32>
    %117 = arith.select %87, %116, %115 : vector<8x1xi1>, vector<8x1xf32>
    %118 = vector.shape_cast %117 : vector<8x1xf32> to vector<1x8x1xf32>
    %cst_54 = arith.constant dense<0.000000e+00> : vector<1xf32>
    %119 = vector.multi_reduction <add>, %118, %cst_54 [1, 2] : vector<1x8x1xf32> to vector<1xf32>
    %120 = vector.shape_cast %119 : vector<1xf32> to vector<1x1x1xf32>
    %121 = vector.extract %120[0, 0, 0] : f32 from vector<1x1x1xf32>
    %cst_55 = arith.constant 0.000000e+00 : f32
    %122 = vector.broadcast %cst_55 : f32 to vector<8x1xf32>
    %123 = arith.select %87, %115, %122 : vector<8x1xi1>, vector<8x1xf32>
    %124 = vector.shape_cast %123 : vector<8x1xf32> to vector<1x8x1xf32>
    %cst_56 = arith.constant dense<0.000000e+00> : vector<1xf32>
    %125 = vector.multi_reduction <add>, %124, %cst_56 [1, 2] : vector<1x8x1xf32> to vector<1xf32>
    %126 = vector.shape_cast %125 : vector<1xf32> to vector<1x1x1xf32>
    %127 = vector.extract %126[0, 0, 0] : f32 from vector<1x1x1xf32>
    %128 = vector.broadcast %127 : f32 to vector<8x1xf32>
    %129 = vector.broadcast %121 : f32 to vector<8x1xf32>
    %130 = arith.select %87, %128, %129 : vector<8x1xi1>, vector<8x1xf32>
    %cst_57 = arith.constant 9.765625E-4 : f32
    %131 = vector.broadcast %cst_57 : f32 to vector<8x1xf32>
    %132 = arith.mulf %130, %131 : vector<8x1xf32>
    %cst_58 = arith.constant 9.99999974E-6 : f32
    %133 = vector.broadcast %cst_58 : f32 to vector<8x1xf32>
    %134 = arith.addf %132, %133 : vector<8x1xf32>
    %135 = math.rsqrt %134 : vector<8x1xf32>
    %136 = arith.mulf %135, %67 : vector<8x1xf32>
    %137 = vector.broadcast %136 : vector<8x1xf32> to vector<8x384xf32>
    %138 = arith.mulf %110, %137 : vector<8x384xf32>
    %139 = vector.broadcast %68 : vector<8x1xf32> to vector<8x384xf32>
    %140 = arith.addf %138, %139 : vector<8x384xf32>
    %cst_59 = arith.constant 0.000000e+00 : f32
    %141 = vector.broadcast %cst_59 : f32 to vector<8x384xf32>
    %142 = arith.cmpf ogt, %140, %141 : vector<8x384xf32>
    %cst_60 = arith.constant 2.000000e-01 : f32
    %143 = vector.broadcast %cst_60 : f32 to vector<8x384xf32>
    %144 = arith.mulf %143, %140 : vector<8x384xf32>
    %145 = arith.select %142, %140, %144 : vector<8x384xi1>, vector<8x384xf32>
    %c0_61 = arith.constant 0 : index
    %c0_62 = arith.constant 0 : index
    %146 = vector.load %arg6[%c0_61, %c0_62] : memref<8x8xf32, #tpu.memory_space<vmem>>, vector<8x8xf32>
    %cst_63 = arith.constant dense<0.000000e+00> : vector<8x384xf32>
    %147 = tpu.matmul %146, %145, %cst_63 {dimension_numbers = #tpu.dot_dimension_numbers<[1], [0], [0], [1], [0, 0, 1, 1], [], []>} : vector<8x8xf32>, vector<8x384xf32>, vector<8x384xf32> -> vector<8x384xf32>
    %c0_64 = arith.constant 0 : index
    %c0_65 = arith.constant 0 : index
    %148 = vector.load %arg7[%c0_64, %c0_65] : memref<8x1xf32, #tpu.memory_space<vmem>>, vector<8x1xf32>
    %149 = vector.broadcast %148 : vector<8x1xf32> to vector<8x384xf32>
    %150 = arith.addf %147, %149 : vector<8x384xf32>
    %c0_66 = arith.constant 0 : index
    %c0_67 = arith.constant 0 : index
    %c0_68 = arith.constant 0 : index
    %151 = vector.load %arg8[%c0_66, %c0_67, %c0_68] : memref<1x8x384xf32, #tpu.memory_space<vmem>>, vector<1x8x384xf32>
    %152 = vector.shape_cast %151 : vector<1x8x384xf32> to vector<8x384xf32>
    %153 = vector.shape_cast %150 : vector<8x384xf32> to vector<1x8x384xf32>
    tpu.vector_store %arg8[%c0_66, %c0_67, %c0_68], %153 {strides = array<i32>} : memref<1x8x384xf32, #tpu.memory_space<vmem>>, vector<1x8x384xf32>,
    return
  }
  func.func @transform_0(%arg0: i32) -> (i32, i32, i32) {
    %c0_i32 = arith.constant 0 : i32
    %c0_i32_0 = arith.constant 0 : i32
    %c0_i32_1 = arith.constant 0 : i32
    return %arg0, %c0_i32, %c0_i32_0 : i32, i32, i32
  }
  func.func @transform_1(%arg0: i32) -> (i32, i32) {
    %c0_i32 = arith.constant 0 : i32
    %c0_i32_0 = arith.constant 0 : i32
    %c0_i32_1 = arith.constant 0 : i32
    return %c0_i32, %c0_i32_0 : i32, i32
  }
  func.func @transform_2(%arg0: i32) -> (i32, i32) {
    %c0_i32 = arith.constant 0 : i32
    %c0_i32_0 = arith.constant 0 : i32
    %c0_i32_1 = arith.constant 0 : i32
    return %c0_i32, %c0_i32_0 : i32, i32
  }
  func.func @transform_3(%arg0: i32) -> (i32, i32) {
    %c0_i32 = arith.constant 0 : i32
    %c0_i32_0 = arith.constant 0 : i32
    %c0_i32_1 = arith.constant 0 : i32
    return %c0_i32, %c0_i32_0 : i32, i32
  }
  func.func @transform_4(%arg0: i32) -> (i32, i32) {
    %c0_i32 = arith.constant 0 : i32
    %c0_i32_0 = arith.constant 0 : i32
    %c0_i32_1 = arith.constant 0 : i32
    return %c0_i32, %c0_i32_0 : i32, i32
  }
  func.func @transform_5(%arg0: i32) -> (i32, i32) {
    %c0_i32 = arith.constant 0 : i32
    %c0_i32_0 = arith.constant 0 : i32
    %c0_i32_1 = arith.constant 0 : i32
    return %c0_i32, %c0_i32_0 : i32, i32
  }
  func.func @transform_6(%arg0: i32) -> (i32, i32) {
    %c0_i32 = arith.constant 0 : i32
    %c0_i32_0 = arith.constant 0 : i32
    %c0_i32_1 = arith.constant 0 : i32
    return %c0_i32, %c0_i32_0 : i32, i32
  }
  func.func @transform_7(%arg0: i32) -> (i32, i32, i32) {
    %c0_i32 = arith.constant 0 : i32
    %c0_i32_0 = arith.constant 0 : i32
    %c0_i32_1 = arith.constant 0 : i32
    return %arg0, %c0_i32, %c0_i32_0 : i32, i32, i32
  }
}

</mosaic_0001>

<llo_original>
// kernel: tile.46
$region0: #{tile.46}
  #allocation0 [shape = 's32[1]{0}', space=sflag, size = 0x4, scoped, tag = 'scoped memory for tile.46']
  %s0 = inlined_call_operand.vmem [shape: f32[8], index: 0, kind: input, shape index: {}]
  %s1 = inlined_call_operand.vmem [shape: f32[4,8], index: 1, kind: output, shape index: {}]
  // Predicated region
  $region2: #{tile.46} parent=0 // pred_check
    _
  $region3: #{tile.46} parent=0 // pred_check_branch
    %3 = sbr.rel (0) target = $region5
  $region4: #{tile.46} parent=0 // pred_region
    _
  $region5: #{tile.46} parent=0 // pred_fallthru
    _
  %v4 = vld [vmem:[%s0] ss:$0 sm:$0xff]
  %5 = vst [vmem:[%s1] sm:$0xf] %v4

// kernel: tile.5
$region0: #{tile.5}
  %s0 = inlined_call_operand.vmem [shape: f32[4,8], index: 0, kind: input, shape index: {}]
  %s1 = inlined_call_operand.vmem [shape: f32[32,1], index: 1, kind: output, shape index: {}]
  $region1: #{tile.5} parent=0
    #allocation0 [shape = 'u8[4096]{0}', space=vmem, size = 0x1000, scoped, tag = 'scoped mem for input reshape']
    %s3 = sshll.u32 1, 4
    %s4 = ssub.s32 %s3, 1
    %v5 = vld [vmem:[%s0] sm:%s4]
    %6 = vst [vmem:[#allocation0] sm:%s4] %v5
    %v7 = vld [vmem:[#allocation0] sm:$0xf]
    %vm8 = vcmask 7168
    %9 = vst.msk [vmem:[%s1] ss:$8 sm:$0xf] %vm8, %v7
    %v10 = vld [vmem:[#allocation0] sm:$0xf]
    %11 = vrot.lane.b32.xlu0 %v10, 127
    %v12 = vpop.permute.xlu0 %11
    %vm13 = vcmask 7168
    %s14 = scalar_lea.vmem %s1, 1
    %15 = vst.msk [vmem:[%s14] ss:$8 sm:$0xf] %vm13, %v12
    %v16 = vld [vmem:[#allocation0] sm:$0xf]
    %17 = vrot.lane.b32.xlu0 %v16, 126
    %v18 = vpop.permute.xlu0 %17
    %vm19 = vcmask 7168
    %s20 = scalar_lea.vmem %s1, 2
    %21 = vst.msk [vmem:[%s20] ss:$8 sm:$0xf] %vm19, %v18
    %v22 = vld [vmem:[#allocation0] sm:$0xf]
    %23 = vrot.lane.b32.xlu0 %v22, 125
    %v24 = vpop.permute.xlu0 %23
    %vm25 = vcmask 7168
    %s26 = scalar_lea.vmem %s1, 3
    %27 = vst.msk [vmem:[%s26] ss:$8 sm:$0xf] %vm25, %v24
    %v28 = vld [vmem:[#allocation0] sm:$0xf]
    %29 = vrot.lane.b32.xlu0 %v28, 124
    %v30 = vpop.permute.xlu0 %29
    %vm31 = vcmask 7168
    %s32 = scalar_lea.vmem %s1, 4
    %33 = vst.msk [vmem:[%s32] ss:$8 sm:$0xf] %vm31, %v30
    %v34 = vld [vmem:[#allocation0] sm:$0xf]
    %35 = vrot.lane.b32.xlu0 %v34, 123
    %v36 = vpop.permute.xlu0 %35
    %vm37 = vcmask 7168
    %s38 = scalar_lea.vmem %s1, 5
    %39 = vst.msk [vmem:[%s38] ss:$8 sm:$0xf] %vm37, %v36
    %v40 = vld [vmem:[#allocation0] sm:$0xf]
    %41 = vrot.lane.b32.xlu0 %v40, 122
    %v42 = vpop.permute.xlu0 %41
    %vm43 = vcmask 7168
    %s44 = scalar_lea.vmem %s1, 6
    %45 = vst.msk [vmem:[%s44] ss:$8 sm:$0xf] %vm43, %v42
    %v46 = vld [vmem:[#allocation0] sm:$0xf]
    %47 = vrot.lane.b32.xlu0 %v46, 121
    %v48 = vpop.permute.xlu0 %47
    %vm49 = vcmask 7168
    %s50 = scalar_lea.vmem %s1, 7
    %51 = vst.msk [vmem:[%s50] ss:$8 sm:$0xf] %vm49, %v48

// kernel: _lambda_.4
$region0: #{_lambda_.4}
  #allocation0 [shape = 'u32[]', space=smem, size = 0x4, offset = 0x4, fixed_abs, tag = 'smem constant byte address 0x4 - core index']
  #allocation1 [shape = 'u32[144,128]{1,0:T(1,128)}', space=vmem, size = 0x12000, scoped, tag = 'internal scratch']
  #allocation2 [shape = 'f32[32,128]{1,0:T(8,128)}', space=vmem, size = 0x4000, scoped, tag = 'scratch operand']
  %s0 = inlined_call_operand.vmem [shape: bf16[2,8,256], index: 0, kind: input, shape index: {}]
  %s1 = inlined_call_operand.vmem [shape: bf16[32,32], index: 1, kind: input, shape index: {}]
  %s2 = inlined_call_operand.vmem [shape: f32[32,1], index: 2, kind: input, shape index: {}]
  %s3 = inlined_call_operand.vmem [shape: f32[32,1], index: 3, kind: input, shape index: {}]
  %s4 = inlined_call_operand.vmem [shape: f32[32,1], index: 4, kind: input, shape index: {}]
  %s5 = inlined_call_operand.vmem [shape: bf16[2,32,128], index: 5, kind: output, shape index: {}]
  %s6 = sld [smem:[#allocation0]]
  $region53: #{_lambda_.4} parent=0
    _
  %s8 = ssub.s32 1, %s6
  %s9 = scalar_select 0, %s8, %s6
  loop: start=0, step=1, limit=4
  $region2: #{_lambda_.4} parent=0 // loop_pre_header
    _
  $region3: #{_lambda_.4} parent=0 // loop_header
    %s11 = sphi 0, %s15
    %p12 = scmp.ge.s32.totalorder %s11, 4
    %s21 = sphi 0, %s23
    %s24 = sphi 0, %s21
    %s25 = sphi 0, %s24
    %s41 = sphi 0, %s25
    %s45 = sphi 0, %s45
    %s47 = sphi 0, %s45
    %s48 = sphi 0, %s47
    %s62 = sphi 0, %s48
    %s66 = sphi 0, %s66
    %s68 = sphi 0, %s66
    %s69 = sphi 0, %s68
    %s83 = sphi 0, %s69
    %s87 = sphi 0, %s87
    %s89 = sphi 0, %s87
    %s90 = sphi 0, %s89
    %s104 = sphi 0, %s90
    %s108 = sphi 0, %s108
    %s110 = sphi 0, %s108
    %s111 = sphi 0, %s110
    %s125 = sphi 0, %s111
    %s131 = sphi 0, %s133
    %s134 = sphi 0, %s131
    %s135 = sphi 0, %s134
    %s151 = sphi 0, %s135
  $region4: #{_lambda_.4} parent=0 // loop_header_branch
    %14 = sbr.rel (%p12) target = $region8
  $region5: #{_lambda_.4} parent=0 // loop_body
    %s16 = ssub.s32 %s11, 1
    %s17 = ssub.s32 %s11, 2
    %s18 = sadd.s32 %s11, 1
    %s19 = ssub.s32 %s11, %s18
    %p20 = scmp.eq.s32.totalorder %s19, 0
    %s22 = sadd.s32 %s21, 1
    %s23 = scalar_select %p20, %s21, %s22
    %p26 = pneg %p20
    %p27 = scmp.eq.s32.totalorder %s11, 1
    %p28 = por %p26, %p27
    %p29 = scmp.ne.s32.totalorder %s21, %s24
    %p30 = scmp.eq.s32.totalorder %s11, 0
    %p31 = por %p29, %p30
    %p32 = scmp.ne.s32.totalorder %s21, %s24
    %p33 = scmp.eq.s32.totalorder %s16, 1
    %p34 = por %p32, %p33
    %p35 = scmp.ne.s32.totalorder %s24, %s25
    %p36 = scmp.eq.s32.totalorder %s16, 0
    %p37 = por %p35, %p36
    %p38 = scmp.ne.s32.totalorder %s24, %s25
    %p39 = scmp.eq.s32.totalorder %s17, 1
    %p40 = por %p38, %p39
    %p42 = scmp.ne.s32.totalorder %s25, %s41
    %p43 = scmp.eq.s32.totalorder %s17, 0
    %p44 = por %p42, %p43
    %s46 = sadd.s32 %s45, 1
    %p49 = scmp.eq.s32.totalorder %s11, 1
    %p50 = scmp.ne.s32.totalorder %s45, %s47
    %p51 = scmp.eq.s32.totalorder %s11, 0
    %p52 = por %p50, %p51
    %p53 = scmp.ne.s32.totalorder %s45, %s47
    %p54 = scmp.eq.s32.totalorder %s16, 1
    %p55 = por %p53, %p54
    %p56 = scmp.ne.s32.totalorder %s47, %s48
    %p57 = scmp.eq.s32.totalorder %s16, 0
    %p58 = por %p56, %p57
    %p59 = scmp.ne.s32.totalorder %s47, %s48
    %p60 = scmp.eq.s32.totalorder %s17, 1
    %p61 = por %p59, %p60
    %p63 = scmp.ne.s32.totalorder %s48, %s62
    %p64 = scmp.eq.s32.totalorder %s17, 0
    %p65 = por %p63, %p64
    %s67 = sadd.s32 %s66, 1
    %p70 = scmp.eq.s32.totalorder %s11, 1
    %p71 = scmp.ne.s32.totalorder %s66, %s68
    %p72 = scmp.eq.s32.totalorder %s11, 0
    %p73 = por %p71, %p72
    %p74 = scmp.ne.s32.totalorder %s66, %s68
    %p75 = scmp.eq.s32.totalorder %s16, 1
    %p76 = por %p74, %p75
    %p77 = scmp.ne.s32.totalorder %s68, %s69
    %p78 = scmp.eq.s32.totalorder %s16, 0
    %p79 = por %p77, %p78
    %p80 = scmp.ne.s32.totalorder %s68, %s69
    %p81 = scmp.eq.s32.totalorder %s17, 1
    %p82 = por %p80, %p81
    %p84 = scmp.ne.s32.totalorder %s69, %s83
    %p85 = scmp.eq.s32.totalorder %s17, 0
    %p86 = por %p84, %p85
    %s88 = sadd.s32 %s87, 1
    %p91 = scmp.eq.s32.totalorder %s11, 1
    %p92 = scmp.ne.s32.totalorder %s87, %s89
    %p93 = scmp.eq.s32.totalorder %s11, 0
    %p94 = por %p92, %p93
    %p95 = scmp.ne.s32.totalorder %s87, %s89
    %p96 = scmp.eq.s32.totalorder %s16, 1
    %p97 = por %p95, %p96
    %p98 = scmp.ne.s32.totalorder %s89, %s90
    %p99 = scmp.eq.s32.totalorder %s16, 0
    %p100 = por %p98, %p99
    %p101 = scmp.ne.s32.totalorder %s89, %s90
    %p102 = scmp.eq.s32.totalorder %s17, 1
    %p103 = por %p101, %p102
    %p105 = scmp.ne.s32.totalorder %s90, %s104
    %p106 = scmp.eq.s32.totalorder %s17, 0
    %p107 = por %p105, %p106
    %s109 = sadd.s32 %s108, 1
    %p112 = scmp.eq.s32.totalorder %s11, 1
    %p113 = scmp.ne.s32.totalorder %s108, %s110
    %p114 = scmp.eq.s32.totalorder %s11, 0
    %p115 = por %p113, %p114
    %p116 = scmp.ne.s32.totalorder %s108, %s110
    %p117 = scmp.eq.s32.totalorder %s16, 1
    %p118 = por %p116, %p117
    %p119 = scmp.ne.s32.totalorder %s110, %s111
    %p120 = scmp.eq.s32.totalorder %s16, 0
    %p121 = por %p119, %p120
    %p122 = scmp.ne.s32.totalorder %s110, %s111
    %p123 = scmp.eq.s32.totalorder %s17, 1
    %p124 = por %p122, %p123
    %p126 = scmp.ne.s32.totalorder %s111, %s125
    %p127 = scmp.eq.s32.totalorder %s17, 0
    %p128 = por %p126, %p127
    %s129 = ssub.s32 %s11, %s18
    %p130 = scmp.eq.s32.totalorder %s129, 0
    %s132 = sadd.s32 %s131, 1
    %s133 = scalar_select %p130, %s131, %s132
    %p136 = pneg %p130
    %p137 = scmp.eq.s32.totalorder %s11, 1
    %p138 = por %p136, %p137
    %p139 = scmp.ne.s32.totalorder %s131, %s134
    %p140 = scmp.eq.s32.totalorder %s11, 0
    %p141 = por %p139, %p140
    %p142 = scmp.ne.s32.totalorder %s131, %s134
    %p143 = scmp.eq.s32.totalorder %s16, 1
    %p144 = por %p142, %p143
    %p145 = scmp.ne.s32.totalorder %s134, %s135
    %p146 = scmp.eq.s32.totalorder %s16, 0
    %p147 = por %p145, %p146
    %p148 = scmp.ne.s32.totalorder %s134, %s135
    %p149 = scmp.eq.s32.totalorder %s17, 1
    %p150 = por %p148, %p149
    %p152 = scmp.ne.s32.totalorder %s135, %s151
    %p153 = scmp.eq.s32.totalorder %s17, 0
    %p154 = por %p152, %p153
    %p155 = scmp.le.s32.totalorder 1, %s11
    %p156 = scmp.lt.s32.totalorder %s11, 3
    %p157 = pnand %p155, %p156
    %p158 = pneg %p157
    // Predicated region
    $region9: #{_lambda_.4} parent=5 // pred_check
      _
    $region10: #{_lambda_.4} parent=5 // pred_check_branch
      %160 = sbr.rel (%p157) target = $region12
    $region11: #{_lambda_.4} parent=5 // pred_region
      %s161 = ssub.s32 %s11, 1
      // Predicated region
      $region13: #{_lambda_.4} parent=11 // pred_check
        %p162 = pneg %p58
      $region14: #{_lambda_.4} parent=11 // pred_check_branch
        %164 = sbr.rel (%p162) target = $region16
      $region15: #{_lambda_.4} parent=11 // pred_region
        _
      $region16: #{_lambda_.4} parent=11 // pred_fallthru
        _
      // Predicated region
      $region17: #{_lambda_.4} parent=11 // pred_check
        %p165 = pneg %p79
      $region18: #{_lambda_.4} parent=11 // pred_check_branch
        %167 = sbr.rel (%p165) target = $region20
      $region19: #{_lambda_.4} parent=11 // pred_region
        _
      $region20: #{_lambda_.4} parent=11 // pred_fallthru
        _
      // Predicated region
      $region21: #{_lambda_.4} parent=11 // pred_check
        %p168 = pneg %p100
      $region22: #{_lambda_.4} parent=11 // pred_check_branch
        %170 = sbr.rel (%p168) target = $region24
      $region23: #{_lambda_.4} parent=11 // pred_region
        _
      $region24: #{_lambda_.4} parent=11 // pred_fallthru
        _
      // Predicated region
      $region25: #{_lambda_.4} parent=11 // pred_check
        %p171 = pneg %p121
      $region26: #{_lambda_.4} parent=11 // pred_check_branch
        %173 = sbr.rel (%p171) target = $region28
      $region27: #{_lambda_.4} parent=11 // pred_region
        _
      $region28: #{_lambda_.4} parent=11 // pred_fallthru
        _
    $region12: #{_lambda_.4} parent=5 // pred_fallthru
      _
    %p174 = scmp.lt.s32.totalorder %s11, 2
    // Predicated region
    $region29: #{_lambda_.4} parent=5 // pred_check
      %p175 = pneg %p174
    $region30: #{_lambda_.4} parent=5 // pred_check_branch
      %177 = sbr.rel (%p175) target = $region32
    $region31: #{_lambda_.4} parent=5 // pred_region
      // Predicated region
      $region33: #{_lambda_.4} parent=31 // pred_check
        %p178 = pneg %p31
      $region34: #{_lambda_.4} parent=31 // pred_check_branch
        %180 = sbr.rel (%p178) target = $region36
      $region35: #{_lambda_.4} parent=31 // pred_region
        %p181 = scmp.lt.s32.totalorder %s11, 1
        %s182 = scalar_select %p181, %s11, 1
        %s183 = smul.addr %s182, 2
        %s184 = smul.addr %s183, 4
        %s185 = scalar_lea.vmem %s0, %s184
      $region36: #{_lambda_.4} parent=31 // pred_fallthru
        _
    $region32: #{_lambda_.4} parent=5 // pred_fallthru
      _
    %p186 = scmp.le.s32.totalorder 1, %s11
    %p187 = scmp.lt.s32.totalorder %s11, 3
    %p188 = pnand %p186, %p187
    %p189 = pneg %p188
    // Predicated region
    $region37: #{_lambda_.4} parent=5 // pred_check
      _
    $region38: #{_lambda_.4} parent=5 // pred_check_branch
      %191 = sbr.rel (%p188) target = $region40
    $region39: #{_lambda_.4} parent=5 // pred_region
      %s192 = ssub.s32 %s11, 1
      %p193 = scmp.lt.s32.totalorder %s16, 1
      %s194 = scalar_select %p193, %s16, 1
      %s195 = smul.addr %s194, 2
      %s196 = smul.addr %s195, 4
      %s197 = scalar_lea.vmem %s0, %s196
      %p198 = pneg %p37
      %p199 = pneg %p34
      %p200 = pneg %p58
      %p201 = pneg %p55
      %p202 = pneg %p79
      %p203 = pneg %p76
      %p204 = pneg %p100
      %p205 = pneg %p97
      %p206 = pneg %p121
      %p207 = pneg %p118
      %p208 = pneg %p147
      %p209 = pneg %p144
      %p210 = scmp.lt.s32.totalorder %s16, 1
      %s211 = scalar_select %p210, %s16, 1
      %s212 = smul.addr %s211, 4
      %s213 = smul.addr %s212, 4
      %s214 = scalar_lea.vmem %s5, %s213
      %p215 = scmp.lt.s32.totalorder %s16, 1
      %s216 = scalar_select %p215, %s16, 1
      %s217 = smul.addr %s216, 2
      %s218 = smul.addr %s217, 4
      %s219 = scalar_lea.vmem %s0, %s218
      %p220 = scmp.lt.s32.totalorder %s16, 1
      %s221 = scalar_select %p220, %s16, 1
      %s222 = smul.addr %s221, 4
      %s223 = smul.addr %s222, 4
      %s224 = scalar_lea.vmem %s5, %s223
      %v226 = vld [vmem:[%s219] sm:$0xf]
      %v227 = vunpack.c.l.bf16 %v226
      %228 = vst [vmem:[#allocation2] sm:$0xff] %v227
      %v229 = vld [vmem:[%s219] sm:$0xff]
      %v230 = vunpack.c.l.bf16 %v229
      %v231 = vunpack.c.h.bf16 %v229
      %234 = vrot.lane.b32.xlu0 %v230, 127
      %v235 = vpop.permute.xlu0 %234
      %236 = vrot.lane.b32.xlu0 %v231, 127
      %v237 = vpop.permute.xlu0 %236
      %vm238 = vcmask 1039360
      %v239 = vsel %vm238, %v235, %v237
      %241 = vst [vmem:[#allocation2 + $0x8] sm:$0xff] %v239
      %v242 = vld [vmem:[%s219] sm:$0xff]
      %v243 = vunpack.c.l.bf16 %v242
      %v244 = vunpack.c.h.bf16 %v242
      %247 = vrot.lane.b32.xlu0 %v243, 123
      %v248 = vpop.permute.xlu0 %247
      %249 = vrot.lane.b32.xlu0 %v244, 123
      %v250 = vpop.permute.xlu0 %249
      %vm251 = vcmask 1006592
      %v252 = vsel %vm251, %v248, %v250
      %254 = vst [vmem:[#allocation2 + $0x10] sm:$0xff] %v252
      %v255 = vld [vmem:[%s219] sm:$0xff]
      %v256 = vunpack.c.l.bf16 %v255
      %v257 = vunpack.c.h.bf16 %v255
      %260 = vrot.lane.b32.xlu0 %v256, 122
      %v261 = vpop.permute.xlu0 %260
      %262 = vrot.lane.b32.xlu0 %v257, 122
      %v263 = vpop.permute.xlu0 %262
      %vm264 = vcmask 998400
      %v265 = vsel %vm264, %v261, %v263
      %267 = vst [vmem:[#allocation2 + $0x18] sm:$0xff] %v265
      %v268 = vld [vmem:[%s1] sm:$0xf]
      %v269 = vld [vmem:[%s1 + $0x4] sm:$0xf]
      %v270 = vld [vmem:[%s1 + $0x8] sm:$0xf]
      %v271 = vld [vmem:[%s1 + $0xc] sm:$0xf]
      %v272 = vld [vmem:[#allocation2] sm:$0xff]
      %v273 = vld [vmem:[#allocation2 + $0x8] sm:$0xff]
      %v274 = vld [vmem:[#allocation2 + $0x10] sm:$0xff]
      %v275 = vld [vmem:[#allocation2 + $0x18] sm:$0xff]
      %v276 = vpack.c.bf16 %v273, %v272
      %v277 = vpack.c.bf16 %v275, %v274
      %v278 = vld [vmem:[%s2] sm:$0xff]
      %v279 = vld [vmem:[%s2 + $0x8] sm:$0xff]
      %v280 = vld [vmem:[%s2 + $0x10] sm:$0xff]
      %v281 = vld [vmem:[%s2 + $0x18] sm:$0xff]
      %283 = vset.pattern.permute.xlu0 0
      %284 = vperm.xlu0 %283, %v278
      %v285 = vpop.permute.xlu0 %284
      %288 = vset.pattern.permute.xlu0 0
      %289 = vperm.xlu0 %288, %v279
      %v290 = vpop.permute.xlu0 %289
      %293 = vset.pattern.permute.xlu0 0
      %294 = vperm.xlu0 %293, %v280
      %v295 = vpop.permute.xlu0 %294
      %298 = vset.pattern.permute.xlu0 0
      %299 = vperm.xlu0 %298, %v281
      %v300 = vpop.permute.xlu0 %299
      %v306 = vunpack.c.l.b16 %v268
      %v307 = vunpack.c.l.b16 %v269
      %v308 = vunpack.c.l.b16 %v270
      %v309 = vunpack.c.l.b16 %v271
      %v310 = vpack.c.b16 %v307, %v306
      %v311 = vpack.c.b16 %v309, %v308
      %vm312 = vcmask 261120
      %v314 = vsel %vm312, %v310, 0
      %v317 = vsel %vm312, %v311, 0
      %319 = vmatprep.subr.bf16.mxu0 0
      %320 = vmatpush1.bf16.msra.mxu0 0
      %321 = vmatprep.subr.bf16.mxu0 0
      %322 = vmatpush1.bf16.msra.mxu0 0
      %323 = vmatprep.subr.bf16.mxu0 0
      %324 = vmatpush1.bf16.msra.mxu0 0
      %325 = vmatprep.subr.bf16.mxu0 0
      %326 = vmatpush1.bf16.msra.mxu0 0
      %327 = vmatprep.subr.bf16.mxu0 0
      %328 = vmatpush1.bf16.msra.mxu0 0
      %329 = vmatprep.subr.bf16.mxu0 0
      %330 = vmatpush1.bf16.msra.mxu0 0
      %331 = vmatprep.subr.bf16.mxu0 0
      %332 = vmatpush1.bf16.msra.mxu0 %v277
      %333 = vmatprep.subr.bf16.mxu0 0
      %334 = vmatpush1.bf16.msra.mxu0 %v276
      %335 = vmatprep.subr.bf16.mxu0 0
      %336 = vmatpush2.bf16.msra.mxu0 0
      %337 = vmatprep.subr.bf16.mxu0 0
      %338 = vmatpush2.bf16.msra.mxu0 0
      %339 = vmatprep.subr.bf16.mxu0 0
      %340 = vmatpush2.bf16.msra.mxu0 0
      %341 = vmatprep.subr.bf16.mxu0 0
      %342 = vmatpush2.bf16.msra.mxu0 0
      %343 = vmatprep.subr.bf16.mxu0 0
      %344 = vmatpush2.bf16.msra.mxu0 0
      %345 = vmatprep.subr.bf16.mxu0 0
      %346 = vmatpush2.bf16.msra.mxu0 0
      %347 = vmatprep.subr.bf16.mxu0 0
      %348 = vmatpush2.bf16.msra.mxu0 0
      %349 = vmatprep.subr.bf16.mxu0 0
      %350 = vmatpush2.bf16.msra.mxu0 0
      %351 = vmatprep.mubr.bf16.mxu0 0
      %352 = vmatmul.mubr.bf16.gmra.mxu0 %v314
      %v353 = vpop.f32.mrf.mxu0
      %v354 = vadd.f32 %v285, %v353
      %v355 = vpop.f32.mrf.mxu0
      %v356 = vpop.f32.mrf.mxu0
      %v357 = vadd.f32 %v290, %v356
      %v358 = vpop.f32.mrf.mxu0
      %359 = vmatprep.mubr.bf16.mxu0 0
      %360 = vmatmul.mubr.bf16.gmra.mxu0 %v317
      %v361 = vpop.f32.mrf.mxu0
      %v362 = vadd.f32 %v295, %v361
      %v363 = vpop.f32.mrf.mxu0
      %v364 = vpop.f32.mrf.mxu0
      %v365 = vadd.f32 %v300, %v364
      %v366 = vpop.f32.mrf.mxu0
      %367 = vdwg.mxu0
      %v368 = vlaneseq
      %v369 = vand.u32 %v368, 127
      %vm370 = vcmp.lt.s32.totalorder %v369, 0
      %v371 = vsub.s32 0, %v369
      %v372 = vsel %vm370, %v371, %v369
      %v373 = vmul.u32.u64.compose %v372, 3435973837
      %v374 = vextract.low.u32 %v373
      %v375 = vextract.high.u32 %v373
      %v376 = vshrl.u32 %v375, 2
      %v377 = vmul.u32 %v376, 5
      %v378 = vsub.s32 %v372, %v377
      %v379 = vsub.s32 0, %v378
      %v380 = vsel %vm370, %v379, %v378
      %vm381 = vcmp.ne.s32.totalorder %v380, 0
      %vm382 = vcmp.lt.s32.totalorder %v380, 0
      %vm383 = vmand %vm382, %vm381
      %v384 = vadd.s32 %v380, 5
      %v385 = vsel %vm383, %v384, %v380
      %vm386 = vcmp.lt.s32.totalorder %v385, 4
      %vm387 = vcmp.lt.s32.totalorder %v369, 20
      %vm388 = vmand %vm386, %vm387
      %v389 = vsel %vm388, 1, 0
      %v390 = vcvt.s32.f32 %v389
      %v391 = vld [vmem:[%s3] sm:$0xff]
      %v392 = vld [vmem:[%s3 + $0x8] sm:$0xff]
      %v393 = vld [vmem:[%s3 + $0x10] sm:$0xff]
      %v394 = vld [vmem:[%s3 + $0x18] sm:$0xff]
      %v395 = vld [vmem:[%s4] sm:$0xff]
      %v396 = vld [vmem:[%s4 + $0x8] sm:$0xff]
      %v397 = vld [vmem:[%s4 + $0x10] sm:$0xff]
      %v398 = vld [vmem:[%s4 + $0x18] sm:$0xff]
      %v399 = vlaneseq
      %v400 = vshrl.u32 %v399, 7
      %v401 = vadd.s32 %v400, 8
      %v402 = vadd.s32 %v400, 16
      %v403 = vadd.s32 %v400, 24
      %vm404 = vcmp.lt.s32.totalorder %v400, 0
      %v405 = vsub.s32 0, %v400
      %v406 = vsel %vm404, %v405, %v400
      %v407 = vshrl.u32 %v406, 3
      %v408 = vand.u32 %v406, 7
      %v409 = vsub.s32 0, %v408
      %v410 = vsel %vm404, %v409, %v408
      %vm411 = vcmp.lt.s32.totalorder %v401, 0
      %v412 = vsub.s32 0, %v401
      %v413 = vsel %vm411, %v412, %v401
      %v414 = vshrl.u32 %v413, 3
      %v415 = vand.u32 %v413, 7
      %v416 = vsub.s32 0, %v415
      %v417 = vsel %vm411, %v416, %v415
      %vm418 = vcmp.lt.s32.totalorder %v402, 0
      %v419 = vsub.s32 0, %v402
      %v420 = vsel %vm418, %v419, %v402
      %v421 = vshrl.u32 %v420, 3
      %v422 = vand.u32 %v420, 7
      %v423 = vsub.s32 0, %v422
      %v424 = vsel %vm418, %v423, %v422
      %vm425 = vcmp.lt.s32.totalorder %v403, 0
      %v426 = vsub.s32 0, %v403
      %v427 = vsel %vm425, %v426, %v403
      %v428 = vshrl.u32 %v427, 3
      %v429 = vand.u32 %v427, 7
      %v430 = vsub.s32 0, %v429
      %v431 = vsel %vm425, %v430, %v429
      %vm432 = vcmp.ne.s32.totalorder %v410, 0
      %vm433 = vcmp.ne.s32.totalorder %v417, 0
      %vm434 = vcmp.ne.s32.totalorder %v424, 0
      %vm435 = vcmp.ne.s32.totalorder %v431, 0
      %vm436 = vcmp.lt.s32.totalorder %v410, 0
      %vm437 = vcmp.lt.s32.totalorder %v417, 0
      %vm438 = vcmp.lt.s32.totalorder %v424, 0
      %vm439 = vcmp.lt.s32.totalorder %v431, 0
      %vm440 = vmand %vm436, %vm432
      %vm441 = vmand %vm437, %vm433
      %vm442 = vmand %vm438, %vm434
      %vm443 = vmand %vm439, %vm435
      %v444 = vadd.s32 %v410, 8
      %v445 = vadd.s32 %v417, 8
      %v446 = vadd.s32 %v424, 8
      %v447 = vadd.s32 %v431, 8
      %v448 = vsel %vm440, %v444, %v410
      %v449 = vsel %vm441, %v445, %v417
      %v450 = vsel %vm442, %v446, %v424
      %v451 = vsel %vm443, %v447, %v431
      %vm452 = vcmp.ge.s32.totalorder %v448, 4
      %vm453 = vcmp.ge.s32.totalorder %v449, 4
      %vm454 = vcmp.ge.s32.totalorder %v450, 4
      %vm455 = vcmp.ge.s32.totalorder %v451, 4
      %v456 = vmul.f32 %v354, %v390
      %v457 = vmul.f32 %v357, %v390
      %v458 = vmul.f32 %v362, %v390
      %v459 = vmul.f32 %v365, %v390
      %460 = vadd.xlane.f32.xlu0 %v456
      %v461 = vpop.xlane.xlu0 %460
      %462 = vadd.xlane.f32.xlu0 %v457
      %v463 = vpop.xlane.xlu0 %462
      %464 = vadd.xlane.f32.xlu0 %v458
      %v465 = vpop.xlane.xlu0 %464
      %466 = vadd.xlane.f32.xlu0 %v459
      %v467 = vpop.xlane.xlu0 %466
      %v468 = vsel %vm452, 0.0, %v461
      %v469 = vsel %vm453, 0.0, %v463
      %v470 = vsel %vm454, 0.0, %v465
      %v471 = vsel %vm455, 0.0, %v467
      %vm472 = vcmask 7168
      %v473 = vsel %vm472, %v468, 0.0
      %v474 = vsel %vm472, %v469, 0.0
      %v475 = vadd.f32 %v473, %v474
      %v476 = vsel %vm472, %v470, 0.0
      %v477 = vadd.f32 %v475, %v476
      %v478 = vsel %vm472, %v471, 0.0
      %v479 = vadd.f32 %v477, %v478
      %480 = vadd.xlane.f32.xlu0 %v479
      %v481 = vpop.xlane.xlu0 %480
      %v482 = vrot.slane %v481, 4
      %v483 = vadd.f32 %v481, %v482
      %v484 = vrot.slane %v483, 2
      %v485 = vadd.f32 %v483, %v484
      %v486 = vrot.slane %v485, 1
      %v487 = vadd.f32 %v485, %v486
      %s488 = vtos %v487
      %v489 = vsel %vm452, %v461, 0.0
      %v490 = vsel %vm453, %v463, 0.0
      %v491 = vsel %vm454, %v465, 0.0
      %v492 = vsel %vm455, %v467, 0.0
      %v493 = vsel %vm472, %v489, 0.0
      %v494 = vsel %vm472, %v490, 0.0
      %v495 = vadd.f32 %v493, %v494
      %v496 = vsel %vm472, %v491, 0.0
      %v497 = vadd.f32 %v495, %v496
      %v498 = vsel %vm472, %v492, 0.0
      %v499 = vadd.f32 %v497, %v498
      %500 = vadd.xlane.f32.xlu0 %v499
      %v501 = vpop.xlane.xlu0 %500
      %v502 = vrot.slane %v501, 4
      %v503 = vadd.f32 %v501, %v502
      %v504 = vrot.slane %v503, 2
      %v505 = vadd.f32 %v503, %v504
      %v506 = vrot.slane %v505, 1
      %v507 = vadd.f32 %v505, %v506
      %s508 = vtos %v507
      %v509 = vstv %s508
      %v510 = vstv %s488
      %v511 = vsel %vm452, %v509, %v510
      %v512 = vsel %vm453, %v509, %v510
      %v513 = vsel %vm454, %v509, %v510
      %v514 = vsel %vm455, %v509, %v510
      %v515 = vmul.f32 %v511, 0.00390625
      %v516 = vmul.f32 %v512, 0.00390625
      %v517 = vmul.f32 %v513, 0.00390625
      %v518 = vmul.f32 %v514, 0.00390625
      %v519 = vsub.f32 %v354, %v515
      %v520 = vsub.f32 %v357, %v516
      %v521 = vsub.f32 %v362, %v517
      %v522 = vsub.f32 %v365, %v518
      %v523 = vmul.f32 %v519, %v390
      %v524 = vmul.f32 %v520, %v390
      %v525 = vmul.f32 %v521, %v390
      %v526 = vmul.f32 %v522, %v390
      %v527 = vmul.f32 %v523, %v523
      %v528 = vmul.f32 %v524, %v524
      %v529 = vmul.f32 %v525, %v525
      %v530 = vmul.f32 %v526, %v526
      %531 = vadd.xlane.f32.xlu0 %v527
      %v532 = vpop.xlane.xlu0 %531
      %533 = vadd.xlane.f32.xlu0 %v528
      %v534 = vpop.xlane.xlu0 %533
      %535 = vadd.xlane.f32.xlu0 %v529
      %v536 = vpop.xlane.xlu0 %535
      %537 = vadd.xlane.f32.xlu0 %v530
      %v538 = vpop.xlane.xlu0 %537
      %v539 = vsel %vm452, 0.0, %v532
      %v540 = vsel %vm453, 0.0, %v534
      %v541 = vsel %vm454, 0.0, %v536
      %v542 = vsel %vm455, 0.0, %v538
      %v543 = vsel %vm472, %v539, 0.0
      %v544 = vsel %vm472, %v540, 0.0
      %v545 = vadd.f32 %v543, %v544
      %v546 = vsel %vm472, %v541, 0.0
      %v547 = vadd.f32 %v545, %v546
      %v548 = vsel %vm472, %v542, 0.0
      %v549 = vadd.f32 %v547, %v548
      %550 = vadd.xlane.f32.xlu0 %v549
      %v551 = vpop.xlane.xlu0 %550
      %v552 = vrot.slane %v551, 4
      %v553 = vadd.f32 %v551, %v552
      %v554 = vrot.slane %v553, 2
      %v555 = vadd.f32 %v553, %v554
      %v556 = vrot.slane %v555, 1
      %v557 = vadd.f32 %v555, %v556
      %s558 = vtos %v557
      %v559 = vsel %vm452, %v532, 0.0
      %v560 = vsel %vm453, %v534, 0.0
      %v561 = vsel %vm454, %v536, 0.0
      %v562 = vsel %vm455, %v538, 0.0
      %v563 = vsel %vm472, %v559, 0.0
      %v564 = vsel %vm472, %v560, 0.0
      %v565 = vadd.f32 %v563, %v564
      %v566 = vsel %vm472, %v561, 0.0
      %v567 = vadd.f32 %v565, %v566
      %v568 = vsel %vm472, %v562, 0.0
      %v569 = vadd.f32 %v567, %v568
      %570 = vadd.xlane.f32.xlu0 %v569
      %v571 = vpop.xlane.xlu0 %570
      %v572 = vrot.slane %v571, 4
      %v573 = vadd.f32 %v571, %v572
      %v574 = vrot.slane %v573, 2
      %v575 = vadd.f32 %v573, %v574
      %v576 = vrot.slane %v575, 1
      %v577 = vadd.f32 %v575, %v576
      %s578 = vtos %v577
      %v579 = vstv %s578
      %v580 = vstv %s558
      %v581 = vsel %vm452, %v579, %v580
      %v582 = vsel %vm453, %v579, %v580
      %v583 = vsel %vm454, %v579, %v580
      %v584 = vsel %vm455, %v579, %v580
      %v585 = vmul.f32 %v581, 0.00390625
      %v586 = vmul.f32 %v582, 0.00390625
      %v587 = vmul.f32 %v583, 0.00390625
      %v588 = vmul.f32 %v584, 0.00390625
      %v589 = vadd.f32 %v585, 1e-05
      %v590 = vadd.f32 %v586, 1e-05
      %v591 = vadd.f32 %v587, 1e-05
      %v592 = vadd.f32 %v588, 1e-05
      %v593 = vrsqrt.pop %v589
      %v594 = vrsqrt.pop %v590
      %v595 = vrsqrt.pop %v591
      %v596 = vrsqrt.pop %v592
      %v597 = vmul.f32 %v593, %v391
      %v598 = vmul.f32 %v594, %v392
      %v599 = vmul.f32 %v595, %v393
      %v600 = vmul.f32 %v596, %v394
      %602 = vset.pattern.permute.xlu0 0
      %603 = vperm.xlu0 %602, %v597
      %v604 = vpop.permute.xlu0 %603
      %607 = vset.pattern.permute.xlu0 0
      %608 = vperm.xlu0 %607, %v598
      %v609 = vpop.permute.xlu0 %608
      %612 = vset.pattern.permute.xlu0 0
      %613 = vperm.xlu0 %612, %v599
      %v614 = vpop.permute.xlu0 %613
      %617 = vset.pattern.permute.xlu0 0
      %618 = vperm.xlu0 %617, %v600
      %v619 = vpop.permute.xlu0 %618
      %v621 = vmul.f32 %v519, %v604
      %v622 = vmul.f32 %v520, %v609
      %v623 = vmul.f32 %v521, %v614
      %v624 = vmul.f32 %v522, %v619
      %626 = vset.pattern.permute.xlu0 0
      %627 = vperm.xlu0 %626, %v395
      %v628 = vpop.permute.xlu0 %627
      %631 = vset.pattern.permute.xlu0 0
      %632 = vperm.xlu0 %631, %v396
      %v633 = vpop.permute.xlu0 %632
      %636 = vset.pattern.permute.xlu0 0
      %637 = vperm.xlu0 %636, %v397
      %v638 = vpop.permute.xlu0 %637
      %641 = vset.pattern.permute.xlu0 0
      %642 = vperm.xlu0 %641, %v398
      %v643 = vpop.permute.xlu0 %642
      %v645 = vadd.f32 %v621, %v628
      %v646 = vadd.f32 %v622, %v633
      %v647 = vadd.f32 %v623, %v638
      %v648 = vadd.f32 %v624, %v643
      %vm649 = vcmp.gt.f32.partialorder %v645, 0.0
      %vm650 = vcmp.gt.f32.partialorder %v646, 0.0
      %vm651 = vcmp.gt.f32.partialorder %v647, 0.0
      %vm652 = vcmp.gt.f32.partialorder %v648, 0.0
      %v653 = vmul.f32 %v645, 0.2
      %v654 = vmul.f32 %v646, 0.2
      %v655 = vmul.f32 %v647, 0.2
      %v656 = vmul.f32 %v648, 0.2
      %v657 = vsel %vm649, %v645, %v653
      %v658 = vsel %vm650, %v646, %v654
      %v659 = vsel %vm651, %v647, %v655
      %v660 = vsel %vm652, %v648, %v656
      %v661 = vpack.c.bf16 %v658, %v657
      %v662 = vpack.c.bf16 %v660, %v659
      %v665 = vunpack.c.l.b16 %v661
      %v666 = vunpack.c.h.b16 %v661
      %v667 = vunpack.c.l.b16 %v662
      %v668 = vunpack.c.h.b16 %v662
      %v669 = vpack.c.b16 %v665, %v665
      %v670 = vpack.c.b16 %v666, %v666
      %v671 = vpack.c.b16 %v667, %v667
      %v672 = vpack.c.b16 %v668, %v668
      %677 = vst [vmem:[%s224] sm:$0xf] %v669
      %678 = vst [vmem:[%s224 + $0x4] sm:$0xf] %v670
      %679 = vst [vmem:[%s224 + $0x8] sm:$0xf] %v671
      %680 = vst [vmem:[%s224 + $0xc] sm:$0xf] %v672
      %p681 = scmp.lt.s32.totalorder %s16, 1
      %s682 = scalar_select %p681, %s16, 1
      %s683 = smul.addr %s682, 4
      %s684 = smul.addr %s683, 4
      %s685 = scalar_lea.vmem %s5, %s684
      // Predicated region
      $region41: #{_lambda_.4} parent=39 // pred_check
        %p686 = pneg %p144
      $region42: #{_lambda_.4} parent=39 // pred_check_branch
        %688 = sbr.rel (%p686) target = $region44
      $region43: #{_lambda_.4} parent=39 // pred_region
        _
      $region44: #{_lambda_.4} parent=39 // pred_fallthru
        _
    $region40: #{_lambda_.4} parent=5 // pred_fallthru
      _
    %p689 = scmp.le.s32.totalorder 2, %s11
    // Predicated region
    $region45: #{_lambda_.4} parent=5 // pred_check
      %p690 = pneg %p689
    $region46: #{_lambda_.4} parent=5 // pred_check_branch
      %692 = sbr.rel (%p690) target = $region48
    $region47: #{_lambda_.4} parent=5 // pred_region
      %s693 = ssub.s32 %s11, 2
      // Predicated region
      $region49: #{_lambda_.4} parent=47 // pred_check
        %p694 = pneg %p150
      $region50: #{_lambda_.4} parent=47 // pred_check_branch
        %696 = sbr.rel (%p694) target = $region52
      $region51: #{_lambda_.4} parent=47 // pred_region
        %p697 = scmp.lt.s32.totalorder %s17, 1
        %s698 = scalar_select %p697, %s17, 1
        %s699 = smul.addr %s698, 4
        %s700 = smul.addr %s699, 4
        %s701 = scalar_lea.vmem %s5, %s700
      $region52: #{_lambda_.4} parent=47 // pred_fallthru
        _
    $region48: #{_lambda_.4} parent=5 // pred_fallthru
      _
  $region6: #{_lambda_.4} parent=0 // loop_footer
    %s15 = sadd.s32 1, %s11
  $region7: #{_lambda_.4} parent=0 // loop_footer_branch
    %10 = sbr.rel target = $region3
  $region8: #{_lambda_.4} parent=0 // loop_exit
    _

// kernel: _lambda_.5
$region0: #{_lambda_.5}
  #allocation0 [shape = 'u32[]', space=smem, size = 0x4, offset = 0x4, fixed_abs, tag = 'smem constant byte address 0x4 - core index']
  #allocation1 [shape = 'u32[144,128]{1,0:T(1,128)}', space=vmem, size = 0x12000, scoped, tag = 'internal scratch']
  #allocation2 [shape = 'f32[72,256]{1,0:T(8,128)}', space=vmem, size = 0x12000, scoped, tag = 'scratch operand']
  %s0 = inlined_call_operand.vmem [shape: bf16[2,8,384], index: 0, kind: input, shape index: {}]
  %s1 = inlined_call_operand.vmem [shape: bf16[8,72], index: 1, kind: input, shape index: {}]
  %s2 = inlined_call_operand.vmem [shape: f32[8,1], index: 2, kind: input, shape index: {}]
  %s3 = inlined_call_operand.vmem [shape: f32[8,1], index: 3, kind: input, shape index: {}]
  %s4 = inlined_call_operand.vmem [shape: f32[8,1], index: 4, kind: input, shape index: {}]
  %s5 = inlined_call_operand.vmem [shape: bf16[2,8,256], index: 5, kind: output, shape index: {}]
  %s6 = sld [smem:[#allocation0]]
  $region53: #{_lambda_.5} parent=0
    _
  %s8 = ssub.s32 1, %s6
  %s9 = scalar_select 0, %s8, %s6
  loop: start=0, step=1, limit=4
  $region2: #{_lambda_.5} parent=0 // loop_pre_header
    _
  $region3: #{_lambda_.5} parent=0 // loop_header
    %s11 = sphi 0, %s15
    %p12 = scmp.ge.s32.totalorder %s11, 4
    %s21 = sphi 0, %s23
    %s24 = sphi 0, %s21
    %s25 = sphi 0, %s24
    %s41 = sphi 0, %s25
    %s45 = sphi 0, %s45
    %s47 = sphi 0, %s45
    %s48 = sphi 0, %s47
    %s62 = sphi 0, %s48
    %s66 = sphi 0, %s66
    %s68 = sphi 0, %s66
    %s69 = sphi 0, %s68
    %s83 = sphi 0, %s69
    %s87 = sphi 0, %s87
    %s89 = sphi 0, %s87
    %s90 = sphi 0, %s89
    %s104 = sphi 0, %s90
    %s108 = sphi 0, %s108
    %s110 = sphi 0, %s108
    %s111 = sphi 0, %s110
    %s125 = sphi 0, %s111
    %s131 = sphi 0, %s133
    %s134 = sphi 0, %s131
    %s135 = sphi 0, %s134
    %s151 = sphi 0, %s135
  $region4: #{_lambda_.5} parent=0 // loop_header_branch
    %14 = sbr.rel (%p12) target = $region8
  $region5: #{_lambda_.5} parent=0 // loop_body
    %s16 = ssub.s32 %s11, 1
    %s17 = ssub.s32 %s11, 2
    %s18 = sadd.s32 %s11, 1
    %s19 = ssub.s32 %s11, %s18
    %p20 = scmp.eq.s32.totalorder %s19, 0
    %s22 = sadd.s32 %s21, 1
    %s23 = scalar_select %p20, %s21, %s22
    %p26 = pneg %p20
    %p27 = scmp.eq.s32.totalorder %s11, 1
    %p28 = por %p26, %p27
    %p29 = scmp.ne.s32.totalorder %s21, %s24
    %p30 = scmp.eq.s32.totalorder %s11, 0
    %p31 = por %p29, %p30
    %p32 = scmp.ne.s32.totalorder %s21, %s24
    %p33 = scmp.eq.s32.totalorder %s16, 1
    %p34 = por %p32, %p33
    %p35 = scmp.ne.s32.totalorder %s24, %s25
    %p36 = scmp.eq.s32.totalorder %s16, 0
    %p37 = por %p35, %p36
    %p38 = scmp.ne.s32.totalorder %s24, %s25
    %p39 = scmp.eq.s32.totalorder %s17, 1
    %p40 = por %p38, %p39
    %p42 = scmp.ne.s32.totalorder %s25, %s41
    %p43 = scmp.eq.s32.totalorder %s17, 0
    %p44 = por %p42, %p43
    %s46 = sadd.s32 %s45, 1
    %p49 = scmp.eq.s32.totalorder %s11, 1
    %p50 = scmp.ne.s32.totalorder %s45, %s47
    %p51 = scmp.eq.s32.totalorder %s11, 0
    %p52 = por %p50, %p51
    %p53 = scmp.ne.s32.totalorder %s45, %s47
    %p54 = scmp.eq.s32.totalorder %s16, 1
    %p55 = por %p53, %p54
    %p56 = scmp.ne.s32.totalorder %s47, %s48
    %p57 = scmp.eq.s32.totalorder %s16, 0
    %p58 = por %p56, %p57
    %p59 = scmp.ne.s32.totalorder %s47, %s48
    %p60 = scmp.eq.s32.totalorder %s17, 1
    %p61 = por %p59, %p60
    %p63 = scmp.ne.s32.totalorder %s48, %s62
    %p64 = scmp.eq.s32.totalorder %s17, 0
    %p65 = por %p63, %p64
    %s67 = sadd.s32 %s66, 1
    %p70 = scmp.eq.s32.totalorder %s11, 1
    %p71 = scmp.ne.s32.totalorder %s66, %s68
    %p72 = scmp.eq.s32.totalorder %s11, 0
    %p73 = por %p71, %p72
    %p74 = scmp.ne.s32.totalorder %s66, %s68
    %p75 = scmp.eq.s32.totalorder %s16, 1
    %p76 = por %p74, %p75
    %p77 = scmp.ne.s32.totalorder %s68, %s69
    %p78 = scmp.eq.s32.totalorder %s16, 0
    %p79 = por %p77, %p78
    %p80 = scmp.ne.s32.totalorder %s68, %s69
    %p81 = scmp.eq.s32.totalorder %s17, 1
    %p82 = por %p80, %p81
    %p84 = scmp.ne.s32.totalorder %s69, %s83
    %p85 = scmp.eq.s32.totalorder %s17, 0
    %p86 = por %p84, %p85
    %s88 = sadd.s32 %s87, 1
    %p91 = scmp.eq.s32.totalorder %s11, 1
    %p92 = scmp.ne.s32.totalorder %s87, %s89
    %p93 = scmp.eq.s32.totalorder %s11, 0
    %p94 = por %p92, %p93
    %p95 = scmp.ne.s32.totalorder %s87, %s89
    %p96 = scmp.eq.s32.totalorder %s16, 1
    %p97 = por %p95, %p96
    %p98 = scmp.ne.s32.totalorder %s89, %s90
    %p99 = scmp.eq.s32.totalorder %s16, 0
    %p100 = por %p98, %p99
    %p101 = scmp.ne.s32.totalorder %s89, %s90
    %p102 = scmp.eq.s32.totalorder %s17, 1
    %p103 = por %p101, %p102
    %p105 = scmp.ne.s32.totalorder %s90, %s104
    %p106 = scmp.eq.s32.totalorder %s17, 0
    %p107 = por %p105, %p106
    %s109 = sadd.s32 %s108, 1
    %p112 = scmp.eq.s32.totalorder %s11, 1
    %p113 = scmp.ne.s32.totalorder %s108, %s110
    %p114 = scmp.eq.s32.totalorder %s11, 0
    %p115 = por %p113, %p114
    %p116 = scmp.ne.s32.totalorder %s108, %s110
    %p117 = scmp.eq.s32.totalorder %s16, 1
    %p118 = por %p116, %p117
    %p119 = scmp.ne.s32.totalorder %s110, %s111
    %p120 = scmp.eq.s32.totalorder %s16, 0
    %p121 = por %p119, %p120
    %p122 = scmp.ne.s32.totalorder %s110, %s111
    %p123 = scmp.eq.s32.totalorder %s17, 1
    %p124 = por %p122, %p123
    %p126 = scmp.ne.s32.totalorder %s111, %s125
    %p127 = scmp.eq.s32.totalorder %s17, 0
    %p128 = por %p126, %p127
    %s129 = ssub.s32 %s11, %s18
    %p130 = scmp.eq.s32.totalorder %s129, 0
    %s132 = sadd.s32 %s131, 1
    %s133 = scalar_select %p130, %s131, %s132
    %p136 = pneg %p130
    %p137 = scmp.eq.s32.totalorder %s11, 1
    %p138 = por %p136, %p137
    %p139 = scmp.ne.s32.totalorder %s131, %s134
    %p140 = scmp.eq.s32.totalorder %s11, 0
    %p141 = por %p139, %p140
    %p142 = scmp.ne.s32.totalorder %s131, %s134
    %p143 = scmp.eq.s32.totalorder %s16, 1
    %p144 = por %p142, %p143
    %p145 = scmp.ne.s32.totalorder %s134, %s135
    %p146 = scmp.eq.s32.totalorder %s16, 0
    %p147 = por %p145, %p146
    %p148 = scmp.ne.s32.totalorder %s134, %s135
    %p149 = scmp.eq.s32.totalorder %s17, 1
    %p150 = por %p148, %p149
    %p152 = scmp.ne.s32.totalorder %s135, %s151
    %p153 = scmp.eq.s32.totalorder %s17, 0
    %p154 = por %p152, %p153
    %p155 = scmp.le.s32.totalorder 1, %s11
    %p156 = scmp.lt.s32.totalorder %s11, 3
    %p157 = pnand %p155, %p156
    %p158 = pneg %p157
    // Predicated region
    $region9: #{_lambda_.5} parent=5 // pred_check
      _
    $region10: #{_lambda_.5} parent=5 // pred_check_branch
      %160 = sbr.rel (%p157) target = $region12
    $region11: #{_lambda_.5} parent=5 // pred_region
      %s161 = ssub.s32 %s11, 1
      // Predicated region
      $region13: #{_lambda_.5} parent=11 // pred_check
        %p162 = pneg %p58
      $region14: #{_lambda_.5} parent=11 // pred_check_branch
        %164 = sbr.rel (%p162) target = $region16
      $region15: #{_lambda_.5} parent=11 // pred_region
        _
      $region16: #{_lambda_.5} parent=11 // pred_fallthru
        _
      // Predicated region
      $region17: #{_lambda_.5} parent=11 // pred_check
        %p165 = pneg %p79
      $region18: #{_lambda_.5} parent=11 // pred_check_branch
        %167 = sbr.rel (%p165) target = $region20
      $region19: #{_lambda_.5} parent=11 // pred_region
        _
      $region20: #{_lambda_.5} parent=11 // pred_fallthru
        _
      // Predicated region
      $region21: #{_lambda_.5} parent=11 // pred_check
        %p168 = pneg %p100
      $region22: #{_lambda_.5} parent=11 // pred_check_branch
        %170 = sbr.rel (%p168) target = $region24
      $region23: #{_lambda_.5} parent=11 // pred_region
        _
      $region24: #{_lambda_.5} parent=11 // pred_fallthru
        _
      // Predicated region
      $region25: #{_lambda_.5} parent=11 // pred_check
        %p171 = pneg %p121
      $region26: #{_lambda_.5} parent=11 // pred_check_branch
        %173 = sbr.rel (%p171) target = $region28
      $region27: #{_lambda_.5} parent=11 // pred_region
        _
      $region28: #{_lambda_.5} parent=11 // pred_fallthru
        _
    $region12: #{_lambda_.5} parent=5 // pred_fallthru
      _
    %p174 = scmp.lt.s32.totalorder %s11, 2
    // Predicated region
    $region29: #{_lambda_.5} parent=5 // pred_check
      %p175 = pneg %p174
    $region30: #{_lambda_.5} parent=5 // pred_check_branch
      %177 = sbr.rel (%p175) target = $region32
    $region31: #{_lambda_.5} parent=5 // pred_region
      // Predicated region
      $region33: #{_lambda_.5} parent=31 // pred_check
        %p178 = pneg %p31
      $region34: #{_lambda_.5} parent=31 // pred_check_branch
        %180 = sbr.rel (%p178) target = $region36
      $region35: #{_lambda_.5} parent=31 // pred_region
        %p181 = scmp.lt.s32.totalorder %s11, 1
        %s182 = scalar_select %p181, %s11, 1
        %s183 = smul.addr %s182, 3
        %s184 = smul.addr %s183, 4
        %s185 = scalar_lea.vmem %s0, %s184
      $region36: #{_lambda_.5} parent=31 // pred_fallthru
        _
    $region32: #{_lambda_.5} parent=5 // pred_fallthru
      _
    %p186 = scmp.le.s32.totalorder 1, %s11
    %p187 = scmp.lt.s32.totalorder %s11, 3
    %p188 = pnand %p186, %p187
    %p189 = pneg %p188
    // Predicated region
    $region37: #{_lambda_.5} parent=5 // pred_check
      _
    $region38: #{_lambda_.5} parent=5 // pred_check_branch
      %191 = sbr.rel (%p188) target = $region40
    $region39: #{_lambda_.5} parent=5 // pred_region
      %s192 = ssub.s32 %s11, 1
      %p193 = scmp.lt.s32.totalorder %s16, 1
      %s194 = scalar_select %p193, %s16, 1
      %s195 = smul.addr %s194, 3
      %s196 = smul.addr %s195, 4
      %s197 = scalar_lea.vmem %s0, %s196
      %p198 = pneg %p37
      %p199 = pneg %p34
      %p200 = pneg %p58
      %p201 = pneg %p55
      %p202 = pneg %p79
      %p203 = pneg %p76
      %p204 = pneg %p100
      %p205 = pneg %p97
      %p206 = pneg %p121
      %p207 = pneg %p118
      %p208 = pneg %p147
      %p209 = pneg %p144
      %p210 = scmp.lt.s32.totalorder %s16, 1
      %s211 = scalar_select %p210, %s16, 1
      %s212 = smul.addr %s211, 2
      %s213 = smul.addr %s212, 4
      %s214 = scalar_lea.vmem %s5, %s213
      %p215 = scmp.lt.s32.totalorder %s16, 1
      %s216 = scalar_select %p215, %s16, 1
      %s217 = smul.addr %s216, 3
      %s218 = smul.addr %s217, 4
      %s219 = scalar_lea.vmem %s0, %s218
      %p220 = scmp.lt.s32.totalorder %s16, 1
      %s221 = scalar_select %p220, %s16, 1
      %s222 = smul.addr %s221, 2
      %s223 = smul.addr %s222, 4
      %s224 = scalar_lea.vmem %s5, %s223
      %v226 = vld [vmem:[%s219] sm:$0xff]
      %v227 = vunpack.c.l.bf16 %v226
      %v228 = vunpack.c.h.bf16 %v226
      %229 = vst [vmem:[#allocation2] sm:$0xff] %v227
      %230 = vst [vmem:[#allocation2 + $0x8] sm:$0xff] %v228
      %v231 = vld [vmem:[%s219] sm:$0xff]
      %v232 = vld [vmem:[%s219 + $0x8] sm:$0xf]
      %v233 = vunpack.c.l.bf16 %v231
      %v234 = vunpack.c.h.bf16 %v231
      %v235 = vunpack.c.l.bf16 %v232
      %239 = vrot.lane.b32.xlu0 %v233, 127
      %v240 = vpop.permute.xlu0 %239
      %241 = vrot.lane.b32.xlu0 %v234, 127
      %v242 = vpop.permute.xlu0 %241
      %243 = vrot.lane.b32.xlu0 %v235, 127
      %v244 = vpop.permute.xlu0 %243
      %vm245 = vcmask 1039360
      %v246 = vsel %vm245, %v240, %v242
      %v247 = vsel %vm245, %v242, %v244
      %250 = vst [vmem:[#allocation2 + $0x10] sm:$0xff] %v246
      %251 = vst [vmem:[#allocation2 + $0x18] sm:$0xff] %v247
      %v252 = vld [vmem:[%s219] sm:$0xff]
      %v253 = vld [vmem:[%s219 + $0x8] sm:$0xf]
      %v254 = vunpack.c.l.bf16 %v252
      %v255 = vunpack.c.h.bf16 %v252
      %v256 = vunpack.c.l.bf16 %v253
      %260 = vrot.lane.b32.xlu0 %v254, 126
      %v261 = vpop.permute.xlu0 %260
      %262 = vrot.lane.b32.xlu0 %v255, 126
      %v263 = vpop.permute.xlu0 %262
      %264 = vrot.lane.b32.xlu0 %v256, 126
      %v265 = vpop.permute.xlu0 %264
      %vm266 = vcmask 1031168
      %v267 = vsel %vm266, %v261, %v263
      %v268 = vsel %vm266, %v263, %v265
      %271 = vst [vmem:[#allocation2 + $0x20] sm:$0xff] %v267
      %272 = vst [vmem:[#allocation2 + $0x28] sm:$0xff] %v268
      %v273 = vld [vmem:[%s219] sm:$0xff]
      %v274 = vld [vmem:[%s219 + $0x8] sm:$0xf]
      %v275 = vunpack.c.l.bf16 %v273
      %v276 = vunpack.c.h.bf16 %v273
      %v277 = vunpack.c.l.bf16 %v274
      %281 = vrot.lane.b32.xlu0 %v275, 118
      %v282 = vpop.permute.xlu0 %281
      %283 = vrot.lane.b32.xlu0 %v276, 118
      %v284 = vpop.permute.xlu0 %283
      %285 = vrot.lane.b32.xlu0 %v277, 118
      %v286 = vpop.permute.xlu0 %285
      %vm287 = vcmask 965632
      %v288 = vsel %vm287, %v282, %v284
      %v289 = vsel %vm287, %v284, %v286
      %292 = vst [vmem:[#allocation2 + $0x30] sm:$0xff] %v288
      %293 = vst [vmem:[#allocation2 + $0x38] sm:$0xff] %v289
      %v294 = vld [vmem:[%s219] sm:$0xff]
      %v295 = vld [vmem:[%s219 + $0x8] sm:$0xf]
      %v296 = vunpack.c.l.bf16 %v294
      %v297 = vunpack.c.h.bf16 %v294
      %v298 = vunpack.c.l.bf16 %v295
      %302 = vrot.lane.b32.xlu0 %v296, 117
      %v303 = vpop.permute.xlu0 %302
      %304 = vrot.lane.b32.xlu0 %v297, 117
      %v305 = vpop.permute.xlu0 %304
      %306 = vrot.lane.b32.xlu0 %v298, 117
      %v307 = vpop.permute.xlu0 %306
      %vm308 = vcmask 957440
      %v309 = vsel %vm308, %v303, %v305
      %v310 = vsel %vm308, %v305, %v307
      %313 = vst [vmem:[#allocation2 + $0x40] sm:$0xff] %v309
      %314 = vst [vmem:[#allocation2 + $0x48] sm:$0xff] %v310
      %v315 = vld [vmem:[%s219] sm:$0xff]
      %v316 = vld [vmem:[%s219 + $0x8] sm:$0xf]
      %v317 = vunpack.c.l.bf16 %v315
      %v318 = vunpack.c.h.bf16 %v315
      %v319 = vunpack.c.l.bf16 %v316
      %323 = vrot.lane.b32.xlu0 %v317, 116
      %v324 = vpop.permute.xlu0 %323
      %325 = vrot.lane.b32.xlu0 %v318, 116
      %v326 = vpop.permute.xlu0 %325
      %327 = vrot.lane.b32.xlu0 %v319, 116
      %v328 = vpop.permute.xlu0 %327
      %vm329 = vcmask 949248
      %v330 = vsel %vm329, %v324, %v326
      %v331 = vsel %vm329, %v326, %v328
      %334 = vst [vmem:[#allocation2 + $0x50] sm:$0xff] %v330
      %335 = vst [vmem:[#allocation2 + $0x58] sm:$0xff] %v331
      %v336 = vld [vmem:[%s219] sm:$0xff]
      %v337 = vld [vmem:[%s219 + $0x8] sm:$0xf]
      %v338 = vunpack.c.l.bf16 %v336
      %v339 = vunpack.c.h.bf16 %v336
      %v340 = vunpack.c.l.bf16 %v337
      %344 = vrot.lane.b32.xlu0 %v338, 108
      %v345 = vpop.permute.xlu0 %344
      %346 = vrot.lane.b32.xlu0 %v339, 108
      %v347 = vpop.permute.xlu0 %346
      %348 = vrot.lane.b32.xlu0 %v340, 108
      %v349 = vpop.permute.xlu0 %348
      %vm350 = vcmask 883712
      %v351 = vsel %vm350, %v345, %v347
      %v352 = vsel %vm350, %v347, %v349
      %355 = vst [vmem:[#allocation2 + $0x60] sm:$0xff] %v351
      %356 = vst [vmem:[#allocation2 + $0x68] sm:$0xff] %v352
      %v357 = vld [vmem:[%s219] sm:$0xff]
      %v358 = vld [vmem:[%s219 + $0x8] sm:$0xf]
      %v359 = vunpack.c.l.bf16 %v357
      %v360 = vunpack.c.h.bf16 %v357
      %v361 = vunpack.c.l.bf16 %v358
      %365 = vrot.lane.b32.xlu0 %v359, 107
      %v366 = vpop.permute.xlu0 %365
      %367 = vrot.lane.b32.xlu0 %v360, 107
      %v368 = vpop.permute.xlu0 %367
      %369 = vrot.lane.b32.xlu0 %v361, 107
      %v370 = vpop.permute.xlu0 %369
      %vm371 = vcmask 875520
      %v372 = vsel %vm371, %v366, %v368
      %v373 = vsel %vm371, %v368, %v370
      %376 = vst [vmem:[#allocation2 + $0x70] sm:$0xff] %v372
      %377 = vst [vmem:[#allocation2 + $0x78] sm:$0xff] %v373
      %v378 = vld [vmem:[%s219] sm:$0xff]
      %v379 = vld [vmem:[%s219 + $0x8] sm:$0xf]
      %v380 = vunpack.c.l.bf16 %v378
      %v381 = vunpack.c.h.bf16 %v378
      %v382 = vunpack.c.l.bf16 %v379
      %386 = vrot.lane.b32.xlu0 %v380, 106
      %v387 = vpop.permute.xlu0 %386
      %388 = vrot.lane.b32.xlu0 %v381, 106
      %v389 = vpop.permute.xlu0 %388
      %390 = vrot.lane.b32.xlu0 %v382, 106
      %v391 = vpop.permute.xlu0 %390
      %vm392 = vcmask 867328
      %v393 = vsel %vm392, %v387, %v389
      %v394 = vsel %vm392, %v389, %v391
      %397 = vst [vmem:[#allocation2 + $0x80] sm:$0xff] %v393
      %398 = vst [vmem:[#allocation2 + $0x88] sm:$0xff] %v394
      %v399 = vld [vmem:[%s1] sm:$0xf]
      %v400 = vld [vmem:[#allocation2] sm:$0xff]
      %v401 = vld [vmem:[#allocation2 + $0x8] sm:$0xff]
      %v402 = vld [vmem:[#allocation2 + $0x10] sm:$0xff]
      %v403 = vld [vmem:[#allocation2 + $0x18] sm:$0xff]
      %v404 = vld [vmem:[#allocation2 + $0x20] sm:$0xff]
      %v405 = vld [vmem:[#allocation2 + $0x28] sm:$0xff]
      %v406 = vld [vmem:[#allocation2 + $0x30] sm:$0xff]
      %v407 = vld [vmem:[#allocation2 + $0x38] sm:$0xff]
      %v408 = vld [vmem:[#allocation2 + $0x40] sm:$0xff]
      %v409 = vld [vmem:[#allocation2 + $0x48] sm:$0xff]
      %v410 = vld [vmem:[#allocation2 + $0x50] sm:$0xff]
      %v411 = vld [vmem:[#allocation2 + $0x58] sm:$0xff]
      %v412 = vld [vmem:[#allocation2 + $0x60] sm:$0xff]
      %v413 = vld [vmem:[#allocation2 + $0x68] sm:$0xff]
      %v414 = vld [vmem:[#allocation2 + $0x70] sm:$0xff]
      %v415 = vld [vmem:[#allocation2 + $0x78] sm:$0xff]
      %v416 = vld [vmem:[#allocation2 + $0x80] sm:$0xff]
      %v417 = vld [vmem:[#allocation2 + $0x88] sm:$0xff]
      %v418 = vpack.c.bf16 %v402, %v400
      %v419 = vpack.c.bf16 %v403, %v401
      %v420 = vpack.c.bf16 %v406, %v404
      %v421 = vpack.c.bf16 %v407, %v405
      %v422 = vpack.c.bf16 %v410, %v408
      %v423 = vpack.c.bf16 %v411, %v409
      %v424 = vpack.c.bf16 %v414, %v412
      %v425 = vpack.c.bf16 %v415, %v413
      %v426 = vpack.c.bf16 %v416, %v416
      %v427 = vpack.c.bf16 %v417, %v417
      %v428 = vld [vmem:[%s2] sm:$0xff]
      %430 = vset.pattern.permute.xlu0 0
      %431 = vperm.xlu0 %430, %v428
      %v432 = vpop.permute.xlu0 %431
      %vm434 = vcmask 588800
      %v436 = vsel %vm434, %v399, 0
      %vm438 = vcmask 1043456
      %v440 = vsel %vm438, %v426, 0
      %v443 = vsel %vm438, %v427, 0
      %445 = vmatprep.subr.bf16.mxu0 0
      %446 = vmatpush1.bf16.msra.mxu0 0
      %447 = vmatprep.subr.bf16.mxu0 0
      %448 = vmatpush1.bf16.msra.mxu0 0
      %449 = vmatprep.subr.bf16.mxu0 0
      %450 = vmatpush1.bf16.msra.mxu0 0
      %451 = vmatprep.subr.bf16.mxu0 %v443
      %452 = vmatpush1.bf16.msra.mxu0 %v440
      %453 = vmatprep.subr.bf16.mxu0 %v425
      %454 = vmatpush1.bf16.msra.mxu0 %v424
      %455 = vmatprep.subr.bf16.mxu0 %v423
      %456 = vmatpush1.bf16.msra.mxu0 %v422
      %457 = vmatprep.subr.bf16.mxu0 %v421
      %458 = vmatpush1.bf16.msra.mxu0 %v420
      %459 = vmatprep.subr.bf16.mxu0 %v419
      %460 = vmatpush1.bf16.msra.mxu0 %v418
      %461 = vmatprep.subr.bf16.mxu0 0
      %462 = vmatpush2.bf16.msra.mxu0 0
      %463 = vmatprep.subr.bf16.mxu0 0
      %464 = vmatpush2.bf16.msra.mxu0 0
      %465 = vmatprep.subr.bf16.mxu0 0
      %466 = vmatpush2.bf16.msra.mxu0 0
      %467 = vmatprep.subr.bf16.mxu0 0
      %468 = vmatpush2.bf16.msra.mxu0 0
      %469 = vmatprep.subr.bf16.mxu0 0
      %470 = vmatpush2.bf16.msra.mxu0 0
      %471 = vmatprep.subr.bf16.mxu0 0
      %472 = vmatpush2.bf16.msra.mxu0 0
      %473 = vmatprep.subr.bf16.mxu0 0
      %474 = vmatpush2.bf16.msra.mxu0 0
      %475 = vmatprep.subr.bf16.mxu0 0
      %476 = vmatpush2.bf16.msra.mxu0 0
      %477 = vmatprep.mubr.bf16.mxu0 0
      %478 = vmatmul.mubr.bf16.gmra.mxu0 %v436
      %v479 = vpop.f32.mrf.mxu0
      %v480 = vadd.f32 %v432, %v479
      %v481 = vpop.f32.mrf.mxu0
      %v482 = vadd.f32 %v432, %v481
      %v483 = vpop.f32.mrf.mxu0
      %v484 = vpop.f32.mrf.mxu0
      %485 = vdwg.mxu0
      %v486 = vlaneseq
      %v487 = vand.u32 %v486, 127
      %v488 = vadd.s32 %v487, 128
      %vm489 = vcmp.lt.s32.totalorder %v487, 0
      %v490 = vsub.s32 0, %v487
      %v491 = vsel %vm489, %v490, %v487
      %v492 = vmul.u32.u64.compose %v491, 3435973837
      %v493 = vextract.low.u32 %v492
      %v494 = vextract.high.u32 %v492
      %v495 = vshrl.u32 %v494, 3
      %v496 = vmul.u32 %v495, 10
      %v497 = vsub.s32 %v491, %v496
      %v498 = vsub.s32 0, %v497
      %v499 = vsel %vm489, %v498, %v497
      %vm500 = vcmp.lt.s32.totalorder %v488, 0
      %v501 = vsub.s32 0, %v488
      %v502 = vsel %vm500, %v501, %v488
      %v503 = vmul.u32.u64.compose %v502, 3435973837
      %v504 = vextract.low.u32 %v503
      %v505 = vextract.high.u32 %v503
      %v506 = vshrl.u32 %v505, 3
      %v507 = vmul.u32 %v506, 10
      %v508 = vsub.s32 %v502, %v507
      %v509 = vsub.s32 0, %v508
      %v510 = vsel %vm500, %v509, %v508
      %vm511 = vcmp.ne.s32.totalorder %v499, 0
      %vm512 = vcmp.ne.s32.totalorder %v510, 0
      %vm513 = vcmp.lt.s32.totalorder %v499, 0
      %vm514 = vcmp.lt.s32.totalorder %v510, 0
      %vm515 = vmand %vm513, %vm511
      %vm516 = vmand %vm514, %vm512
      %v517 = vadd.s32 %v499, 10
      %v518 = vadd.s32 %v510, 10
      %v519 = vsel %vm515, %v517, %v499
      %v520 = vsel %vm516, %v518, %v510
      %vm521 = vcmp.lt.s32.totalorder %v519, 8
      %vm522 = vcmp.lt.s32.totalorder %v520, 8
      %vm523 = vcmp.lt.s32.totalorder %v487, 80
      %vm524 = vcmp.lt.s32.totalorder %v488, 80
      %vm525 = vmand %vm521, %vm523
      %vm526 = vmand %vm522, %vm524
      %v527 = vsel %vm525, 1, 0
      %v528 = vsel %vm526, 1, 0
      %v529 = vcvt.s32.f32 %v527
      %v530 = vcvt.s32.f32 %v528
      %v531 = vld [vmem:[%s3] sm:$0xff]
      %v532 = vld [vmem:[%s4] sm:$0xff]
      %v533 = vlaneseq
      %v534 = vshrl.u32 %v533, 7
      %vm535 = vcmp.lt.s32.totalorder %v534, 0
      %v536 = vsub.s32 0, %v534
      %v537 = vsel %vm535, %v536, %v534
      %v538 = vshrl.u32 %v537, 3
      %v539 = vand.u32 %v537, 7
      %v540 = vsub.s32 0, %v539
      %v541 = vsel %vm535, %v540, %v539
      %vm542 = vcmp.ne.s32.totalorder %v541, 0
      %vm543 = vcmp.lt.s32.totalorder %v541, 0
      %vm544 = vmand %vm543, %vm542
      %v545 = vadd.s32 %v541, 8
      %v546 = vsel %vm544, %v545, %v541
      %vm547 = vcmp.ge.s32.totalorder %v546, 4
      %v548 = vmul.f32 %v480, %v529
      %v549 = vmul.f32 %v482, %v530
      %v550 = vadd.f32 %v548, %v549
      %551 = vadd.xlane.f32.xlu0 %v550
      %v552 = vpop.xlane.xlu0 %551
      %v553 = vsel %vm547, 0.0, %v552
      %vm554 = vcmask 7168
      %v555 = vsel %vm554, %v553, 0.0
      %556 = vadd.xlane.f32.xlu0 %v555
      %v557 = vpop.xlane.xlu0 %556
      %v558 = vrot.slane %v557, 4
      %v559 = vadd.f32 %v557, %v558
      %v560 = vrot.slane %v559, 2
      %v561 = vadd.f32 %v559, %v560
      %v562 = vrot.slane %v561, 1
      %v563 = vadd.f32 %v561, %v562
      %s564 = vtos %v563
      %v565 = vsel %vm547, %v552, 0.0
      %v566 = vsel %vm554, %v565, 0.0
      %567 = vadd.xlane.f32.xlu0 %v566
      %v568 = vpop.xlane.xlu0 %567
      %v569 = vrot.slane %v568, 4
      %v570 = vadd.f32 %v568, %v569
      %v571 = vrot.slane %v570, 2
      %v572 = vadd.f32 %v570, %v571
      %v573 = vrot.slane %v572, 1
      %v574 = vadd.f32 %v572, %v573
      %s575 = vtos %v574
      %v576 = vstv %s575
      %v577 = vstv %s564
      %v578 = vsel %vm547, %v576, %v577
      %v579 = vmul.f32 %v578, 0.00390625
      %v580 = vsub.f32 %v480, %v579
      %v581 = vsub.f32 %v482, %v579
      %v582 = vmul.f32 %v580, %v529
      %v583 = vmul.f32 %v581, %v530
      %v584 = vmul.f32 %v582, %v582
      %v585 = vmul.f32 %v583, %v583
      %v586 = vadd.f32 %v584, %v585
      %587 = vadd.xlane.f32.xlu0 %v586
      %v588 = vpop.xlane.xlu0 %587
      %v589 = vsel %vm547, 0.0, %v588
      %v590 = vsel %vm554, %v589, 0.0
      %591 = vadd.xlane.f32.xlu0 %v590
      %v592 = vpop.xlane.xlu0 %591
      %v593 = vrot.slane %v592, 4
      %v594 = vadd.f32 %v592, %v593
      %v595 = vrot.slane %v594, 2
      %v596 = vadd.f32 %v594, %v595
      %v597 = vrot.slane %v596, 1
      %v598 = vadd.f32 %v596, %v597
      %s599 = vtos %v598
      %v600 = vsel %vm547, %v588, 0.0
      %v601 = vsel %vm554, %v600, 0.0
      %602 = vadd.xlane.f32.xlu0 %v601
      %v603 = vpop.xlane.xlu0 %602
      %v604 = vrot.slane %v603, 4
      %v605 = vadd.f32 %v603, %v604
      %v606 = vrot.slane %v605, 2
      %v607 = vadd.f32 %v605, %v606
      %v608 = vrot.slane %v607, 1
      %v609 = vadd.f32 %v607, %v608
      %s610 = vtos %v609
      %v611 = vstv %s610
      %v612 = vstv %s599
      %v613 = vsel %vm547, %v611, %v612
      %v614 = vmul.f32 %v613, 0.00390625
      %v615 = vadd.f32 %v614, 1e-05
      %v616 = vrsqrt.pop %v615
      %v617 = vmul.f32 %v616, %v531
      %619 = vset.pattern.permute.xlu0 0
      %620 = vperm.xlu0 %619, %v617
      %v621 = vpop.permute.xlu0 %620
      %v623 = vmul.f32 %v580, %v621
      %v624 = vmul.f32 %v581, %v621
      %626 = vset.pattern.permute.xlu0 0
      %627 = vperm.xlu0 %626, %v532
      %v628 = vpop.permute.xlu0 %627
      %v630 = vadd.f32 %v623, %v628
      %v631 = vadd.f32 %v624, %v628
      %vm632 = vcmp.gt.f32.partialorder %v630, 0.0
      %vm633 = vcmp.gt.f32.partialorder %v631, 0.0
      %v634 = vmul.f32 %v630, 0.2
      %v635 = vmul.f32 %v631, 0.2
      %v636 = vsel %vm632, %v630, %v634
      %v637 = vsel %vm633, %v631, %v635
      %v638 = vmul.f32 %v636, %v529
      %v639 = vmul.f32 %v637, %v530
      %v640 = vpack.c.bf16 %v638, %v638
      %v641 = vpack.c.bf16 %v639, %v639
      %v644 = vunpack.c.l.b16 %v640
      %v645 = vunpack.c.l.b16 %v641
      %v646 = vpack.c.b16 %v645, %v644
      %648 = vst [vmem:[%s224] sm:$0xff] %v646
      %p649 = scmp.lt.s32.totalorder %s16, 1
      %s650 = scalar_select %p649, %s16, 1
      %s651 = smul.addr %s650, 2
      %s652 = smul.addr %s651, 4
      %s653 = scalar_lea.vmem %s5, %s652
      // Predicated region
      $region41: #{_lambda_.5} parent=39 // pred_check
        %p654 = pneg %p144
      $region42: #{_lambda_.5} parent=39 // pred_check_branch
        %656 = sbr.rel (%p654) target = $region44
      $region43: #{_lambda_.5} parent=39 // pred_region
        _
      $region44: #{_lambda_.5} parent=39 // pred_fallthru
        _
    $region40: #{_lambda_.5} parent=5 // pred_fallthru
      _
    %p657 = scmp.le.s32.totalorder 2, %s11
    // Predicated region
    $region45: #{_lambda_.5} parent=5 // pred_check
      %p658 = pneg %p657
    $region46: #{_lambda_.5} parent=5 // pred_check_branch
      %660 = sbr.rel (%p658) target = $region48
    $region47: #{_lambda_.5} parent=5 // pred_region
      %s661 = ssub.s32 %s11, 2
      // Predicated region
      $region49: #{_lambda_.5} parent=47 // pred_check
        %p662 = pneg %p150
      $region50: #{_lambda_.5} parent=47 // pred_check_branch
        %664 = sbr.rel (%p662) target = $region52
      $region51: #{_lambda_.5} parent=47 // pred_region
        %p665 = scmp.lt.s32.totalorder %s17, 1
        %s666 = scalar_select %p665, %s17, 1
        %s667 = smul.addr %s666, 2
        %s668 = smul.addr %s667, 4
        %s669 = scalar_lea.vmem %s5, %s668
      $region52: #{_lambda_.5} parent=47 // pred_fallthru
        _
    $region48: #{_lambda_.5} parent=5 // pred_fallthru
      _
  $region6: #{_lambda_.5} parent=0 // loop_footer
    %s15 = sadd.s32 1, %s11
  $region7: #{_lambda_.5} parent=0 // loop_footer_branch
    %10 = sbr.rel target = $region3
  $region8: #{_lambda_.5} parent=0 // loop_exit
    _

// kernel: _lambda_.6
$region0: #{_lambda_.6}
  #allocation0 [shape = 'u32[]', space=smem, size = 0x4, offset = 0x4, fixed_abs, tag = 'smem constant byte address 0x4 - core index']
  #allocation1 [shape = 'u32[144,128]{1,0:T(1,128)}', space=vmem, size = 0x12000, scoped, tag = 'internal scratch']
  #allocation2 [shape = 'f32[32,128]{1,0:T(8,128)}', space=vmem, size = 0x4000, scoped, tag = 'scratch operand']
  %s0 = inlined_call_operand.vmem [shape: bf16[2,8,256], index: 0, kind: input, shape index: {}]
  %s1 = inlined_call_operand.vmem [shape: bf16[32,32], index: 1, kind: input, shape index: {}]
  %s2 = inlined_call_operand.vmem [shape: f32[32,1], index: 2, kind: input, shape index: {}]
  %s3 = inlined_call_operand.vmem [shape: f32[32,1], index: 3, kind: input, shape index: {}]
  %s4 = inlined_call_operand.vmem [shape: f32[32,1], index: 4, kind: input, shape index: {}]
  %s5 = inlined_call_operand.vmem [shape: bf16[2,32,128], index: 5, kind: output, shape index: {}]
  %s6 = sld [smem:[#allocation0]]
  $region53: #{_lambda_.6} parent=0
    _
  %s8 = ssub.s32 1, %s6
  %s9 = scalar_select 0, %s8, %s6
  loop: start=0, step=1, limit=4
  $region2: #{_lambda_.6} parent=0 // loop_pre_header
    _
  $region3: #{_lambda_.6} parent=0 // loop_header
    %s11 = sphi 0, %s15
    %p12 = scmp.ge.s32.totalorder %s11, 4
    %s21 = sphi 0, %s23
    %s24 = sphi 0, %s21
    %s25 = sphi 0, %s24
    %s41 = sphi 0, %s25
    %s45 = sphi 0, %s45
    %s47 = sphi 0, %s45
    %s48 = sphi 0, %s47
    %s62 = sphi 0, %s48
    %s66 = sphi 0, %s66
    %s68 = sphi 0, %s66
    %s69 = sphi 0, %s68
    %s83 = sphi 0, %s69
    %s87 = sphi 0, %s87
    %s89 = sphi 0, %s87
    %s90 = sphi 0, %s89
    %s104 = sphi 0, %s90
    %s108 = sphi 0, %s108
    %s110 = sphi 0, %s108
    %s111 = sphi 0, %s110
    %s125 = sphi 0, %s111
    %s131 = sphi 0, %s133
    %s134 = sphi 0, %s131
    %s135 = sphi 0, %s134
    %s151 = sphi 0, %s135
  $region4: #{_lambda_.6} parent=0 // loop_header_branch
    %14 = sbr.rel (%p12) target = $region8
  $region5: #{_lambda_.6} parent=0 // loop_body
    %s16 = ssub.s32 %s11, 1
    %s17 = ssub.s32 %s11, 2
    %s18 = sadd.s32 %s11, 1
    %s19 = ssub.s32 %s11, %s18
    %p20 = scmp.eq.s32.totalorder %s19, 0
    %s22 = sadd.s32 %s21, 1
    %s23 = scalar_select %p20, %s21, %s22
    %p26 = pneg %p20
    %p27 = scmp.eq.s32.totalorder %s11, 1
    %p28 = por %p26, %p27
    %p29 = scmp.ne.s32.totalorder %s21, %s24
    %p30 = scmp.eq.s32.totalorder %s11, 0
    %p31 = por %p29, %p30
    %p32 = scmp.ne.s32.totalorder %s21, %s24
    %p33 = scmp.eq.s32.totalorder %s16, 1
    %p34 = por %p32, %p33
    %p35 = scmp.ne.s32.totalorder %s24, %s25
    %p36 = scmp.eq.s32.totalorder %s16, 0
    %p37 = por %p35, %p36
    %p38 = scmp.ne.s32.totalorder %s24, %s25
    %p39 = scmp.eq.s32.totalorder %s17, 1
    %p40 = por %p38, %p39
    %p42 = scmp.ne.s32.totalorder %s25, %s41
    %p43 = scmp.eq.s32.totalorder %s17, 0
    %p44 = por %p42, %p43
    %s46 = sadd.s32 %s45, 1
    %p49 = scmp.eq.s32.totalorder %s11, 1
    %p50 = scmp.ne.s32.totalorder %s45, %s47
    %p51 = scmp.eq.s32.totalorder %s11, 0
    %p52 = por %p50, %p51
    %p53 = scmp.ne.s32.totalorder %s45, %s47
    %p54 = scmp.eq.s32.totalorder %s16, 1
    %p55 = por %p53, %p54
    %p56 = scmp.ne.s32.totalorder %s47, %s48
    %p57 = scmp.eq.s32.totalorder %s16, 0
    %p58 = por %p56, %p57
    %p59 = scmp.ne.s32.totalorder %s47, %s48
    %p60 = scmp.eq.s32.totalorder %s17, 1
    %p61 = por %p59, %p60
    %p63 = scmp.ne.s32.totalorder %s48, %s62
    %p64 = scmp.eq.s32.totalorder %s17, 0
    %p65 = por %p63, %p64
    %s67 = sadd.s32 %s66, 1
    %p70 = scmp.eq.s32.totalorder %s11, 1
    %p71 = scmp.ne.s32.totalorder %s66, %s68
    %p72 = scmp.eq.s32.totalorder %s11, 0
    %p73 = por %p71, %p72
    %p74 = scmp.ne.s32.totalorder %s66, %s68
    %p75 = scmp.eq.s32.totalorder %s16, 1
    %p76 = por %p74, %p75
    %p77 = scmp.ne.s32.totalorder %s68, %s69
    %p78 = scmp.eq.s32.totalorder %s16, 0
    %p79 = por %p77, %p78
    %p80 = scmp.ne.s32.totalorder %s68, %s69
    %p81 = scmp.eq.s32.totalorder %s17, 1
    %p82 = por %p80, %p81
    %p84 = scmp.ne.s32.totalorder %s69, %s83
    %p85 = scmp.eq.s32.totalorder %s17, 0
    %p86 = por %p84, %p85
    %s88 = sadd.s32 %s87, 1
    %p91 = scmp.eq.s32.totalorder %s11, 1
    %p92 = scmp.ne.s32.totalorder %s87, %s89
    %p93 = scmp.eq.s32.totalorder %s11, 0
    %p94 = por %p92, %p93
    %p95 = scmp.ne.s32.totalorder %s87, %s89
    %p96 = scmp.eq.s32.totalorder %s16, 1
    %p97 = por %p95, %p96
    %p98 = scmp.ne.s32.totalorder %s89, %s90
    %p99 = scmp.eq.s32.totalorder %s16, 0
    %p100 = por %p98, %p99
    %p101 = scmp.ne.s32.totalorder %s89, %s90
    %p102 = scmp.eq.s32.totalorder %s17, 1
    %p103 = por %p101, %p102
    %p105 = scmp.ne.s32.totalorder %s90, %s104
    %p106 = scmp.eq.s32.totalorder %s17, 0
    %p107 = por %p105, %p106
    %s109 = sadd.s32 %s108, 1
    %p112 = scmp.eq.s32.totalorder %s11, 1
    %p113 = scmp.ne.s32.totalorder %s108, %s110
    %p114 = scmp.eq.s32.totalorder %s11, 0
    %p115 = por %p113, %p114
    %p116 = scmp.ne.s32.totalorder %s108, %s110
    %p117 = scmp.eq.s32.totalorder %s16, 1
    %p118 = por %p116, %p117
    %p119 = scmp.ne.s32.totalorder %s110, %s111
    %p120 = scmp.eq.s32.totalorder %s16, 0
    %p121 = por %p119, %p120
    %p122 = scmp.ne.s32.totalorder %s110, %s111
    %p123 = scmp.eq.s32.totalorder %s17, 1
    %p124 = por %p122, %p123
    %p126 = scmp.ne.s32.totalorder %s111, %s125
    %p127 = scmp.eq.s32.totalorder %s17, 0
    %p128 = por %p126, %p127
    %s129 = ssub.s32 %s11, %s18
    %p130 = scmp.eq.s32.totalorder %s129, 0
    %s132 = sadd.s32 %s131, 1
    %s133 = scalar_select %p130, %s131, %s132
    %p136 = pneg %p130
    %p137 = scmp.eq.s32.totalorder %s11, 1
    %p138 = por %p136, %p137
    %p139 = scmp.ne.s32.totalorder %s131, %s134
    %p140 = scmp.eq.s32.totalorder %s11, 0
    %p141 = por %p139, %p140
    %p142 = scmp.ne.s32.totalorder %s131, %s134
    %p143 = scmp.eq.s32.totalorder %s16, 1
    %p144 = por %p142, %p143
    %p145 = scmp.ne.s32.totalorder %s134, %s135
    %p146 = scmp.eq.s32.totalorder %s16, 0
    %p147 = por %p145, %p146
    %p148 = scmp.ne.s32.totalorder %s134, %s135
    %p149 = scmp.eq.s32.totalorder %s17, 1
    %p150 = por %p148, %p149
    %p152 = scmp.ne.s32.totalorder %s135, %s151
    %p153 = scmp.eq.s32.totalorder %s17, 0
    %p154 = por %p152, %p153
    %p155 = scmp.le.s32.totalorder 1, %s11
    %p156 = scmp.lt.s32.totalorder %s11, 3
    %p157 = pnand %p155, %p156
    %p158 = pneg %p157
    // Predicated region
    $region9: #{_lambda_.6} parent=5 // pred_check
      _
    $region10: #{_lambda_.6} parent=5 // pred_check_branch
      %160 = sbr.rel (%p157) target = $region12
    $region11: #{_lambda_.6} parent=5 // pred_region
      %s161 = ssub.s32 %s11, 1
      // Predicated region
      $region13: #{_lambda_.6} parent=11 // pred_check
        %p162 = pneg %p58
      $region14: #{_lambda_.6} parent=11 // pred_check_branch
        %164 = sbr.rel (%p162) target = $region16
      $region15: #{_lambda_.6} parent=11 // pred_region
        _
      $region16: #{_lambda_.6} parent=11 // pred_fallthru
        _
      // Predicated region
      $region17: #{_lambda_.6} parent=11 // pred_check
        %p165 = pneg %p79
      $region18: #{_lambda_.6} parent=11 // pred_check_branch
        %167 = sbr.rel (%p165) target = $region20
      $region19: #{_lambda_.6} parent=11 // pred_region
        _
      $region20: #{_lambda_.6} parent=11 // pred_fallthru
        _
      // Predicated region
      $region21: #{_lambda_.6} parent=11 // pred_check
        %p168 = pneg %p100
      $region22: #{_lambda_.6} parent=11 // pred_check_branch
        %170 = sbr.rel (%p168) target = $region24
      $region23: #{_lambda_.6} parent=11 // pred_region
        _
      $region24: #{_lambda_.6} parent=11 // pred_fallthru
        _
      // Predicated region
      $region25: #{_lambda_.6} parent=11 // pred_check
        %p171 = pneg %p121
      $region26: #{_lambda_.6} parent=11 // pred_check_branch
        %173 = sbr.rel (%p171) target = $region28
      $region27: #{_lambda_.6} parent=11 // pred_region
        _
      $region28: #{_lambda_.6} parent=11 // pred_fallthru
        _
    $region12: #{_lambda_.6} parent=5 // pred_fallthru
      _
    %p174 = scmp.lt.s32.totalorder %s11, 2
    // Predicated region
    $region29: #{_lambda_.6} parent=5 // pred_check
      %p175 = pneg %p174
    $region30: #{_lambda_.6} parent=5 // pred_check_branch
      %177 = sbr.rel (%p175) target = $region32
    $region31: #{_lambda_.6} parent=5 // pred_region
      // Predicated region
      $region33: #{_lambda_.6} parent=31 // pred_check
        %p178 = pneg %p31
      $region34: #{_lambda_.6} parent=31 // pred_check_branch
        %180 = sbr.rel (%p178) target = $region36
      $region35: #{_lambda_.6} parent=31 // pred_region
        %p181 = scmp.lt.s32.totalorder %s11, 1
        %s182 = scalar_select %p181, %s11, 1
        %s183 = smul.addr %s182, 2
        %s184 = smul.addr %s183, 4
        %s185 = scalar_lea.vmem %s0, %s184
      $region36: #{_lambda_.6} parent=31 // pred_fallthru
        _
    $region32: #{_lambda_.6} parent=5 // pred_fallthru
      _
    %p186 = scmp.le.s32.totalorder 1, %s11
    %p187 = scmp.lt.s32.totalorder %s11, 3
    %p188 = pnand %p186, %p187
    %p189 = pneg %p188
    // Predicated region
    $region37: #{_lambda_.6} parent=5 // pred_check
      _
    $region38: #{_lambda_.6} parent=5 // pred_check_branch
      %191 = sbr.rel (%p188) target = $region40
    $region39: #{_lambda_.6} parent=5 // pred_region
      %s192 = ssub.s32 %s11, 1
      %p193 = scmp.lt.s32.totalorder %s16, 1
      %s194 = scalar_select %p193, %s16, 1
      %s195 = smul.addr %s194, 2
      %s196 = smul.addr %s195, 4
      %s197 = scalar_lea.vmem %s0, %s196
      %p198 = pneg %p37
      %p199 = pneg %p34
      %p200 = pneg %p58
      %p201 = pneg %p55
      %p202 = pneg %p79
      %p203 = pneg %p76
      %p204 = pneg %p100
      %p205 = pneg %p97
      %p206 = pneg %p121
      %p207 = pneg %p118
      %p208 = pneg %p147
      %p209 = pneg %p144
      %p210 = scmp.lt.s32.totalorder %s16, 1
      %s211 = scalar_select %p210, %s16, 1
      %s212 = smul.addr %s211, 4
      %s213 = smul.addr %s212, 4
      %s214 = scalar_lea.vmem %s5, %s213
      %p215 = scmp.lt.s32.totalorder %s16, 1
      %s216 = scalar_select %p215, %s16, 1
      %s217 = smul.addr %s216, 2
      %s218 = smul.addr %s217, 4
      %s219 = scalar_lea.vmem %s0, %s218
      %p220 = scmp.lt.s32.totalorder %s16, 1
      %s221 = scalar_select %p220, %s16, 1
      %s222 = smul.addr %s221, 4
      %s223 = smul.addr %s222, 4
      %s224 = scalar_lea.vmem %s5, %s223
      %v226 = vld [vmem:[%s219] sm:$0xf]
      %v227 = vunpack.c.l.bf16 %v226
      %228 = vst [vmem:[#allocation2] sm:$0xff] %v227
      %v229 = vld [vmem:[%s219] sm:$0xff]
      %v230 = vunpack.c.l.bf16 %v229
      %v231 = vunpack.c.h.bf16 %v229
      %234 = vrot.lane.b32.xlu0 %v230, 127
      %v235 = vpop.permute.xlu0 %234
      %236 = vrot.lane.b32.xlu0 %v231, 127
      %v237 = vpop.permute.xlu0 %236
      %vm238 = vcmask 1039360
      %v239 = vsel %vm238, %v235, %v237
      %241 = vst [vmem:[#allocation2 + $0x8] sm:$0xff] %v239
      %v242 = vld [vmem:[%s219] sm:$0xff]
      %v243 = vunpack.c.l.bf16 %v242
      %v244 = vunpack.c.h.bf16 %v242
      %247 = vrot.lane.b32.xlu0 %v243, 118
      %v248 = vpop.permute.xlu0 %247
      %249 = vrot.lane.b32.xlu0 %v244, 118
      %v250 = vpop.permute.xlu0 %249
      %vm251 = vcmask 965632
      %v252 = vsel %vm251, %v248, %v250
      %254 = vst [vmem:[#allocation2 + $0x10] sm:$0xff] %v252
      %v255 = vld [vmem:[%s219] sm:$0xff]
      %v256 = vunpack.c.l.bf16 %v255
      %v257 = vunpack.c.h.bf16 %v255
      %260 = vrot.lane.b32.xlu0 %v256, 117
      %v261 = vpop.permute.xlu0 %260
      %262 = vrot.lane.b32.xlu0 %v257, 117
      %v263 = vpop.permute.xlu0 %262
      %vm264 = vcmask 957440
      %v265 = vsel %vm264, %v261, %v263
      %267 = vst [vmem:[#allocation2 + $0x18] sm:$0xff] %v265
      %v268 = vld [vmem:[%s1] sm:$0xf]
      %v269 = vld [vmem:[%s1 + $0x4] sm:$0xf]
      %v270 = vld [vmem:[%s1 + $0x8] sm:$0xf]
      %v271 = vld [vmem:[%s1 + $0xc] sm:$0xf]
      %v272 = vld [vmem:[#allocation2] sm:$0xff]
      %v273 = vld [vmem:[#allocation2 + $0x8] sm:$0xff]
      %v274 = vld [vmem:[#allocation2 + $0x10] sm:$0xff]
      %v275 = vld [vmem:[#allocation2 + $0x18] sm:$0xff]
      %v276 = vpack.c.bf16 %v273, %v272
      %v277 = vpack.c.bf16 %v275, %v274
      %v278 = vld [vmem:[%s2] sm:$0xff]
      %v279 = vld [vmem:[%s2 + $0x8] sm:$0xff]
      %v280 = vld [vmem:[%s2 + $0x10] sm:$0xff]
      %v281 = vld [vmem:[%s2 + $0x18] sm:$0xff]
      %283 = vset.pattern.permute.xlu0 0
      %284 = vperm.xlu0 %283, %v278
      %v285 = vpop.permute.xlu0 %284
      %288 = vset.pattern.permute.xlu0 0
      %289 = vperm.xlu0 %288, %v279
      %v290 = vpop.permute.xlu0 %289
      %293 = vset.pattern.permute.xlu0 0
      %294 = vperm.xlu0 %293, %v280
      %v295 = vpop.permute.xlu0 %294
      %298 = vset.pattern.permute.xlu0 0
      %299 = vperm.xlu0 %298, %v281
      %v300 = vpop.permute.xlu0 %299
      %v306 = vunpack.c.l.b16 %v268
      %v307 = vunpack.c.l.b16 %v269
      %v308 = vunpack.c.l.b16 %v270
      %v309 = vunpack.c.l.b16 %v271
      %v310 = vpack.c.b16 %v307, %v306
      %v311 = vpack.c.b16 %v309, %v308
      %vm312 = vcmask 261120
      %v314 = vsel %vm312, %v310, 0
      %v317 = vsel %vm312, %v311, 0
      %319 = vmatprep.subr.bf16.mxu0 0
      %320 = vmatpush1.bf16.msra.mxu0 0
      %321 = vmatprep.subr.bf16.mxu0 0
      %322 = vmatpush1.bf16.msra.mxu0 0
      %323 = vmatprep.subr.bf16.mxu0 0
      %324 = vmatpush1.bf16.msra.mxu0 0
      %325 = vmatprep.subr.bf16.mxu0 0
      %326 = vmatpush1.bf16.msra.mxu0 0
      %327 = vmatprep.subr.bf16.mxu0 0
      %328 = vmatpush1.bf16.msra.mxu0 0
      %329 = vmatprep.subr.bf16.mxu0 0
      %330 = vmatpush1.bf16.msra.mxu0 0
      %331 = vmatprep.subr.bf16.mxu0 0
      %332 = vmatpush1.bf16.msra.mxu0 %v277
      %333 = vmatprep.subr.bf16.mxu0 0
      %334 = vmatpush1.bf16.msra.mxu0 %v276
      %335 = vmatprep.subr.bf16.mxu0 0
      %336 = vmatpush2.bf16.msra.mxu0 0
      %337 = vmatprep.subr.bf16.mxu0 0
      %338 = vmatpush2.bf16.msra.mxu0 0
      %339 = vmatprep.subr.bf16.mxu0 0
      %340 = vmatpush2.bf16.msra.mxu0 0
      %341 = vmatprep.subr.bf16.mxu0 0
      %342 = vmatpush2.bf16.msra.mxu0 0
      %343 = vmatprep.subr.bf16.mxu0 0
      %344 = vmatpush2.bf16.msra.mxu0 0
      %345 = vmatprep.subr.bf16.mxu0 0
      %346 = vmatpush2.bf16.msra.mxu0 0
      %347 = vmatprep.subr.bf16.mxu0 0
      %348 = vmatpush2.bf16.msra.mxu0 0
      %349 = vmatprep.subr.bf16.mxu0 0
      %350 = vmatpush2.bf16.msra.mxu0 0
      %351 = vmatprep.mubr.bf16.mxu0 0
      %352 = vmatmul.mubr.bf16.gmra.mxu0 %v314
      %v353 = vpop.f32.mrf.mxu0
      %v354 = vadd.f32 %v285, %v353
      %v355 = vpop.f32.mrf.mxu0
      %v356 = vpop.f32.mrf.mxu0
      %v357 = vadd.f32 %v290, %v356
      %v358 = vpop.f32.mrf.mxu0
      %359 = vmatprep.mubr.bf16.mxu0 0
      %360 = vmatmul.mubr.bf16.gmra.mxu0 %v317
      %v361 = vpop.f32.mrf.mxu0
      %v362 = vadd.f32 %v295, %v361
      %v363 = vpop.f32.mrf.mxu0
      %v364 = vpop.f32.mrf.mxu0
      %v365 = vadd.f32 %v300, %v364
      %v366 = vpop.f32.mrf.mxu0
      %367 = vdwg.mxu0
      %v368 = vlaneseq
      %v369 = vand.u32 %v368, 127
      %vm370 = vcmp.lt.s32.totalorder %v369, 0
      %v371 = vsub.s32 0, %v369
      %v372 = vsel %vm370, %v371, %v369
      %v373 = vmul.u32.u64.compose %v372, 3435973837
      %v374 = vextract.low.u32 %v373
      %v375 = vextract.high.u32 %v373
      %v376 = vshrl.u32 %v375, 3
      %v377 = vmul.u32 %v376, 10
      %v378 = vsub.s32 %v372, %v377
      %v379 = vsub.s32 0, %v378
      %v380 = vsel %vm370, %v379, %v378
      %vm381 = vcmp.ne.s32.totalorder %v380, 0
      %vm382 = vcmp.lt.s32.totalorder %v380, 0
      %vm383 = vmand %vm382, %vm381
      %v384 = vadd.s32 %v380, 10
      %v385 = vsel %vm383, %v384, %v380
      %vm386 = vcmp.lt.s32.totalorder %v385, 8
      %vm387 = vcmp.lt.s32.totalorder %v369, 80
      %vm388 = vmand %vm386, %vm387
      %v389 = vsel %vm388, 1, 0
      %v390 = vcvt.s32.f32 %v389
      %v391 = vld [vmem:[%s3] sm:$0xff]
      %v392 = vld [vmem:[%s3 + $0x8] sm:$0xff]
      %v393 = vld [vmem:[%s3 + $0x10] sm:$0xff]
      %v394 = vld [vmem:[%s3 + $0x18] sm:$0xff]
      %v395 = vld [vmem:[%s4] sm:$0xff]
      %v396 = vld [vmem:[%s4 + $0x8] sm:$0xff]
      %v397 = vld [vmem:[%s4 + $0x10] sm:$0xff]
      %v398 = vld [vmem:[%s4 + $0x18] sm:$0xff]
      %v399 = vlaneseq
      %v400 = vshrl.u32 %v399, 7
      %v401 = vadd.s32 %v400, 8
      %v402 = vadd.s32 %v400, 16
      %v403 = vadd.s32 %v400, 24
      %vm404 = vcmp.lt.s32.totalorder %v400, 0
      %v405 = vsub.s32 0, %v400
      %v406 = vsel %vm404, %v405, %v400
      %v407 = vshrl.u32 %v406, 3
      %v408 = vand.u32 %v406, 7
      %v409 = vsub.s32 0, %v408
      %v410 = vsel %vm404, %v409, %v408
      %vm411 = vcmp.lt.s32.totalorder %v401, 0
      %v412 = vsub.s32 0, %v401
      %v413 = vsel %vm411, %v412, %v401
      %v414 = vshrl.u32 %v413, 3
      %v415 = vand.u32 %v413, 7
      %v416 = vsub.s32 0, %v415
      %v417 = vsel %vm411, %v416, %v415
      %vm418 = vcmp.lt.s32.totalorder %v402, 0
      %v419 = vsub.s32 0, %v402
      %v420 = vsel %vm418, %v419, %v402
      %v421 = vshrl.u32 %v420, 3
      %v422 = vand.u32 %v420, 7
      %v423 = vsub.s32 0, %v422
      %v424 = vsel %vm418, %v423, %v422
      %vm425 = vcmp.lt.s32.totalorder %v403, 0
      %v426 = vsub.s32 0, %v403
      %v427 = vsel %vm425, %v426, %v403
      %v428 = vshrl.u32 %v427, 3
      %v429 = vand.u32 %v427, 7
      %v430 = vsub.s32 0, %v429
      %v431 = vsel %vm425, %v430, %v429
      %vm432 = vcmp.ne.s32.totalorder %v410, 0
      %vm433 = vcmp.ne.s32.totalorder %v417, 0
      %vm434 = vcmp.ne.s32.totalorder %v424, 0
      %vm435 = vcmp.ne.s32.totalorder %v431, 0
      %vm436 = vcmp.lt.s32.totalorder %v410, 0
      %vm437 = vcmp.lt.s32.totalorder %v417, 0
      %vm438 = vcmp.lt.s32.totalorder %v424, 0
      %vm439 = vcmp.lt.s32.totalorder %v431, 0
      %vm440 = vmand %vm436, %vm432
      %vm441 = vmand %vm437, %vm433
      %vm442 = vmand %vm438, %vm434
      %vm443 = vmand %vm439, %vm435
      %v444 = vadd.s32 %v410, 8
      %v445 = vadd.s32 %v417, 8
      %v446 = vadd.s32 %v424, 8
      %v447 = vadd.s32 %v431, 8
      %v448 = vsel %vm440, %v444, %v410
      %v449 = vsel %vm441, %v445, %v417
      %v450 = vsel %vm442, %v446, %v424
      %v451 = vsel %vm443, %v447, %v431
      %vm452 = vcmp.ge.s32.totalorder %v448, 4
      %vm453 = vcmp.ge.s32.totalorder %v449, 4
      %vm454 = vcmp.ge.s32.totalorder %v450, 4
      %vm455 = vcmp.ge.s32.totalorder %v451, 4
      %v456 = vmul.f32 %v354, %v390
      %v457 = vmul.f32 %v357, %v390
      %v458 = vmul.f32 %v362, %v390
      %v459 = vmul.f32 %v365, %v390
      %460 = vadd.xlane.f32.xlu0 %v456
      %v461 = vpop.xlane.xlu0 %460
      %462 = vadd.xlane.f32.xlu0 %v457
      %v463 = vpop.xlane.xlu0 %462
      %464 = vadd.xlane.f32.xlu0 %v458
      %v465 = vpop.xlane.xlu0 %464
      %466 = vadd.xlane.f32.xlu0 %v459
      %v467 = vpop.xlane.xlu0 %466
      %v468 = vsel %vm452, 0.0, %v461
      %v469 = vsel %vm453, 0.0, %v463
      %v470 = vsel %vm454, 0.0, %v465
      %v471 = vsel %vm455, 0.0, %v467
      %vm472 = vcmask 7168
      %v473 = vsel %vm472, %v468, 0.0
      %v474 = vsel %vm472, %v469, 0.0
      %v475 = vadd.f32 %v473, %v474
      %v476 = vsel %vm472, %v470, 0.0
      %v477 = vadd.f32 %v475, %v476
      %v478 = vsel %vm472, %v471, 0.0
      %v479 = vadd.f32 %v477, %v478
      %480 = vadd.xlane.f32.xlu0 %v479
      %v481 = vpop.xlane.xlu0 %480
      %v482 = vrot.slane %v481, 4
      %v483 = vadd.f32 %v481, %v482
      %v484 = vrot.slane %v483, 2
      %v485 = vadd.f32 %v483, %v484
      %v486 = vrot.slane %v485, 1
      %v487 = vadd.f32 %v485, %v486
      %s488 = vtos %v487
      %v489 = vsel %vm452, %v461, 0.0
      %v490 = vsel %vm453, %v463, 0.0
      %v491 = vsel %vm454, %v465, 0.0
      %v492 = vsel %vm455, %v467, 0.0
      %v493 = vsel %vm472, %v489, 0.0
      %v494 = vsel %vm472, %v490, 0.0
      %v495 = vadd.f32 %v493, %v494
      %v496 = vsel %vm472, %v491, 0.0
      %v497 = vadd.f32 %v495, %v496
      %v498 = vsel %vm472, %v492, 0.0
      %v499 = vadd.f32 %v497, %v498
      %500 = vadd.xlane.f32.xlu0 %v499
      %v501 = vpop.xlane.xlu0 %500
      %v502 = vrot.slane %v501, 4
      %v503 = vadd.f32 %v501, %v502
      %v504 = vrot.slane %v503, 2
      %v505 = vadd.f32 %v503, %v504
      %v506 = vrot.slane %v505, 1
      %v507 = vadd.f32 %v505, %v506
      %s508 = vtos %v507
      %v509 = vstv %s508
      %v510 = vstv %s488
      %v511 = vsel %vm452, %v509, %v510
      %v512 = vsel %vm453, %v509, %v510
      %v513 = vsel %vm454, %v509, %v510
      %v514 = vsel %vm455, %v509, %v510
      %v515 = vmul.f32 %v511, 0.0009765625
      %v516 = vmul.f32 %v512, 0.0009765625
      %v517 = vmul.f32 %v513, 0.0009765625
      %v518 = vmul.f32 %v514, 0.0009765625
      %v519 = vsub.f32 %v354, %v515
      %v520 = vsub.f32 %v357, %v516
      %v521 = vsub.f32 %v362, %v517
      %v522 = vsub.f32 %v365, %v518
      %v523 = vmul.f32 %v519, %v390
      %v524 = vmul.f32 %v520, %v390
      %v525 = vmul.f32 %v521, %v390
      %v526 = vmul.f32 %v522, %v390
      %v527 = vmul.f32 %v523, %v523
      %v528 = vmul.f32 %v524, %v524
      %v529 = vmul.f32 %v525, %v525
      %v530 = vmul.f32 %v526, %v526
      %531 = vadd.xlane.f32.xlu0 %v527
      %v532 = vpop.xlane.xlu0 %531
      %533 = vadd.xlane.f32.xlu0 %v528
      %v534 = vpop.xlane.xlu0 %533
      %535 = vadd.xlane.f32.xlu0 %v529
      %v536 = vpop.xlane.xlu0 %535
      %537 = vadd.xlane.f32.xlu0 %v530
      %v538 = vpop.xlane.xlu0 %537
      %v539 = vsel %vm452, 0.0, %v532
      %v540 = vsel %vm453, 0.0, %v534
      %v541 = vsel %vm454, 0.0, %v536
      %v542 = vsel %vm455, 0.0, %v538
      %v543 = vsel %vm472, %v539, 0.0
      %v544 = vsel %vm472, %v540, 0.0
      %v545 = vadd.f32 %v543, %v544
      %v546 = vsel %vm472, %v541, 0.0
      %v547 = vadd.f32 %v545, %v546
      %v548 = vsel %vm472, %v542, 0.0
      %v549 = vadd.f32 %v547, %v548
      %550 = vadd.xlane.f32.xlu0 %v549
      %v551 = vpop.xlane.xlu0 %550
      %v552 = vrot.slane %v551, 4
      %v553 = vadd.f32 %v551, %v552
      %v554 = vrot.slane %v553, 2
      %v555 = vadd.f32 %v553, %v554
      %v556 = vrot.slane %v555, 1
      %v557 = vadd.f32 %v555, %v556
      %s558 = vtos %v557
      %v559 = vsel %vm452, %v532, 0.0
      %v560 = vsel %vm453, %v534, 0.0
      %v561 = vsel %vm454, %v536, 0.0
      %v562 = vsel %vm455, %v538, 0.0
      %v563 = vsel %vm472, %v559, 0.0
      %v564 = vsel %vm472, %v560, 0.0
      %v565 = vadd.f32 %v563, %v564
      %v566 = vsel %vm472, %v561, 0.0
      %v567 = vadd.f32 %v565, %v566
      %v568 = vsel %vm472, %v562, 0.0
      %v569 = vadd.f32 %v567, %v568
      %570 = vadd.xlane.f32.xlu0 %v569
      %v571 = vpop.xlane.xlu0 %570
      %v572 = vrot.slane %v571, 4
      %v573 = vadd.f32 %v571, %v572
      %v574 = vrot.slane %v573, 2
      %v575 = vadd.f32 %v573, %v574
      %v576 = vrot.slane %v575, 1
      %v577 = vadd.f32 %v575, %v576
      %s578 = vtos %v577
      %v579 = vstv %s578
      %v580 = vstv %s558
      %v581 = vsel %vm452, %v579, %v580
      %v582 = vsel %vm453, %v579, %v580
      %v583 = vsel %vm454, %v579, %v580
      %v584 = vsel %vm455, %v579, %v580
      %v585 = vmul.f32 %v581, 0.0009765625
      %v586 = vmul.f32 %v582, 0.0009765625
      %v587 = vmul.f32 %v583, 0.0009765625
      %v588 = vmul.f32 %v584, 0.0009765625
      %v589 = vadd.f32 %v585, 1e-05
      %v590 = vadd.f32 %v586, 1e-05
      %v591 = vadd.f32 %v587, 1e-05
      %v592 = vadd.f32 %v588, 1e-05
      %v593 = vrsqrt.pop %v589
      %v594 = vrsqrt.pop %v590
      %v595 = vrsqrt.pop %v591
      %v596 = vrsqrt.pop %v592
      %v597 = vmul.f32 %v593, %v391
      %v598 = vmul.f32 %v594, %v392
      %v599 = vmul.f32 %v595, %v393
      %v600 = vmul.f32 %v596, %v394
      %602 = vset.pattern.permute.xlu0 0
      %603 = vperm.xlu0 %602, %v597
      %v604 = vpop.permute.xlu0 %603
      %607 = vset.pattern.permute.xlu0 0
      %608 = vperm.xlu0 %607, %v598
      %v609 = vpop.permute.xlu0 %608
      %612 = vset.pattern.permute.xlu0 0
      %613 = vperm.xlu0 %612, %v599
      %v614 = vpop.permute.xlu0 %613
      %617 = vset.pattern.permute.xlu0 0
      %618 = vperm.xlu0 %617, %v600
      %v619 = vpop.permute.xlu0 %618
      %v621 = vmul.f32 %v519, %v604
      %v622 = vmul.f32 %v520, %v609
      %v623 = vmul.f32 %v521, %v614
      %v624 = vmul.f32 %v522, %v619
      %626 = vset.pattern.permute.xlu0 0
      %627 = vperm.xlu0 %626, %v395
      %v628 = vpop.permute.xlu0 %627
      %631 = vset.pattern.permute.xlu0 0
      %632 = vperm.xlu0 %631, %v396
      %v633 = vpop.permute.xlu0 %632
      %636 = vset.pattern.permute.xlu0 0
      %637 = vperm.xlu0 %636, %v397
      %v638 = vpop.permute.xlu0 %637
      %641 = vset.pattern.permute.xlu0 0
      %642 = vperm.xlu0 %641, %v398
      %v643 = vpop.permute.xlu0 %642
      %v645 = vadd.f32 %v621, %v628
      %v646 = vadd.f32 %v622, %v633
      %v647 = vadd.f32 %v623, %v638
      %v648 = vadd.f32 %v624, %v643
      %vm649 = vcmp.gt.f32.partialorder %v645, 0.0
      %vm650 = vcmp.gt.f32.partialorder %v646, 0.0
      %vm651 = vcmp.gt.f32.partialorder %v647, 0.0
      %vm652 = vcmp.gt.f32.partialorder %v648, 0.0
      %v653 = vmul.f32 %v645, 0.2
      %v654 = vmul.f32 %v646, 0.2
      %v655 = vmul.f32 %v647, 0.2
      %v656 = vmul.f32 %v648, 0.2
      %v657 = vsel %vm649, %v645, %v653
      %v658 = vsel %vm650, %v646, %v654
      %v659 = vsel %vm651, %v647, %v655
      %v660 = vsel %vm652, %v648, %v656
      %v661 = vpack.c.bf16 %v658, %v657
      %v662 = vpack.c.bf16 %v660, %v659
      %v665 = vunpack.c.l.b16 %v661
      %v666 = vunpack.c.h.b16 %v661
      %v667 = vunpack.c.l.b16 %v662
      %v668 = vunpack.c.h.b16 %v662
      %v669 = vpack.c.b16 %v665, %v665
      %v670 = vpack.c.b16 %v666, %v666
      %v671 = vpack.c.b16 %v667, %v667
      %v672 = vpack.c.b16 %v668, %v668
      %677 = vst [vmem:[%s224] sm:$0xf] %v669
      %678 = vst [vmem:[%s224 + $0x4] sm:$0xf] %v670
      %679 = vst [vmem:[%s224 + $0x8] sm:$0xf] %v671
      %680 = vst [vmem:[%s224 + $0xc] sm:$0xf] %v672
      %p681 = scmp.lt.s32.totalorder %s16, 1
      %s682 = scalar_select %p681, %s16, 1
      %s683 = smul.addr %s682, 4
      %s684 = smul.addr %s683, 4
      %s685 = scalar_lea.vmem %s5, %s684
      // Predicated region
      $region41: #{_lambda_.6} parent=39 // pred_check
        %p686 = pneg %p144
      $region42: #{_lambda_.6} parent=39 // pred_check_branch
        %688 = sbr.rel (%p686) target = $region44
      $region43: #{_lambda_.6} parent=39 // pred_region
        _
      $region44: #{_lambda_.6} parent=39 // pred_fallthru
        _
    $region40: #{_lambda_.6} parent=5 // pred_fallthru
      _
    %p689 = scmp.le.s32.totalorder 2, %s11
    // Predicated region
    $region45: #{_lambda_.6} parent=5 // pred_check
      %p690 = pneg %p689
    $region46: #{_lambda_.6} parent=5 // pred_check_branch
      %692 = sbr.rel (%p690) target = $region48
    $region47: #{_lambda_.6} parent=5 // pred_region
      %s693 = ssub.s32 %s11, 2
      // Predicated region
      $region49: #{_lambda_.6} parent=47 // pred_check
        %p694 = pneg %p150
      $region50: #{_lambda_.6} parent=47 // pred_check_branch
        %696 = sbr.rel (%p694) target = $region52
      $region51: #{_lambda_.6} parent=47 // pred_region
        %p697 = scmp.lt.s32.totalorder %s17, 1
        %s698 = scalar_select %p697, %s17, 1
        %s699 = smul.addr %s698, 4
        %s700 = smul.addr %s699, 4
        %s701 = scalar_lea.vmem %s5, %s700
      $region52: #{_lambda_.6} parent=47 // pred_fallthru
        _
    $region48: #{_lambda_.6} parent=5 // pred_fallthru
      _
  $region6: #{_lambda_.6} parent=0 // loop_footer
    %s15 = sadd.s32 1, %s11
  $region7: #{_lambda_.6} parent=0 // loop_footer_branch
    %10 = sbr.rel target = $region3
  $region8: #{_lambda_.6} parent=0 // loop_exit
    _

// kernel: _lambda_.7
$region0: #{_lambda_.7}
  #allocation0 [shape = 'u32[]', space=smem, size = 0x4, offset = 0x4, fixed_abs, tag = 'smem constant byte address 0x4 - core index']
  #allocation1 [shape = 'u32[144,128]{1,0:T(1,128)}', space=vmem, size = 0x12000, scoped, tag = 'internal scratch']
  #allocation2 [shape = 'f32[144,384]{1,0:T(8,128)}', space=vmem, size = 0x36000, scoped, tag = 'scratch operand']
  %s0 = inlined_call_operand.vmem [shape: bf16[2,16,512], index: 0, kind: input, shape index: {}]
  %s1 = inlined_call_operand.vmem [shape: bf16[8,144], index: 1, kind: input, shape index: {}]
  %s2 = inlined_call_operand.vmem [shape: f32[8,1], index: 2, kind: input, shape index: {}]
  %s3 = inlined_call_operand.vmem [shape: f32[8,1], index: 3, kind: input, shape index: {}]
  %s4 = inlined_call_operand.vmem [shape: f32[8,1], index: 4, kind: input, shape index: {}]
  %s5 = inlined_call_operand.vmem [shape: f32[8,8], index: 5, kind: input, shape index: {}]
  %s6 = inlined_call_operand.vmem [shape: f32[8,1], index: 6, kind: input, shape index: {}]
  %s7 = inlined_call_operand.vmem [shape: f32[2,8,384], index: 7, kind: output, shape index: {}]
  %s8 = sld [smem:[#allocation0]]
  $region61: #{_lambda_.7} parent=0
    _
  %s10 = ssub.s32 1, %s8
  %s11 = scalar_select 0, %s10, %s8
  loop: start=0, step=1, limit=4
  $region2: #{_lambda_.7} parent=0 // loop_pre_header
    _
  $region3: #{_lambda_.7} parent=0 // loop_header
    %s13 = sphi 0, %s17
    %p14 = scmp.ge.s32.totalorder %s13, 4
    %s23 = sphi 0, %s25
    %s26 = sphi 0, %s23
    %s27 = sphi 0, %s26
    %s43 = sphi 0, %s27
    %s47 = sphi 0, %s47
    %s49 = sphi 0, %s47
    %s50 = sphi 0, %s49
    %s64 = sphi 0, %s50
    %s68 = sphi 0, %s68
    %s70 = sphi 0, %s68
    %s71 = sphi 0, %s70
    %s85 = sphi 0, %s71
    %s89 = sphi 0, %s89
    %s91 = sphi 0, %s89
    %s92 = sphi 0, %s91
    %s106 = sphi 0, %s92
    %s110 = sphi 0, %s110
    %s112 = sphi 0, %s110
    %s113 = sphi 0, %s112
    %s127 = sphi 0, %s113
    %s131 = sphi 0, %s131
    %s133 = sphi 0, %s131
    %s134 = sphi 0, %s133
    %s148 = sphi 0, %s134
    %s152 = sphi 0, %s152
    %s154 = sphi 0, %s152
    %s155 = sphi 0, %s154
    %s169 = sphi 0, %s155
    %s175 = sphi 0, %s177
    %s178 = sphi 0, %s175
    %s179 = sphi 0, %s178
    %s195 = sphi 0, %s179
  $region4: #{_lambda_.7} parent=0 // loop_header_branch
    %16 = sbr.rel (%p14) target = $region8
  $region5: #{_lambda_.7} parent=0 // loop_body
    %s18 = ssub.s32 %s13, 1
    %s19 = ssub.s32 %s13, 2
    %s20 = sadd.s32 %s13, 1
    %s21 = ssub.s32 %s13, %s20
    %p22 = scmp.eq.s32.totalorder %s21, 0
    %s24 = sadd.s32 %s23, 1
    %s25 = scalar_select %p22, %s23, %s24
    %p28 = pneg %p22
    %p29 = scmp.eq.s32.totalorder %s13, 1
    %p30 = por %p28, %p29
    %p31 = scmp.ne.s32.totalorder %s23, %s26
    %p32 = scmp.eq.s32.totalorder %s13, 0
    %p33 = por %p31, %p32
    %p34 = scmp.ne.s32.totalorder %s23, %s26
    %p35 = scmp.eq.s32.totalorder %s18, 1
    %p36 = por %p34, %p35
    %p37 = scmp.ne.s32.totalorder %s26, %s27
    %p38 = scmp.eq.s32.totalorder %s18, 0
    %p39 = por %p37, %p38
    %p40 = scmp.ne.s32.totalorder %s26, %s27
    %p41 = scmp.eq.s32.totalorder %s19, 1
    %p42 = por %p40, %p41
    %p44 = scmp.ne.s32.totalorder %s27, %s43
    %p45 = scmp.eq.s32.totalorder %s19, 0
    %p46 = por %p44, %p45
    %s48 = sadd.s32 %s47, 1
    %p51 = scmp.eq.s32.totalorder %s13, 1
    %p52 = scmp.ne.s32.totalorder %s47, %s49
    %p53 = scmp.eq.s32.totalorder %s13, 0
    %p54 = por %p52, %p53
    %p55 = scmp.ne.s32.totalorder %s47, %s49
    %p56 = scmp.eq.s32.totalorder %s18, 1
    %p57 = por %p55, %p56
    %p58 = scmp.ne.s32.totalorder %s49, %s50
    %p59 = scmp.eq.s32.totalorder %s18, 0
    %p60 = por %p58, %p59
    %p61 = scmp.ne.s32.totalorder %s49, %s50
    %p62 = scmp.eq.s32.totalorder %s19, 1
    %p63 = por %p61, %p62
    %p65 = scmp.ne.s32.totalorder %s50, %s64
    %p66 = scmp.eq.s32.totalorder %s19, 0
    %p67 = por %p65, %p66
    %s69 = sadd.s32 %s68, 1
    %p72 = scmp.eq.s32.totalorder %s13, 1
    %p73 = scmp.ne.s32.totalorder %s68, %s70
    %p74 = scmp.eq.s32.totalorder %s13, 0
    %p75 = por %p73, %p74
    %p76 = scmp.ne.s32.totalorder %s68, %s70
    %p77 = scmp.eq.s32.totalorder %s18, 1
    %p78 = por %p76, %p77
    %p79 = scmp.ne.s32.totalorder %s70, %s71
    %p80 = scmp.eq.s32.totalorder %s18, 0
    %p81 = por %p79, %p80
    %p82 = scmp.ne.s32.totalorder %s70, %s71
    %p83 = scmp.eq.s32.totalorder %s19, 1
    %p84 = por %p82, %p83
    %p86 = scmp.ne.s32.totalorder %s71, %s85
    %p87 = scmp.eq.s32.totalorder %s19, 0
    %p88 = por %p86, %p87
    %s90 = sadd.s32 %s89, 1
    %p93 = scmp.eq.s32.totalorder %s13, 1
    %p94 = scmp.ne.s32.totalorder %s89, %s91
    %p95 = scmp.eq.s32.totalorder %s13, 0
    %p96 = por %p94, %p95
    %p97 = scmp.ne.s32.totalorder %s89, %s91
    %p98 = scmp.eq.s32.totalorder %s18, 1
    %p99 = por %p97, %p98
    %p100 = scmp.ne.s32.totalorder %s91, %s92
    %p101 = scmp.eq.s32.totalorder %s18, 0
    %p102 = por %p100, %p101
    %p103 = scmp.ne.s32.totalorder %s91, %s92
    %p104 = scmp.eq.s32.totalorder %s19, 1
    %p105 = por %p103, %p104
    %p107 = scmp.ne.s32.totalorder %s92, %s106
    %p108 = scmp.eq.s32.totalorder %s19, 0
    %p109 = por %p107, %p108
    %s111 = sadd.s32 %s110, 1
    %p114 = scmp.eq.s32.totalorder %s13, 1
    %p115 = scmp.ne.s32.totalorder %s110, %s112
    %p116 = scmp.eq.s32.totalorder %s13, 0
    %p117 = por %p115, %p116
    %p118 = scmp.ne.s32.totalorder %s110, %s112
    %p119 = scmp.eq.s32.totalorder %s18, 1
    %p120 = por %p118, %p119
    %p121 = scmp.ne.s32.totalorder %s112, %s113
    %p122 = scmp.eq.s32.totalorder %s18, 0
    %p123 = por %p121, %p122
    %p124 = scmp.ne.s32.totalorder %s112, %s113
    %p125 = scmp.eq.s32.totalorder %s19, 1
    %p126 = por %p124, %p125
    %p128 = scmp.ne.s32.totalorder %s113, %s127
    %p129 = scmp.eq.s32.totalorder %s19, 0
    %p130 = por %p128, %p129
    %s132 = sadd.s32 %s131, 1
    %p135 = scmp.eq.s32.totalorder %s13, 1
    %p136 = scmp.ne.s32.totalorder %s131, %s133
    %p137 = scmp.eq.s32.totalorder %s13, 0
    %p138 = por %p136, %p137
    %p139 = scmp.ne.s32.totalorder %s131, %s133
    %p140 = scmp.eq.s32.totalorder %s18, 1
    %p141 = por %p139, %p140
    %p142 = scmp.ne.s32.totalorder %s133, %s134
    %p143 = scmp.eq.s32.totalorder %s18, 0
    %p144 = por %p142, %p143
    %p145 = scmp.ne.s32.totalorder %s133, %s134
    %p146 = scmp.eq.s32.totalorder %s19, 1
    %p147 = por %p145, %p146
    %p149 = scmp.ne.s32.totalorder %s134, %s148
    %p150 = scmp.eq.s32.totalorder %s19, 0
    %p151 = por %p149, %p150
    %s153 = sadd.s32 %s152, 1
    %p156 = scmp.eq.s32.totalorder %s13, 1
    %p157 = scmp.ne.s32.totalorder %s152, %s154
    %p158 = scmp.eq.s32.totalorder %s13, 0
    %p159 = por %p157, %p158
    %p160 = scmp.ne.s32.totalorder %s152, %s154
    %p161 = scmp.eq.s32.totalorder %s18, 1
    %p162 = por %p160, %p161
    %p163 = scmp.ne.s32.totalorder %s154, %s155
    %p164 = scmp.eq.s32.totalorder %s18, 0
    %p165 = por %p163, %p164
    %p166 = scmp.ne.s32.totalorder %s154, %s155
    %p167 = scmp.eq.s32.totalorder %s19, 1
    %p168 = por %p166, %p167
    %p170 = scmp.ne.s32.totalorder %s155, %s169
    %p171 = scmp.eq.s32.totalorder %s19, 0
    %p172 = por %p170, %p171
    %s173 = ssub.s32 %s13, %s20
    %p174 = scmp.eq.s32.totalorder %s173, 0
    %s176 = sadd.s32 %s175, 1
    %s177 = scalar_select %p174, %s175, %s176
    %p180 = pneg %p174
    %p181 = scmp.eq.s32.totalorder %s13, 1
    %p182 = por %p180, %p181
    %p183 = scmp.ne.s32.totalorder %s175, %s178
    %p184 = scmp.eq.s32.totalorder %s13, 0
    %p185 = por %p183, %p184
    %p186 = scmp.ne.s32.totalorder %s175, %s178
    %p187 = scmp.eq.s32.totalorder %s18, 1
    %p188 = por %p186, %p187
    %p189 = scmp.ne.s32.totalorder %s178, %s179
    %p190 = scmp.eq.s32.totalorder %s18, 0
    %p191 = por %p189, %p190
    %p192 = scmp.ne.s32.totalorder %s178, %s179
    %p193 = scmp.eq.s32.totalorder %s19, 1
    %p194 = por %p192, %p193
    %p196 = scmp.ne.s32.totalorder %s179, %s195
    %p197 = scmp.eq.s32.totalorder %s19, 0
    %p198 = por %p196, %p197
    %p199 = scmp.le.s32.totalorder 1, %s13
    %p200 = scmp.lt.s32.totalorder %s13, 3
    %p201 = pnand %p199, %p200
    %p202 = pneg %p201
    // Predicated region
    $region9: #{_lambda_.7} parent=5 // pred_check
      _
    $region10: #{_lambda_.7} parent=5 // pred_check_branch
      %204 = sbr.rel (%p201) target = $region12
    $region11: #{_lambda_.7} parent=5 // pred_region
      %s205 = ssub.s32 %s13, 1
      // Predicated region
      $region13: #{_lambda_.7} parent=11 // pred_check
        %p206 = pneg %p60
      $region14: #{_lambda_.7} parent=11 // pred_check_branch
        %208 = sbr.rel (%p206) target = $region16
      $region15: #{_lambda_.7} parent=11 // pred_region
        _
      $region16: #{_lambda_.7} parent=11 // pred_fallthru
        _
      // Predicated region
      $region17: #{_lambda_.7} parent=11 // pred_check
        %p209 = pneg %p81
      $region18: #{_lambda_.7} parent=11 // pred_check_branch
        %211 = sbr.rel (%p209) target = $region20
      $region19: #{_lambda_.7} parent=11 // pred_region
        _
      $region20: #{_lambda_.7} parent=11 // pred_fallthru
        _
      // Predicated region
      $region21: #{_lambda_.7} parent=11 // pred_check
        %p212 = pneg %p102
      $region22: #{_lambda_.7} parent=11 // pred_check_branch
        %214 = sbr.rel (%p212) target = $region24
      $region23: #{_lambda_.7} parent=11 // pred_region
        _
      $region24: #{_lambda_.7} parent=11 // pred_fallthru
        _
      // Predicated region
      $region25: #{_lambda_.7} parent=11 // pred_check
        %p215 = pneg %p123
      $region26: #{_lambda_.7} parent=11 // pred_check_branch
        %217 = sbr.rel (%p215) target = $region28
      $region27: #{_lambda_.7} parent=11 // pred_region
        _
      $region28: #{_lambda_.7} parent=11 // pred_fallthru
        _
      // Predicated region
      $region29: #{_lambda_.7} parent=11 // pred_check
        %p218 = pneg %p144
      $region30: #{_lambda_.7} parent=11 // pred_check_branch
        %220 = sbr.rel (%p218) target = $region32
      $region31: #{_lambda_.7} parent=11 // pred_region
        _
      $region32: #{_lambda_.7} parent=11 // pred_fallthru
        _
      // Predicated region
      $region33: #{_lambda_.7} parent=11 // pred_check
        %p221 = pneg %p165
      $region34: #{_lambda_.7} parent=11 // pred_check_branch
        %223 = sbr.rel (%p221) target = $region36
      $region35: #{_lambda_.7} parent=11 // pred_region
        _
      $region36: #{_lambda_.7} parent=11 // pred_fallthru
        _
    $region12: #{_lambda_.7} parent=5 // pred_fallthru
      _
    %p224 = scmp.lt.s32.totalorder %s13, 2
    // Predicated region
    $region37: #{_lambda_.7} parent=5 // pred_check
      %p225 = pneg %p224
    $region38: #{_lambda_.7} parent=5 // pred_check_branch
      %227 = sbr.rel (%p225) target = $region40
    $region39: #{_lambda_.7} parent=5 // pred_region
      // Predicated region
      $region41: #{_lambda_.7} parent=39 // pred_check
        %p228 = pneg %p33
      $region42: #{_lambda_.7} parent=39 // pred_check_branch
        %230 = sbr.rel (%p228) target = $region44
      $region43: #{_lambda_.7} parent=39 // pred_region
        %p231 = scmp.lt.s32.totalorder %s13, 1
        %s232 = scalar_select %p231, %s13, 1
        %s233 = smul.addr %s232, 8
        %s234 = smul.addr %s233, 4
        %s235 = scalar_lea.vmem %s0, %s234
      $region44: #{_lambda_.7} parent=39 // pred_fallthru
        _
    $region40: #{_lambda_.7} parent=5 // pred_fallthru
      _
    %p236 = scmp.le.s32.totalorder 1, %s13
    %p237 = scmp.lt.s32.totalorder %s13, 3
    %p238 = pnand %p236, %p237
    %p239 = pneg %p238
    // Predicated region
    $region45: #{_lambda_.7} parent=5 // pred_check
      _
    $region46: #{_lambda_.7} parent=5 // pred_check_branch
      %241 = sbr.rel (%p238) target = $region48
    $region47: #{_lambda_.7} parent=5 // pred_region
      %s242 = ssub.s32 %s13, 1
      %p243 = scmp.lt.s32.totalorder %s18, 1
      %s244 = scalar_select %p243, %s18, 1
      %s245 = smul.addr %s244, 8
      %s246 = smul.addr %s245, 4
      %s247 = scalar_lea.vmem %s0, %s246
      %p248 = pneg %p39
      %p249 = pneg %p36
      %p250 = pneg %p60
      %p251 = pneg %p57
      %p252 = pneg %p81
      %p253 = pneg %p78
      %p254 = pneg %p102
      %p255 = pneg %p99
      %p256 = pneg %p123
      %p257 = pneg %p120
      %p258 = pneg %p144
      %p259 = pneg %p141
      %p260 = pneg %p165
      %p261 = pneg %p162
      %p262 = pneg %p191
      %p263 = pneg %p188
      %p264 = scmp.lt.s32.totalorder %s18, 1
      %s265 = scalar_select %p264, %s18, 1
      %s266 = smul.addr %s265, 3
      %s267 = smul.addr %s266, 8
      %s268 = scalar_lea.vmem %s7, %s267
      %p269 = scmp.lt.s32.totalorder %s18, 1
      %s270 = scalar_select %p269, %s18, 1
      %s271 = smul.addr %s270, 8
      %s272 = smul.addr %s271, 4
      %s273 = scalar_lea.vmem %s0, %s272
      %p274 = scmp.lt.s32.totalorder %s18, 1
      %s275 = scalar_select %p274, %s18, 1
      %s276 = smul.addr %s275, 3
      %s277 = smul.addr %s276, 8
      %s278 = scalar_lea.vmem %s7, %s277
      %v280 = vld [vmem:[%s273] sm:$0xff]
      %v281 = vld [vmem:[%s273 + $0x8] sm:$0xf]
      %v282 = vld [vmem:[%s273 + $0x10] sm:$0xff]
      %v283 = vld [vmem:[%s273 + $0x18] sm:$0xf]
      %v284 = vunpack.c.l.bf16 %v280
      %v285 = vunpack.c.h.bf16 %v280
      %v286 = vunpack.c.l.bf16 %v281
      %v287 = vunpack.c.l.bf16 %v282
      %v288 = vunpack.c.h.bf16 %v282
      %v289 = vunpack.c.l.bf16 %v283
      %290 = vst [vmem:[#allocation2] sm:$0xff] %v284
      %291 = vst [vmem:[#allocation2 + $0x8] sm:$0xff] %v285
      %292 = vst [vmem:[#allocation2 + $0x10] sm:$0xff] %v286
      %293 = vst [vmem:[#allocation2 + $0x18] sm:$0xff] %v287
      %294 = vst [vmem:[#allocation2 + $0x20] sm:$0xff] %v288
      %295 = vst [vmem:[#allocation2 + $0x28] sm:$0xff] %v289
      %v296 = vld [vmem:[%s273] sm:$0xff]
      %v297 = vld [vmem:[%s273 + $0x8] sm:$0xff]
      %v298 = vld [vmem:[%s273 + $0x10] sm:$0xff]
      %v299 = vld [vmem:[%s273 + $0x18] sm:$0xff]
      %v300 = vunpack.c.l.bf16 %v296
      %v301 = vunpack.c.h.bf16 %v296
      %v302 = vunpack.c.l.bf16 %v297
      %v303 = vunpack.c.h.bf16 %v297
      %v304 = vunpack.c.l.bf16 %v298
      %v305 = vunpack.c.h.bf16 %v298
      %v306 = vunpack.c.l.bf16 %v299
      %v307 = vunpack.c.h.bf16 %v299
      %316 = vrot.lane.b32.xlu0 %v300, 127
      %v317 = vpop.permute.xlu0 %316
      %318 = vrot.lane.b32.xlu0 %v301, 127
      %v319 = vpop.permute.xlu0 %318
      %320 = vrot.lane.b32.xlu0 %v302, 127
      %v321 = vpop.permute.xlu0 %320
      %322 = vrot.lane.b32.xlu0 %v303, 127
      %v323 = vpop.permute.xlu0 %322
      %324 = vrot.lane.b32.xlu0 %v304, 127
      %v325 = vpop.permute.xlu0 %324
      %326 = vrot.lane.b32.xlu0 %v305, 127
      %v327 = vpop.permute.xlu0 %326
      %328 = vrot.lane.b32.xlu0 %v306, 127
      %v329 = vpop.permute.xlu0 %328
      %330 = vrot.lane.b32.xlu0 %v307, 127
      %v331 = vpop.permute.xlu0 %330
      %vm332 = vcmask 1039360
      %v333 = vsel %vm332, %v317, %v319
      %v334 = vsel %vm332, %v319, %v321
      %v335 = vsel %vm332, %v321, %v323
      %v336 = vsel %vm332, %v325, %v327
      %v337 = vsel %vm332, %v327, %v329
      %v338 = vsel %vm332, %v329, %v331
      %345 = vst [vmem:[#allocation2 + $0x30] sm:$0xff] %v333
      %346 = vst [vmem:[#allocation2 + $0x38] sm:$0xff] %v334
      %347 = vst [vmem:[#allocation2 + $0x40] sm:$0xff] %v335
      %348 = vst [vmem:[#allocation2 + $0x48] sm:$0xff] %v336
      %349 = vst [vmem:[#allocation2 + $0x50] sm:$0xff] %v337
      %350 = vst [vmem:[#allocation2 + $0x58] sm:$0xff] %v338
      %v351 = vld [vmem:[%s273] sm:$0xff]
      %v352 = vld [vmem:[%s273 + $0x8] sm:$0xff]
      %v353 = vld [vmem:[%s273 + $0x10] sm:$0xff]
      %v354 = vld [vmem:[%s273 + $0x18] sm:$0xff]
      %v355 = vunpack.c.l.bf16 %v351
      %v356 = vunpack.c.h.bf16 %v351
      %v357 = vunpack.c.l.bf16 %v352
      %v358 = vunpack.c.h.bf16 %v352
      %v359 = vunpack.c.l.bf16 %v353
      %v360 = vunpack.c.h.bf16 %v353
      %v361 = vunpack.c.l.bf16 %v354
      %v362 = vunpack.c.h.bf16 %v354
      %371 = vrot.lane.b32.xlu0 %v355, 126
      %v372 = vpop.permute.xlu0 %371
      %373 = vrot.lane.b32.xlu0 %v356, 126
      %v374 = vpop.permute.xlu0 %373
      %375 = vrot.lane.b32.xlu0 %v357, 126
      %v376 = vpop.permute.xlu0 %375
      %377 = vrot.lane.b32.xlu0 %v358, 126
      %v378 = vpop.permute.xlu0 %377
      %379 = vrot.lane.b32.xlu0 %v359, 126
      %v380 = vpop.permute.xlu0 %379
      %381 = vrot.lane.b32.xlu0 %v360, 126
      %v382 = vpop.permute.xlu0 %381
      %383 = vrot.lane.b32.xlu0 %v361, 126
      %v384 = vpop.permute.xlu0 %383
      %385 = vrot.lane.b32.xlu0 %v362, 126
      %v386 = vpop.permute.xlu0 %385
      %vm387 = vcmask 1031168
      %v388 = vsel %vm387, %v372, %v374
      %v389 = vsel %vm387, %v374, %v376
      %v390 = vsel %vm387, %v376, %v378
      %v391 = vsel %vm387, %v380, %v382
      %v392 = vsel %vm387, %v382, %v384
      %v393 = vsel %vm387, %v384, %v386
      %400 = vst [vmem:[#allocation2 + $0x60] sm:$0xff] %v388
      %401 = vst [vmem:[#allocation2 + $0x68] sm:$0xff] %v389
      %402 = vst [vmem:[#allocation2 + $0x70] sm:$0xff] %v390
      %403 = vst [vmem:[#allocation2 + $0x78] sm:$0xff] %v391
      %404 = vst [vmem:[#allocation2 + $0x80] sm:$0xff] %v392
      %405 = vst [vmem:[#allocation2 + $0x88] sm:$0xff] %v393
      %v406 = vld [vmem:[%s273] sm:$0xff]
      %v407 = vld [vmem:[%s273 + $0x8] sm:$0xff]
      %v408 = vld [vmem:[%s273 + $0x10] sm:$0xff]
      %v409 = vld [vmem:[%s273 + $0x18] sm:$0xff]
      %v410 = vunpack.c.l.bf16 %v406
      %v411 = vunpack.c.h.bf16 %v406
      %v412 = vunpack.c.l.bf16 %v407
      %v413 = vunpack.c.h.bf16 %v407
      %v414 = vunpack.c.l.bf16 %v408
      %v415 = vunpack.c.h.bf16 %v408
      %v416 = vunpack.c.l.bf16 %v409
      %v417 = vunpack.c.h.bf16 %v409
      %426 = vrot.lane.b32.xlu0 %v410, 110
      %v427 = vpop.permute.xlu0 %426
      %428 = vrot.lane.b32.xlu0 %v411, 110
      %v429 = vpop.permute.xlu0 %428
      %430 = vrot.lane.b32.xlu0 %v412, 110
      %v431 = vpop.permute.xlu0 %430
      %432 = vrot.lane.b32.xlu0 %v413, 110
      %v433 = vpop.permute.xlu0 %432
      %434 = vrot.lane.b32.xlu0 %v414, 110
      %v435 = vpop.permute.xlu0 %434
      %436 = vrot.lane.b32.xlu0 %v415, 110
      %v437 = vpop.permute.xlu0 %436
      %438 = vrot.lane.b32.xlu0 %v416, 110
      %v439 = vpop.permute.xlu0 %438
      %440 = vrot.lane.b32.xlu0 %v417, 110
      %v441 = vpop.permute.xlu0 %440
      %vm442 = vcmask 900096
      %v443 = vsel %vm442, %v427, %v429
      %v444 = vsel %vm442, %v429, %v431
      %v445 = vsel %vm442, %v431, %v433
      %v446 = vsel %vm442, %v435, %v437
      %v447 = vsel %vm442, %v437, %v439
      %v448 = vsel %vm442, %v439, %v441
      %455 = vst [vmem:[#allocation2 + $0x90] sm:$0xff] %v443
      %456 = vst [vmem:[#allocation2 + $0x98] sm:$0xff] %v444
      %457 = vst [vmem:[#allocation2 + $0xa0] sm:$0xff] %v445
      %458 = vst [vmem:[#allocation2 + $0xa8] sm:$0xff] %v446
      %459 = vst [vmem:[#allocation2 + $0xb0] sm:$0xff] %v447
      %460 = vst [vmem:[#allocation2 + $0xb8] sm:$0xff] %v448
      %v461 = vld [vmem:[%s273] sm:$0xff]
      %v462 = vld [vmem:[%s273 + $0x8] sm:$0xff]
      %v463 = vld [vmem:[%s273 + $0x10] sm:$0xff]
      %v464 = vld [vmem:[%s273 + $0x18] sm:$0xff]
      %v465 = vunpack.c.l.bf16 %v461
      %v466 = vunpack.c.h.bf16 %v461
      %v467 = vunpack.c.l.bf16 %v462
      %v468 = vunpack.c.h.bf16 %v462
      %v469 = vunpack.c.l.bf16 %v463
      %v470 = vunpack.c.h.bf16 %v463
      %v471 = vunpack.c.l.bf16 %v464
      %v472 = vunpack.c.h.bf16 %v464
      %481 = vrot.lane.b32.xlu0 %v465, 109
      %v482 = vpop.permute.xlu0 %481
      %483 = vrot.lane.b32.xlu0 %v466, 109
      %v484 = vpop.permute.xlu0 %483
      %485 = vrot.lane.b32.xlu0 %v467, 109
      %v486 = vpop.permute.xlu0 %485
      %487 = vrot.lane.b32.xlu0 %v468, 109
      %v488 = vpop.permute.xlu0 %487
      %489 = vrot.lane.b32.xlu0 %v469, 109
      %v490 = vpop.permute.xlu0 %489
      %491 = vrot.lane.b32.xlu0 %v470, 109
      %v492 = vpop.permute.xlu0 %491
      %493 = vrot.lane.b32.xlu0 %v471, 109
      %v494 = vpop.permute.xlu0 %493
      %495 = vrot.lane.b32.xlu0 %v472, 109
      %v496 = vpop.permute.xlu0 %495
      %vm497 = vcmask 891904
      %v498 = vsel %vm497, %v482, %v484
      %v499 = vsel %vm497, %v484, %v486
      %v500 = vsel %vm497, %v486, %v488
      %v501 = vsel %vm497, %v490, %v492
      %v502 = vsel %vm497, %v492, %v494
      %v503 = vsel %vm497, %v494, %v496
      %510 = vst [vmem:[#allocation2 + $0xc0] sm:$0xff] %v498
      %511 = vst [vmem:[#allocation2 + $0xc8] sm:$0xff] %v499
      %512 = vst [vmem:[#allocation2 + $0xd0] sm:$0xff] %v500
      %513 = vst [vmem:[#allocation2 + $0xd8] sm:$0xff] %v501
      %514 = vst [vmem:[#allocation2 + $0xe0] sm:$0xff] %v502
      %515 = vst [vmem:[#allocation2 + $0xe8] sm:$0xff] %v503
      %v516 = vld [vmem:[%s273] sm:$0xff]
      %v517 = vld [vmem:[%s273 + $0x8] sm:$0xff]
      %v518 = vld [vmem:[%s273 + $0x10] sm:$0xff]
      %v519 = vld [vmem:[%s273 + $0x18] sm:$0xff]
      %v520 = vunpack.c.l.bf16 %v516
      %v521 = vunpack.c.h.bf16 %v516
      %v522 = vunpack.c.l.bf16 %v517
      %v523 = vunpack.c.h.bf16 %v517
      %v524 = vunpack.c.l.bf16 %v518
      %v525 = vunpack.c.h.bf16 %v518
      %v526 = vunpack.c.l.bf16 %v519
      %v527 = vunpack.c.h.bf16 %v519
      %536 = vrot.lane.b32.xlu0 %v520, 108
      %v537 = vpop.permute.xlu0 %536
      %538 = vrot.lane.b32.xlu0 %v521, 108
      %v539 = vpop.permute.xlu0 %538
      %540 = vrot.lane.b32.xlu0 %v522, 108
      %v541 = vpop.permute.xlu0 %540
      %542 = vrot.lane.b32.xlu0 %v523, 108
      %v543 = vpop.permute.xlu0 %542
      %544 = vrot.lane.b32.xlu0 %v524, 108
      %v545 = vpop.permute.xlu0 %544
      %546 = vrot.lane.b32.xlu0 %v525, 108
      %v547 = vpop.permute.xlu0 %546
      %548 = vrot.lane.b32.xlu0 %v526, 108
      %v549 = vpop.permute.xlu0 %548
      %550 = vrot.lane.b32.xlu0 %v527, 108
      %v551 = vpop.permute.xlu0 %550
      %vm552 = vcmask 883712
      %v553 = vsel %vm552, %v537, %v539
      %v554 = vsel %vm552, %v539, %v541
      %v555 = vsel %vm552, %v541, %v543
      %v556 = vsel %vm552, %v545, %v547
      %v557 = vsel %vm552, %v547, %v549
      %v558 = vsel %vm552, %v549, %v551
      %565 = vst [vmem:[#allocation2 + $0xf0] sm:$0xff] %v553
      %566 = vst [vmem:[#allocation2 + $0xf8] sm:$0xff] %v554
      %567 = vst [vmem:[#allocation2 + $0x100] sm:$0xff] %v555
      %568 = vst [vmem:[#allocation2 + $0x108] sm:$0xff] %v556
      %569 = vst [vmem:[#allocation2 + $0x110] sm:$0xff] %v557
      %570 = vst [vmem:[#allocation2 + $0x118] sm:$0xff] %v558
      %v571 = vld [vmem:[%s273] sm:$0xff]
      %v572 = vld [vmem:[%s273 + $0x8] sm:$0xff]
      %v573 = vld [vmem:[%s273 + $0x10] sm:$0xff]
      %v574 = vld [vmem:[%s273 + $0x18] sm:$0xff]
      %v575 = vunpack.c.l.bf16 %v571
      %v576 = vunpack.c.h.bf16 %v571
      %v577 = vunpack.c.l.bf16 %v572
      %v578 = vunpack.c.h.bf16 %v572
      %v579 = vunpack.c.l.bf16 %v573
      %v580 = vunpack.c.h.bf16 %v573
      %v581 = vunpack.c.l.bf16 %v574
      %v582 = vunpack.c.h.bf16 %v574
      %591 = vrot.lane.b32.xlu0 %v575, 92
      %v592 = vpop.permute.xlu0 %591
      %593 = vrot.lane.b32.xlu0 %v576, 92
      %v594 = vpop.permute.xlu0 %593
      %595 = vrot.lane.b32.xlu0 %v577, 92
      %v596 = vpop.permute.xlu0 %595
      %597 = vrot.lane.b32.xlu0 %v578, 92
      %v598 = vpop.permute.xlu0 %597
      %599 = vrot.lane.b32.xlu0 %v579, 92
      %v600 = vpop.permute.xlu0 %599
      %601 = vrot.lane.b32.xlu0 %v580, 92
      %v602 = vpop.permute.xlu0 %601
      %603 = vrot.lane.b32.xlu0 %v581, 92
      %v604 = vpop.permute.xlu0 %603
      %605 = vrot.lane.b32.xlu0 %v582, 92
      %v606 = vpop.permute.xlu0 %605
      %vm607 = vcmask 752640
      %v608 = vsel %vm607, %v592, %v594
      %v609 = vsel %vm607, %v594, %v596
      %v610 = vsel %vm607, %v596, %v598
      %v611 = vsel %vm607, %v600, %v602
      %v612 = vsel %vm607, %v602, %v604
      %v613 = vsel %vm607, %v604, %v606
      %620 = vst [vmem:[#allocation2 + $0x120] sm:$0xff] %v608
      %621 = vst [vmem:[#allocation2 + $0x128] sm:$0xff] %v609
      %622 = vst [vmem:[#allocation2 + $0x130] sm:$0xff] %v610
      %623 = vst [vmem:[#allocation2 + $0x138] sm:$0xff] %v611
      %624 = vst [vmem:[#allocation2 + $0x140] sm:$0xff] %v612
      %625 = vst [vmem:[#allocation2 + $0x148] sm:$0xff] %v613
      %v626 = vld [vmem:[%s273] sm:$0xff]
      %v627 = vld [vmem:[%s273 + $0x8] sm:$0xff]
      %v628 = vld [vmem:[%s273 + $0x10] sm:$0xff]
      %v629 = vld [vmem:[%s273 + $0x18] sm:$0xff]
      %v630 = vunpack.c.l.bf16 %v626
      %v631 = vunpack.c.h.bf16 %v626
      %v632 = vunpack.c.l.bf16 %v627
      %v633 = vunpack.c.h.bf16 %v627
      %v634 = vunpack.c.l.bf16 %v628
      %v635 = vunpack.c.h.bf16 %v628
      %v636 = vunpack.c.l.bf16 %v629
      %v637 = vunpack.c.h.bf16 %v629
      %646 = vrot.lane.b32.xlu0 %v630, 91
      %v647 = vpop.permute.xlu0 %646
      %648 = vrot.lane.b32.xlu0 %v631, 91
      %v649 = vpop.permute.xlu0 %648
      %650 = vrot.lane.b32.xlu0 %v632, 91
      %v651 = vpop.permute.xlu0 %650
      %652 = vrot.lane.b32.xlu0 %v633, 91
      %v653 = vpop.permute.xlu0 %652
      %654 = vrot.lane.b32.xlu0 %v634, 91
      %v655 = vpop.permute.xlu0 %654
      %656 = vrot.lane.b32.xlu0 %v635, 91
      %v657 = vpop.permute.xlu0 %656
      %658 = vrot.lane.b32.xlu0 %v636, 91
      %v659 = vpop.permute.xlu0 %658
      %660 = vrot.lane.b32.xlu0 %v637, 91
      %v661 = vpop.permute.xlu0 %660
      %vm662 = vcmask 744448
      %v663 = vsel %vm662, %v647, %v649
      %v664 = vsel %vm662, %v649, %v651
      %v665 = vsel %vm662, %v651, %v653
      %v666 = vsel %vm662, %v655, %v657
      %v667 = vsel %vm662, %v657, %v659
      %v668 = vsel %vm662, %v659, %v661
      %675 = vst [vmem:[#allocation2 + $0x150] sm:$0xff] %v663
      %676 = vst [vmem:[#allocation2 + $0x158] sm:$0xff] %v664
      %677 = vst [vmem:[#allocation2 + $0x160] sm:$0xff] %v665
      %678 = vst [vmem:[#allocation2 + $0x168] sm:$0xff] %v666
      %679 = vst [vmem:[#allocation2 + $0x170] sm:$0xff] %v667
      %680 = vst [vmem:[#allocation2 + $0x178] sm:$0xff] %v668
      %v681 = vld [vmem:[%s273] sm:$0xff]
      %v682 = vld [vmem:[%s273 + $0x8] sm:$0xff]
      %v683 = vld [vmem:[%s273 + $0x10] sm:$0xff]
      %v684 = vld [vmem:[%s273 + $0x18] sm:$0xff]
      %v685 = vunpack.c.l.bf16 %v681
      %v686 = vunpack.c.h.bf16 %v681
      %v687 = vunpack.c.l.bf16 %v682
      %v688 = vunpack.c.h.bf16 %v682
      %v689 = vunpack.c.l.bf16 %v683
      %v690 = vunpack.c.h.bf16 %v683
      %v691 = vunpack.c.l.bf16 %v684
      %v692 = vunpack.c.h.bf16 %v684
      %701 = vrot.lane.b32.xlu0 %v685, 90
      %v702 = vpop.permute.xlu0 %701
      %703 = vrot.lane.b32.xlu0 %v686, 90
      %v704 = vpop.permute.xlu0 %703
      %705 = vrot.lane.b32.xlu0 %v687, 90
      %v706 = vpop.permute.xlu0 %705
      %707 = vrot.lane.b32.xlu0 %v688, 90
      %v708 = vpop.permute.xlu0 %707
      %709 = vrot.lane.b32.xlu0 %v689, 90
      %v710 = vpop.permute.xlu0 %709
      %711 = vrot.lane.b32.xlu0 %v690, 90
      %v712 = vpop.permute.xlu0 %711
      %713 = vrot.lane.b32.xlu0 %v691, 90
      %v714 = vpop.permute.xlu0 %713
      %715 = vrot.lane.b32.xlu0 %v692, 90
      %v716 = vpop.permute.xlu0 %715
      %vm717 = vcmask 736256
      %v718 = vsel %vm717, %v702, %v704
      %v719 = vsel %vm717, %v704, %v706
      %v720 = vsel %vm717, %v706, %v708
      %v721 = vsel %vm717, %v710, %v712
      %v722 = vsel %vm717, %v712, %v714
      %v723 = vsel %vm717, %v714, %v716
      %730 = vst [vmem:[#allocation2 + $0x180] sm:$0xff] %v718
      %731 = vst [vmem:[#allocation2 + $0x188] sm:$0xff] %v719
      %732 = vst [vmem:[#allocation2 + $0x190] sm:$0xff] %v720
      %733 = vst [vmem:[#allocation2 + $0x198] sm:$0xff] %v721
      %734 = vst [vmem:[#allocation2 + $0x1a0] sm:$0xff] %v722
      %735 = vst [vmem:[#allocation2 + $0x1a8] sm:$0xff] %v723
      %v736 = vld [vmem:[%s1] sm:$0xff]
      %v737 = vld [vmem:[#allocation2] sm:$0xff]
      %v738 = vld [vmem:[#allocation2 + $0x8] sm:$0xff]
      %v739 = vld [vmem:[#allocation2 + $0x10] sm:$0xff]
      %v740 = vld [vmem:[#allocation2 + $0x18] sm:$0xff]
      %v741 = vld [vmem:[#allocation2 + $0x20] sm:$0xff]
      %v742 = vld [vmem:[#allocation2 + $0x28] sm:$0xff]
      %v743 = vld [vmem:[#allocation2 + $0x30] sm:$0xff]
      %v744 = vld [vmem:[#allocation2 + $0x38] sm:$0xff]
      %v745 = vld [vmem:[#allocation2 + $0x40] sm:$0xff]
      %v746 = vld [vmem:[#allocation2 + $0x48] sm:$0xff]
      %v747 = vld [vmem:[#allocation2 + $0x50] sm:$0xff]
      %v748 = vld [vmem:[#allocation2 + $0x58] sm:$0xff]
      %v749 = vld [vmem:[#allocation2 + $0x60] sm:$0xff]
      %v750 = vld [vmem:[#allocation2 + $0x68] sm:$0xff]
      %v751 = vld [vmem:[#allocation2 + $0x70] sm:$0xff]
      %v752 = vld [vmem:[#allocation2 + $0x78] sm:$0xff]
      %v753 = vld [vmem:[#allocation2 + $0x80] sm:$0xff]
      %v754 = vld [vmem:[#allocation2 + $0x88] sm:$0xff]
      %v755 = vld [vmem:[#allocation2 + $0x90] sm:$0xff]
      %v756 = vld [vmem:[#allocation2 + $0x98] sm:$0xff]
      %v757 = vld [vmem:[#allocation2 + $0xa0] sm:$0xff]
      %v758 = vld [vmem:[#allocation2 + $0xa8] sm:$0xff]
      %v759 = vld [vmem:[#allocation2 + $0xb0] sm:$0xff]
      %v760 = vld [vmem:[#allocation2 + $0xb8] sm:$0xff]
      %v761 = vld [vmem:[#allocation2 + $0xc0] sm:$0xff]
      %v762 = vld [vmem:[#allocation2 + $0xc8] sm:$0xff]
      %v763 = vld [vmem:[#allocation2 + $0xd0] sm:$0xff]
      %v764 = vld [vmem:[#allocation2 + $0xd8] sm:$0xff]
      %v765 = vld [vmem:[#allocation2 + $0xe0] sm:$0xff]
      %v766 = vld [vmem:[#allocation2 + $0xe8] sm:$0xff]
      %v767 = vld [vmem:[#allocation2 + $0xf0] sm:$0xff]
      %v768 = vld [vmem:[#allocation2 + $0xf8] sm:$0xff]
      %v769 = vld [vmem:[#allocation2 + $0x100] sm:$0xff]
      %v770 = vld [vmem:[#allocation2 + $0x108] sm:$0xff]
      %v771 = vld [vmem:[#allocation2 + $0x110] sm:$0xff]
      %v772 = vld [vmem:[#allocation2 + $0x118] sm:$0xff]
      %v773 = vld [vmem:[#allocation2 + $0x120] sm:$0xff]
      %v774 = vld [vmem:[#allocation2 + $0x128] sm:$0xff]
      %v775 = vld [vmem:[#allocation2 + $0x130] sm:$0xff]
      %v776 = vld [vmem:[#allocation2 + $0x138] sm:$0xff]
      %v777 = vld [vmem:[#allocation2 + $0x140] sm:$0xff]
      %v778 = vld [vmem:[#allocation2 + $0x148] sm:$0xff]
      %v779 = vld [vmem:[#allocation2 + $0x150] sm:$0xff]
      %v780 = vld [vmem:[#allocation2 + $0x158] sm:$0xff]
      %v781 = vld [vmem:[#allocation2 + $0x160] sm:$0xff]
      %v782 = vld [vmem:[#allocation2 + $0x168] sm:$0xff]
      %v783 = vld [vmem:[#allocation2 + $0x170] sm:$0xff]
      %v784 = vld [vmem:[#allocation2 + $0x178] sm:$0xff]
      %v785 = vld [vmem:[#allocation2 + $0x180] sm:$0xff]
      %v786 = vld [vmem:[#allocation2 + $0x188] sm:$0xff]
      %v787 = vld [vmem:[#allocation2 + $0x190] sm:$0xff]
      %v788 = vld [vmem:[#allocation2 + $0x198] sm:$0xff]
      %v789 = vld [vmem:[#allocation2 + $0x1a0] sm:$0xff]
      %v790 = vld [vmem:[#allocation2 + $0x1a8] sm:$0xff]
      %v791 = vpack.c.bf16 %v740, %v737
      %v792 = vpack.c.bf16 %v741, %v738
      %v793 = vpack.c.bf16 %v742, %v739
      %v794 = vpack.c.bf16 %v746, %v743
      %v795 = vpack.c.bf16 %v747, %v744
      %v796 = vpack.c.bf16 %v748, %v745
      %v797 = vpack.c.bf16 %v752, %v749
      %v798 = vpack.c.bf16 %v753, %v750
      %v799 = vpack.c.bf16 %v754, %v751
      %v800 = vpack.c.bf16 %v758, %v755
      %v801 = vpack.c.bf16 %v759, %v756
      %v802 = vpack.c.bf16 %v760, %v757
      %v803 = vpack.c.bf16 %v764, %v761
      %v804 = vpack.c.bf16 %v765, %v762
      %v805 = vpack.c.bf16 %v766, %v763
      %v806 = vpack.c.bf16 %v770, %v767
      %v807 = vpack.c.bf16 %v771, %v768
      %v808 = vpack.c.bf16 %v772, %v769
      %v809 = vpack.c.bf16 %v776, %v773
      %v810 = vpack.c.bf16 %v777, %v774
      %v811 = vpack.c.bf16 %v778, %v775
      %v812 = vpack.c.bf16 %v782, %v779
      %v813 = vpack.c.bf16 %v783, %v780
      %v814 = vpack.c.bf16 %v784, %v781
      %v815 = vpack.c.bf16 %v788, %v785
      %v816 = vpack.c.bf16 %v789, %v786
      %v817 = vpack.c.bf16 %v790, %v787
      %v818 = vld [vmem:[%s2] sm:$0xff]
      %820 = vset.pattern.permute.xlu0 0
      %821 = vperm.xlu0 %820, %v818
      %v822 = vpop.permute.xlu0 %821
      %v825 = vunpack.c.l.b16 %v736
      %v826 = vunpack.c.h.b16 %v736
      %v827 = vpack.c.b16 %v825, %v825
      %v828 = vpack.c.b16 %v826, %v826
      %vm830 = vcmask 130048
      %v832 = vsel %vm830, %v828, 0
      %834 = vmatprep.subr.bf16.mxu0 %v813
      %835 = vmatpush1.bf16.msra.mxu0 %v812
      %836 = vmatprep.subr.bf16.mxu0 %v810
      %837 = vmatpush1.bf16.msra.mxu0 %v809
      %838 = vmatprep.subr.bf16.mxu0 %v807
      %839 = vmatpush1.bf16.msra.mxu0 %v806
      %840 = vmatprep.subr.bf16.mxu0 %v804
      %841 = vmatpush1.bf16.msra.mxu0 %v803
      %842 = vmatprep.subr.bf16.mxu0 %v801
      %843 = vmatpush1.bf16.msra.mxu0 %v800
      %844 = vmatprep.subr.bf16.mxu0 %v798
      %845 = vmatpush1.bf16.msra.mxu0 %v797
      %846 = vmatprep.subr.bf16.mxu0 %v795
      %847 = vmatpush1.bf16.msra.mxu0 %v794
      %848 = vmatprep.subr.bf16.mxu0 %v792
      %849 = vmatpush1.bf16.msra.mxu0 %v791
      %850 = vmatprep.subr.bf16.mxu0 0
      %851 = vmatpush2.bf16.msra.mxu0 0
      %852 = vmatprep.subr.bf16.mxu0 0
      %853 = vmatpush2.bf16.msra.mxu0 0
      %854 = vmatprep.subr.bf16.mxu0 0
      %855 = vmatpush2.bf16.msra.mxu0 0
      %856 = vmatprep.subr.bf16.mxu0 0
      %857 = vmatpush2.bf16.msra.mxu0 0
      %858 = vmatprep.subr.bf16.mxu0 0
      %859 = vmatpush2.bf16.msra.mxu0 0
      %860 = vmatprep.subr.bf16.mxu0 0
      %861 = vmatpush2.bf16.msra.mxu0 0
      %862 = vmatprep.subr.bf16.mxu0 0
      %863 = vmatpush2.bf16.msra.mxu0 0
      %864 = vmatprep.subr.bf16.mxu0 %v816
      %865 = vmatpush2.bf16.msra.mxu0 %v815
      %866 = vmatprep.mubr.bf16.mxu0 %v832
      %867 = vmatmul.mubr.bf16.gmra.mxu0 %v827
      %v868 = vpop.f32.mrf.mxu0
      %v869 = vadd.f32 %v822, %v868
      %v870 = vpop.f32.mrf.mxu0
      %v871 = vadd.f32 %v822, %v870
      %v872 = vpop.f32.mrf.mxu0
      %v873 = vpop.f32.mrf.mxu0
      %874 = vdwg.mxu0
      %875 = vmatprep.subr.bf16.mxu0 0
      %876 = vmatpush1.bf16.msra.mxu0 %v814
      %877 = vmatprep.subr.bf16.mxu0 0
      %878 = vmatpush1.bf16.msra.mxu0 %v811
      %879 = vmatprep.subr.bf16.mxu0 0
      %880 = vmatpush1.bf16.msra.mxu0 %v808
      %881 = vmatprep.subr.bf16.mxu0 0
      %882 = vmatpush1.bf16.msra.mxu0 %v805
      %883 = vmatprep.subr.bf16.mxu0 0
      %884 = vmatpush1.bf16.msra.mxu0 %v802
      %885 = vmatprep.subr.bf16.mxu0 0
      %886 = vmatpush1.bf16.msra.mxu0 %v799
      %887 = vmatprep.subr.bf16.mxu0 0
      %888 = vmatpush1.bf16.msra.mxu0 %v796
      %889 = vmatprep.subr.bf16.mxu0 0
      %890 = vmatpush1.bf16.msra.mxu0 %v793
      %891 = vmatprep.subr.bf16.mxu0 0
      %892 = vmatpush2.bf16.msra.mxu0 0
      %893 = vmatprep.subr.bf16.mxu0 0
      %894 = vmatpush2.bf16.msra.mxu0 0
      %895 = vmatprep.subr.bf16.mxu0 0
      %896 = vmatpush2.bf16.msra.mxu0 0
      %897 = vmatprep.subr.bf16.mxu0 0
      %898 = vmatpush2.bf16.msra.mxu0 0
      %899 = vmatprep.subr.bf16.mxu0 0
      %900 = vmatpush2.bf16.msra.mxu0 0
      %901 = vmatprep.subr.bf16.mxu0 0
      %902 = vmatpush2.bf16.msra.mxu0 0
      %903 = vmatprep.subr.bf16.mxu0 0
      %904 = vmatpush2.bf16.msra.mxu0 0
      %905 = vmatprep.subr.bf16.mxu0 0
      %906 = vmatpush2.bf16.msra.mxu0 %v817
      %907 = vmatprep.mubr.bf16.mxu0 %v832
      %908 = vmatmul.mubr.bf16.gmra.mxu0 %v827
      %v909 = vpop.f32.mrf.mxu0
      %v910 = vadd.f32 %v822, %v909
      %v911 = vpop.f32.mrf.mxu0
      %v912 = vpop.f32.mrf.mxu0
      %v913 = vpop.f32.mrf.mxu0
      %914 = vdwg.mxu0
      %v915 = vlaneseq
      %v916 = vand.u32 %v915, 127
      %v917 = vadd.s32 %v916, 128
      %v918 = vadd.s32 %v916, 256
      %vm919 = vcmp.lt.s32.totalorder %v916, 0
      %v920 = vsub.s32 0, %v916
      %v921 = vsel %vm919, %v920, %v916
      %v922 = vmul.u32.u64.compose %v921, 3817748708
      %v923 = vextract.low.u32 %v922
      %v924 = vextract.high.u32 %v922
      %v925 = vshrl.u32 %v924, 4
      %v926 = vmul.u32 %v925, 18
      %v927 = vsub.s32 %v921, %v926
      %v928 = vsub.s32 0, %v927
      %v929 = vsel %vm919, %v928, %v927
      %vm930 = vcmp.lt.s32.totalorder %v917, 0
      %v931 = vsub.s32 0, %v917
      %v932 = vsel %vm930, %v931, %v917
      %v933 = vmul.u32.u64.compose %v932, 3817748708
      %v934 = vextract.low.u32 %v933
      %v935 = vextract.high.u32 %v933
      %v936 = vshrl.u32 %v935, 4
      %v937 = vmul.u32 %v936, 18
      %v938 = vsub.s32 %v932, %v937
      %v939 = vsub.s32 0, %v938
      %v940 = vsel %vm930, %v939, %v938
      %vm941 = vcmp.lt.s32.totalorder %v918, 0
      %v942 = vsub.s32 0, %v918
      %v943 = vsel %vm941, %v942, %v918
      %v944 = vmul.u32.u64.compose %v943, 3817748708
      %v945 = vextract.low.u32 %v944
      %v946 = vextract.high.u32 %v944
      %v947 = vshrl.u32 %v946, 4
      %v948 = vmul.u32 %v947, 18
      %v949 = vsub.s32 %v943, %v948
      %v950 = vsub.s32 0, %v949
      %v951 = vsel %vm941, %v950, %v949
      %vm952 = vcmp.ne.s32.totalorder %v929, 0
      %vm953 = vcmp.ne.s32.totalorder %v940, 0
      %vm954 = vcmp.ne.s32.totalorder %v951, 0
      %vm955 = vcmp.lt.s32.totalorder %v929, 0
      %vm956 = vcmp.lt.s32.totalorder %v940, 0
      %vm957 = vcmp.lt.s32.totalorder %v951, 0
      %vm958 = vmand %vm955, %vm952
      %vm959 = vmand %vm956, %vm953
      %vm960 = vmand %vm957, %vm954
      %v961 = vadd.s32 %v929, 18
      %v962 = vadd.s32 %v940, 18
      %v963 = vadd.s32 %v951, 18
      %v964 = vsel %vm958, %v961, %v929
      %v965 = vsel %vm959, %v962, %v940
      %v966 = vsel %vm960, %v963, %v951
      %vm967 = vcmp.lt.s32.totalorder %v964, 16
      %vm968 = vcmp.lt.s32.totalorder %v965, 16
      %vm969 = vcmp.lt.s32.totalorder %v966, 16
      %vm970 = vcmp.lt.s32.totalorder %v916, 288
      %vm971 = vcmp.lt.s32.totalorder %v917, 288
      %vm972 = vcmp.lt.s32.totalorder %v918, 288
      %vm973 = vmand %vm967, %vm970
      %vm974 = vmand %vm968, %vm971
      %vm975 = vmand %vm969, %vm972
      %v976 = vsel %vm973, 1, 0
      %v977 = vsel %vm974, 1, 0
      %v978 = vsel %vm975, 1, 0
      %v979 = vcvt.s32.f32 %v976
      %v980 = vcvt.s32.f32 %v977
      %v981 = vcvt.s32.f32 %v978
      %v982 = vld [vmem:[%s3] sm:$0xff]
      %v983 = vld [vmem:[%s4] sm:$0xff]
      %v984 = vlaneseq
      %v985 = vshrl.u32 %v984, 7
      %vm986 = vcmp.lt.s32.totalorder %v985, 0
      %v987 = vsub.s32 0, %v985
      %v988 = vsel %vm986, %v987, %v985
      %v989 = vshrl.u32 %v988, 3
      %v990 = vand.u32 %v988, 7
      %v991 = vsub.s32 0, %v990
      %v992 = vsel %vm986, %v991, %v990
      %vm993 = vcmp.ne.s32.totalorder %v992, 0
      %vm994 = vcmp.lt.s32.totalorder %v992, 0
      %vm995 = vmand %vm994, %vm993
      %v996 = vadd.s32 %v992, 8
      %v997 = vsel %vm995, %v996, %v992
      %vm998 = vcmp.ge.s32.totalorder %v997, 4
      %v999 = vmul.f32 %v869, %v979
      %v1000 = vmul.f32 %v871, %v980
      %v1001 = vmul.f32 %v910, %v981
      %v1002 = vadd.f32 %v999, %v1000
      %v1003 = vadd.f32 %v1002, %v1001
      %1004 = vadd.xlane.f32.xlu0 %v1003
      %v1005 = vpop.xlane.xlu0 %1004
      %v1006 = vsel %vm998, 0.0, %v1005
      %vm1007 = vcmask 7168
      %v1008 = vsel %vm1007, %v1006, 0.0
      %1009 = vadd.xlane.f32.xlu0 %v1008
      %v1010 = vpop.xlane.xlu0 %1009
      %v1011 = vrot.slane %v1010, 4
      %v1012 = vadd.f32 %v1010, %v1011
      %v1013 = vrot.slane %v1012, 2
      %v1014 = vadd.f32 %v1012, %v1013
      %v1015 = vrot.slane %v1014, 1
      %v1016 = vadd.f32 %v1014, %v1015
      %s1017 = vtos %v1016
      %v1018 = vsel %vm998, %v1005, 0.0
      %v1019 = vsel %vm1007, %v1018, 0.0
      %1020 = vadd.xlane.f32.xlu0 %v1019
      %v1021 = vpop.xlane.xlu0 %1020
      %v1022 = vrot.slane %v1021, 4
      %v1023 = vadd.f32 %v1021, %v1022
      %v1024 = vrot.slane %v1023, 2
      %v1025 = vadd.f32 %v1023, %v1024
      %v1026 = vrot.slane %v1025, 1
      %v1027 = vadd.f32 %v1025, %v1026
      %s1028 = vtos %v1027
      %v1029 = vstv %s1028
      %v1030 = vstv %s1017
      %v1031 = vsel %vm998, %v1029, %v1030
      %v1032 = vmul.f32 %v1031, 0.0009765625
      %v1033 = vsub.f32 %v869, %v1032
      %v1034 = vsub.f32 %v871, %v1032
      %v1035 = vsub.f32 %v910, %v1032
      %v1036 = vmul.f32 %v1033, %v979
      %v1037 = vmul.f32 %v1034, %v980
      %v1038 = vmul.f32 %v1035, %v981
      %v1039 = vmul.f32 %v1036, %v1036
      %v1040 = vmul.f32 %v1037, %v1037
      %v1041 = vmul.f32 %v1038, %v1038
      %v1042 = vadd.f32 %v1039, %v1040
      %v1043 = vadd.f32 %v1042, %v1041
      %1044 = vadd.xlane.f32.xlu0 %v1043
      %v1045 = vpop.xlane.xlu0 %1044
      %v1046 = vsel %vm998, 0.0, %v1045
      %v1047 = vsel %vm1007, %v1046, 0.0
      %1048 = vadd.xlane.f32.xlu0 %v1047
      %v1049 = vpop.xlane.xlu0 %1048
      %v1050 = vrot.slane %v1049, 4
      %v1051 = vadd.f32 %v1049, %v1050
      %v1052 = vrot.slane %v1051, 2
      %v1053 = vadd.f32 %v1051, %v1052
      %v1054 = vrot.slane %v1053, 1
      %v1055 = vadd.f32 %v1053, %v1054
      %s1056 = vtos %v1055
      %v1057 = vsel %vm998, %v1045, 0.0
      %v1058 = vsel %vm1007, %v1057, 0.0
      %1059 = vadd.xlane.f32.xlu0 %v1058
      %v1060 = vpop.xlane.xlu0 %1059
      %v1061 = vrot.slane %v1060, 4
      %v1062 = vadd.f32 %v1060, %v1061
      %v1063 = vrot.slane %v1062, 2
      %v1064 = vadd.f32 %v1062, %v1063
      %v1065 = vrot.slane %v1064, 1
      %v1066 = vadd.f32 %v1064, %v1065
      %s1067 = vtos %v1066
      %v1068 = vstv %s1067
      %v1069 = vstv %s1056
      %v1070 = vsel %vm998, %v1068, %v1069
      %v1071 = vmul.f32 %v1070, 0.0009765625
      %v1072 = vadd.f32 %v1071, 1e-05
      %v1073 = vrsqrt.pop %v1072
      %v1074 = vmul.f32 %v1073, %v982
      %1076 = vset.pattern.permute.xlu0 0
      %1077 = vperm.xlu0 %1076, %v1074
      %v1078 = vpop.permute.xlu0 %1077
      %v1080 = vmul.f32 %v1033, %v1078
      %v1081 = vmul.f32 %v1034, %v1078
      %v1082 = vmul.f32 %v1035, %v1078
      %1084 = vset.pattern.permute.xlu0 0
      %1085 = vperm.xlu0 %1084, %v983
      %v1086 = vpop.permute.xlu0 %1085
      %v1088 = vadd.f32 %v1080, %v1086
      %v1089 = vadd.f32 %v1081, %v1086
      %v1090 = vadd.f32 %v1082, %v1086
      %vm1091 = vcmp.gt.f32.partialorder %v1088, 0.0
      %vm1092 = vcmp.gt.f32.partialorder %v1089, 0.0
      %vm1093 = vcmp.gt.f32.partialorder %v1090, 0.0
      %v1094 = vmul.f32 %v1088, 0.2
      %v1095 = vmul.f32 %v1089, 0.2
      %v1096 = vmul.f32 %v1090, 0.2
      %v1097 = vsel %vm1091, %v1088, %v1094
      %v1098 = vsel %vm1092, %v1089, %v1095
      %v1099 = vsel %vm1093, %v1090, %v1096
      %v1100 = vld [vmem:[%s5] sm:$0xff]
      %v1101 = vld [vmem:[%s6] sm:$0xff]
      %1103 = vset.pattern.permute.xlu0 0
      %1104 = vperm.xlu0 %1103, %v1101
      %v1105 = vpop.permute.xlu0 %1104
      %vm1107 = vcmask 64512
      %v1109 = vsel %vm1107, %v1100, 0
      %1111 = vmatprep.subr.mxu0 0.0
      %1112 = vmatpush1.msra.mxu0 0.0
      %1113 = vmatprep.subr.mxu0 0.0
      %1114 = vmatpush1.msra.mxu0 0.0
      %1115 = vmatprep.subr.mxu0 0.0
      %1116 = vmatpush1.msra.mxu0 0.0
      %1117 = vmatprep.subr.mxu0 0.0
      %1118 = vmatpush1.msra.mxu0 0.0
      %1119 = vmatprep.subr.mxu0 0.0
      %1120 = vmatpush1.msra.mxu0 0.0
      %1121 = vmatprep.subr.mxu0 0.0
      %1122 = vmatpush1.msra.mxu0 0.0
      %1123 = vmatprep.subr.mxu0 0.0
      %1124 = vmatpush1.msra.mxu0 0.0
      %1125 = vmatprep.subr.mxu0 0.0
      %1126 = vmatpush1.msra.mxu0 0.0
      %1127 = vmatprep.subr.mxu0 0.0
      %1128 = vmatpush1.msra.mxu0 0.0
      %1129 = vmatprep.subr.mxu0 0.0
      %1130 = vmatpush1.msra.mxu0 0.0
      %1131 = vmatprep.subr.mxu0 0.0
      %1132 = vmatpush1.msra.mxu0 0.0
      %1133 = vmatprep.subr.mxu0 0.0
      %1134 = vmatpush1.msra.mxu0 0.0
      %1135 = vmatprep.subr.mxu0 0.0
      %1136 = vmatpush1.msra.mxu0 0.0
      %1137 = vmatprep.subr.mxu0 0.0
      %1138 = vmatpush1.msra.mxu0 0.0
      %1139 = vmatprep.subr.mxu0 0.0
      %1140 = vmatpush1.msra.mxu0 0.0
      %1141 = vmatprep.subr.mxu0 %v1098
      %1142 = vmatpush1.msra.mxu0 %v1097
      %1143 = vmatprep.subr.mxu0 0.0
      %1144 = vmatpush2.msra.mxu0 0.0
      %1145 = vmatprep.subr.mxu0 0.0
      %1146 = vmatpush2.msra.mxu0 0.0
      %1147 = vmatprep.subr.mxu0 0.0
      %1148 = vmatpush2.msra.mxu0 0.0
      %1149 = vmatprep.subr.mxu0 0.0
      %1150 = vmatpush2.msra.mxu0 0.0
      %1151 = vmatprep.subr.mxu0 0.0
      %1152 = vmatpush2.msra.mxu0 0.0
      %1153 = vmatprep.subr.mxu0 0.0
      %1154 = vmatpush2.msra.mxu0 0.0
      %1155 = vmatprep.subr.mxu0 0.0
      %1156 = vmatpush2.msra.mxu0 0.0
      %1157 = vmatprep.subr.mxu0 0.0
      %1158 = vmatpush2.msra.mxu0 0.0
      %1159 = vmatprep.subr.mxu0 0.0
      %1160 = vmatpush2.msra.mxu0 0.0
      %1161 = vmatprep.subr.mxu0 0.0
      %1162 = vmatpush2.msra.mxu0 0.0
      %1163 = vmatprep.subr.mxu0 0.0
      %1164 = vmatpush2.msra.mxu0 0.0
      %1165 = vmatprep.subr.mxu0 0.0
      %1166 = vmatpush2.msra.mxu0 0.0
      %1167 = vmatprep.subr.mxu0 0.0
      %1168 = vmatpush2.msra.mxu0 0.0
      %1169 = vmatprep.subr.mxu0 0.0
      %1170 = vmatpush2.msra.mxu0 0.0
      %1171 = vmatprep.subr.mxu0 0.0
      %1172 = vmatpush2.msra.mxu0 0.0
      %1173 = vmatprep.subr.mxu0 0.0
      %1174 = vmatpush2.msra.mxu0 0.0
      %1175 = vmatprep.mubr.f32.mxu0 0.0
      %1176 = vmatmul.mubr.f32.gmra.mxu0 %v1109
      %v1177 = vpop.f32.mrf.mxu0
      %v1178 = vadd.f32 %v1105, %v1177
      %v1179 = vpop.f32.mrf.mxu0
      %v1180 = vadd.f32 %v1105, %v1179
      %1181 = vdwg.mxu0
      %1182 = vmatprep.subr.mxu0 0.0
      %1183 = vmatpush1.msra.mxu0 0.0
      %1184 = vmatprep.subr.mxu0 0.0
      %1185 = vmatpush1.msra.mxu0 0.0
      %1186 = vmatprep.subr.mxu0 0.0
      %1187 = vmatpush1.msra.mxu0 0.0
      %1188 = vmatprep.subr.mxu0 0.0
      %1189 = vmatpush1.msra.mxu0 0.0
      %1190 = vmatprep.subr.mxu0 0.0
      %1191 = vmatpush1.msra.mxu0 0.0
      %1192 = vmatprep.subr.mxu0 0.0
      %1193 = vmatpush1.msra.mxu0 0.0
      %1194 = vmatprep.subr.mxu0 0.0
      %1195 = vmatpush1.msra.mxu0 0.0
      %1196 = vmatprep.subr.mxu0 0.0
      %1197 = vmatpush1.msra.mxu0 0.0
      %1198 = vmatprep.subr.mxu0 0.0
      %1199 = vmatpush1.msra.mxu0 0.0
      %1200 = vmatprep.subr.mxu0 0.0
      %1201 = vmatpush1.msra.mxu0 0.0
      %1202 = vmatprep.subr.mxu0 0.0
      %1203 = vmatpush1.msra.mxu0 0.0
      %1204 = vmatprep.subr.mxu0 0.0
      %1205 = vmatpush1.msra.mxu0 0.0
      %1206 = vmatprep.subr.mxu0 0.0
      %1207 = vmatpush1.msra.mxu0 0.0
      %1208 = vmatprep.subr.mxu0 0.0
      %1209 = vmatpush1.msra.mxu0 0.0
      %1210 = vmatprep.subr.mxu0 0.0
      %1211 = vmatpush1.msra.mxu0 0.0
      %1212 = vmatprep.subr.mxu0 0.0
      %1213 = vmatpush1.msra.mxu0 %v1099
      %1214 = vmatprep.subr.mxu0 0.0
      %1215 = vmatpush2.msra.mxu0 0.0
      %1216 = vmatprep.subr.mxu0 0.0
      %1217 = vmatpush2.msra.mxu0 0.0
      %1218 = vmatprep.subr.mxu0 0.0
      %1219 = vmatpush2.msra.mxu0 0.0
      %1220 = vmatprep.subr.mxu0 0.0
      %1221 = vmatpush2.msra.mxu0 0.0
      %1222 = vmatprep.subr.mxu0 0.0
      %1223 = vmatpush2.msra.mxu0 0.0
      %1224 = vmatprep.subr.mxu0 0.0
      %1225 = vmatpush2.msra.mxu0 0.0
      %1226 = vmatprep.subr.mxu0 0.0
      %1227 = vmatpush2.msra.mxu0 0.0
      %1228 = vmatprep.subr.mxu0 0.0
      %1229 = vmatpush2.msra.mxu0 0.0
      %1230 = vmatprep.subr.mxu0 0.0
      %1231 = vmatpush2.msra.mxu0 0.0
      %1232 = vmatprep.subr.mxu0 0.0
      %1233 = vmatpush2.msra.mxu0 0.0
      %1234 = vmatprep.subr.mxu0 0.0
      %1235 = vmatpush2.msra.mxu0 0.0
      %1236 = vmatprep.subr.mxu0 0.0
      %1237 = vmatpush2.msra.mxu0 0.0
      %1238 = vmatprep.subr.mxu0 0.0
      %1239 = vmatpush2.msra.mxu0 0.0
      %1240 = vmatprep.subr.mxu0 0.0
      %1241 = vmatpush2.msra.mxu0 0.0
      %1242 = vmatprep.subr.mxu0 0.0
      %1243 = vmatpush2.msra.mxu0 0.0
      %1244 = vmatprep.subr.mxu0 0.0
      %1245 = vmatpush2.msra.mxu0 0.0
      %1246 = vmatprep.mubr.f32.mxu0 0.0
      %1247 = vmatmul.mubr.f32.gmra.mxu0 %v1109
      %v1248 = vpop.f32.mrf.mxu0
      %v1249 = vadd.f32 %v1105, %v1248
      %v1250 = vpop.f32.mrf.mxu0
      %1251 = vdwg.mxu0
      %1252 = vst [vmem:[%s278] sm:$0xff] %v1178
      %1253 = vst [vmem:[%s278 + $0x8] sm:$0xff] %v1180
      %1254 = vst [vmem:[%s278 + $0x10] sm:$0xff] %v1249
      %p1255 = scmp.lt.s32.totalorder %s18, 1
      %s1256 = scalar_select %p1255, %s18, 1
      %s1257 = smul.addr %s1256, 3
      %s1258 = smul.addr %s1257, 8
      %s1259 = scalar_lea.vmem %s7, %s1258
      // Predicated region
      $region49: #{_lambda_.7} parent=47 // pred_check
        %p1260 = pneg %p188
      $region50: #{_lambda_.7} parent=47 // pred_check_branch
        %1262 = sbr.rel (%p1260) target = $region52
      $region51: #{_lambda_.7} parent=47 // pred_region
        _
      $region52: #{_lambda_.7} parent=47 // pred_fallthru
        _
    $region48: #{_lambda_.7} parent=5 // pred_fallthru
      _
    %p1263 = scmp.le.s32.totalorder 2, %s13
    // Predicated region
    $region53: #{_lambda_.7} parent=5 // pred_check
      %p1264 = pneg %p1263
    $region54: #{_lambda_.7} parent=5 // pred_check_branch
      %1266 = sbr.rel (%p1264) target = $region56
    $region55: #{_lambda_.7} parent=5 // pred_region
      %s1267 = ssub.s32 %s13, 2
      // Predicated region
      $region57: #{_lambda_.7} parent=55 // pred_check
        %p1268 = pneg %p194
      $region58: #{_lambda_.7} parent=55 // pred_check_branch
        %1270 = sbr.rel (%p1268) target = $region60
      $region59: #{_lambda_.7} parent=55 // pred_region
        %p1271 = scmp.lt.s32.totalorder %s19, 1
        %s1272 = scalar_select %p1271, %s19, 1
        %s1273 = smul.addr %s1272, 3
        %s1274 = smul.addr %s1273, 8
        %s1275 = scalar_lea.vmem %s7, %s1274
      $region60: #{_lambda_.7} parent=55 // pred_fallthru
        _
    $region56: #{_lambda_.7} parent=5 // pred_fallthru
      _
  $region6: #{_lambda_.7} parent=0 // loop_footer
    %s17 = sadd.s32 1, %s13
  $region7: #{_lambda_.7} parent=0 // loop_footer_branch
    %12 = sbr.rel target = $region3
  $region8: #{_lambda_.7} parent=0 // loop_exit
    _

</llo_original>
